<compile_context>
chip_gen: v7x
topology: tpu7x:2x2x1
jax: 0.10.0
libtpu: 0.0.40
codegen_flags: <defaults>
</compile_context>

<pallas_src>
import jax
import jax.numpy as jnp
from jax.experimental import pallas as pl
from jax.experimental.pallas import tpu as pltpu

_SUBLANES = 8    # f32 sublane tile
_LANES = 128     # lane tile


def _round_up(x, m):
    return (x + m - 1) // m * m


def _pad_gate_cols(w, H, Hp):
    """(R, 4H) -> (R, 4Hp): each PyTorch gate [i|f|g|o] gets its own Hp-wide
    lane tile; the g-gate columns are pre-scaled by 2 (tanh-from-sigmoid)."""
    R = w.shape[0]
    out = jnp.zeros((R, 4 * Hp), w.dtype)
    for gidx, scale in enumerate((1.0, 1.0, 2.0, 1.0)):      # i, f, g, o
        out = out.at[:, gidx * Hp: gidx * Hp + H].set(
            scale * w[:, gidx * H:(gidx + 1) * H])
    return out


def _pad_rows(w, rows_p):
    if w.shape[0] == rows_p:
        return w
    return jnp.zeros((rows_p,) + w.shape[1:], w.dtype).at[:w.shape[0]].set(w)


# ---------------------------------------------------------------------------
# Fused Pallas kernel
# ---------------------------------------------------------------------------
def _make_fused_lstm_kernel(num_layers, T, Bb, Hp):
    """Refs: x (1, T*Bb, Din), [w_ih, w_hh, b]*L, fc_w, fc_b, out,
             proj_sc (T*Bb, 4Hp), seq_sc (T*Bb, Hp)."""

    def kernel(*refs):
        x_ref = refs[0]
        layer_refs = refs[1:1 + 3 * num_layers]
        fcw_ref, fcb_ref, out_ref, proj_sc, seq_sc = refs[1 + 3 * num_layers:]

        h = None
        for layer in range(num_layers):
            wih_ref = layer_refs[3 * layer]
            whh_ref = layer_refs[3 * layer + 1]
            b_ref = layer_refs[3 * layer + 2]

            # Hoisted input projection + bias for all T steps: one MXU matmul,
            # result parked in VMEM scratch (not a huge live vreg value).
            inp = x_ref[0] if layer == 0 else seq_sc[...]
            proj_sc[...] = (jnp.dot(inp, wih_ref[...],
                                    preferred_element_type=jnp.float32)
                            + b_ref[...])                     # (T*Bb, 4Hp)

            h = jnp.zeros((Bb, Hp), jnp.float32)
            c = jnp.zeros((Bb, Hp), jnp.float32)
            write_seq = (layer + 1 < num_layers)

            # Sequential recurrence: small static T -> full unroll.  Only the
            # (Bb,Hp)@(Hp,4Hp) recurrent dot is on the critical path per step.
            for t in range(T):
                gates = (proj_sc[t * Bb:(t + 1) * Bb, :]
                         + jnp.dot(h, whh_ref[...],
                                   preferred_element_type=jnp.float32))
                s = jax.nn.sigmoid(gates)        # single EUP pass over (Bb,4Hp)
                i = s[:, 0 * Hp:1 * Hp]          # each slice = one (8,128) tile
                f = s[:, 1 * Hp:2 * Hp]
                g = 2.0 * s[:, 2 * Hp:3 * Hp] - 1.0   # tanh(g_pre), VPU only
                o = s[:, 3 * Hp:4 * Hp]
                c = f * c + i * g
                h = o * jnp.tanh(c)              # second (and last) EUP pass
                if write_seq:
                    # Unmasked full-tile (8,128) store; stays in VMEM.
                    seq_sc[t * Bb:(t + 1) * Bb, :] = h

        # Fused final Linear on the last timestep's hidden state.
        out_ref[...] = (jnp.dot(h, fcw_ref[...],
                                preferred_element_type=jnp.float32)
                        + fcb_ref[...]).astype(out_ref.dtype)

    return kernel


# ---------------------------------------------------------------------------
# Wrapper
# ---------------------------------------------------------------------------
def lstm_model_forward(x_btd, lstm_params, fc_w, fc_b):
    """Equivalent of LSTMModel.forward (eval mode).

    x_btd: (B, T, D) batch_first, like PyTorch.
    lstm_params: list of (w_ih (D_l, 4H), w_hh (H, 4H), bias (1, 4H)) per layer
                 (bias = b_ih + b_hh), PyTorch gate order [i, f, g, o].
    fc_w: (H, O); fc_b: (1, O).
    """
    B, T, D = x_btd.shape
    H = lstm_params[0][1].shape[0]
    O = fc_w.shape[1]
    L = len(lstm_params)

    Bb = _SUBLANES                          # batch rows per grid block
    nB = pl.cdiv(B, Bb)                     # grid size over batch blocks
    Bp = nB * Bb
    Hp = _round_up(H, _LANES)               # per-gate lane tile
    Op = _round_up(O, _LANES)               # lane-dense output

    # Pad batch, go time-major inside each batch block: (nB, T*Bb, D).
    # (Negligible at this size; for large inputs accept time-major directly.)
    x_pad = jnp.zeros((Bp, T, D), x_btd.dtype).at[:B].set(x_btd)
    x_blk = (x_pad.reshape(nB, Bb, T, D)
                  .transpose(0, 2, 1, 3)
                  .reshape(nB, T * Bb, D))

    # Pad / reorder weights once on the host side (zero runtime cost in-kernel).
    flat_params = []
    in_specs = [pl.BlockSpec((1, T * Bb, D), lambda b: (b, 0, 0))]
    for layer, (w_ih, w_hh, bias) in enumerate(lstm_params):
        din_p = D if layer == 0 else Hp
        w_ih_p = _pad_rows(_pad_gate_cols(w_ih, H, Hp), din_p)   # (din_p, 4Hp)
        w_hh_p = _pad_rows(_pad_gate_cols(w_hh, H, Hp), Hp)      # (Hp, 4Hp)
        b_p = _pad_gate_cols(bias, H, Hp)                        # (1, 4Hp)
        flat_params += [w_ih_p, w_hh_p, b_p]
        in_specs += [
            pl.BlockSpec((din_p, 4 * Hp), lambda b: (0, 0)),
            pl.BlockSpec((Hp, 4 * Hp), lambda b: (0, 0)),
            pl.BlockSpec((1, 4 * Hp), lambda b: (0, 0)),
        ]

    fc_w_p = jnp.zeros((Hp, Op), fc_w.dtype).at[:H, :O].set(fc_w)
    fc_b_p = jnp.zeros((1, Op), fc_b.dtype).at[:, :O].set(fc_b)
    in_specs += [
        pl.BlockSpec((Hp, Op), lambda b: (0, 0)),
        pl.BlockSpec((1, Op), lambda b: (0, 0)),
    ]

    kernel = _make_fused_lstm_kernel(L, T, Bb, Hp)
    out_padded = pl.pallas_call(
        kernel,
        out_shape=jax.ShapeDtypeStruct((Bp, Op), x_btd.dtype),
        grid=(nB,),
        in_specs=in_specs,
        out_specs=pl.BlockSpec((Bb, Op), lambda b: (b, 0)),
        scratch_shapes=[
            pltpu.VMEM((T * Bb, 4 * Hp), jnp.float32),   # hoisted projection
            pltpu.VMEM((T * Bb, Hp), jnp.float32),       # inter-layer hidden seq
        ],
        compiler_params=pltpu.CompilerParams(
            dimension_semantics=("parallel",),           # shards over TCs on v7x
            vmem_limit_bytes=16 * 1024 * 1024,
        ),
    )(x_blk, *flat_params, fc_w_p, fc_b_p)

    return out_padded[:B, :O]


# ---------------------------------------------------------------------------
# Pure-JAX reference (for correctness check)
# ---------------------------------------------------------------------------
def lstm_model_ref(x_btd, lstm_params, fc_w, fc_b):
    seq = jnp.transpose(x_btd, (1, 0, 2))            # (T, B, D)
    B = x_btd.shape[0]
    for (w_ih, w_hh, bias) in lstm_params:
        H = w_hh.shape[0]

        def step(carry, x_t):
            h, c = carry
            gates = x_t @ w_ih + h @ w_hh + bias[0]
            i, f, g, o = jnp.split(gates, 4, axis=-1)
            i = jax.nn.sigmoid(i)
            f = jax.nn.sigmoid(f)
            g = jnp.tanh(g)
            o = jax.nn.sigmoid(o)
            c = f * c + i * g
            h = o * jnp.tanh(c)
            return (h, c), h

        init = (jnp.zeros((B, H), jnp.float32), jnp.zeros((B, H), jnp.float32))
        _, seq = jax.lax.scan(step, init, seq)
    return seq[-1] @ fc_w + fc_b[0]


# ---------------------------------------------------------------------------
# Main
# ---------------------------------------------------------------------------
if __name__ == "__main__":
    # Model hyperparameters (small, consistent with LSTMModel.__init__)
    B, T = 2, 8                 # batch, sequence length
    D = 16                      # input_dim
    H = 32                      # hidden_dim
    L = 2                       # num_layers
    O = 4                       # output_dim

    key = jax.random.PRNGKey(0)
    k_x, key = jax.random.split(key)
    x = jax.random.normal(k_x, (B, T, D), dtype=jnp.float32)

    # Deterministic parameter init, PyTorch-style U(-1/sqrt(H), 1/sqrt(H)).
    bound = 1.0 / jnp.sqrt(jnp.float32(H))
    lstm_params = []
    for layer in range(L):
        d_in = D if layer == 0 else H
        k1, k2, k3, k4, key = jax.random.split(key, 5)
        w_ih = jax.random.uniform(k1, (d_in, 4 * H), jnp.float32, -bound, bound)
        w_hh = jax.random.uniform(k2, (H, 4 * H), jnp.float32, -bound, bound)
        b_ih = jax.random.uniform(k3, (4 * H,), jnp.float32, -bound, bound)
        b_hh = jax.random.uniform(k4, (4 * H,), jnp.float32, -bound, bound)
        bias = (b_ih + b_hh).reshape(1, 4 * H)
        lstm_params.append((w_ih, w_hh, bias))

    k5, k6, key = jax.random.split(key, 3)
    fc_bound = 1.0 / jnp.sqrt(jnp.float32(H))
    fc_w = jax.random.uniform(k5, (H, O), jnp.float32, -fc_bound, fc_bound)
    fc_b = jax.random.uniform(k6, (1, O), jnp.float32, -fc_bound, fc_bound)

    out = lstm_model_forward(x, lstm_params, fc_w, fc_b)
    out = jax.block_until_ready(out)

    ref = lstm_model_ref(x, lstm_params, fc_w, fc_b)
    assert out.shape == (B, O), out.shape
    # Slightly looser than 1e-5: tanh is recovered via the sigmoid identity and
    # the padded-K matmuls change the f32 accumulation order marginally.
    assert jnp.allclose(out, ref, atol=5e-5, rtol=5e-5), (
        f"max abs diff: {jnp.max(jnp.abs(out - ref))}")

    print("KERNEL_OK")
</pallas_src>

<mosaic_0001>
module attributes {stable_mosaic.version = 11 : i64} {
  func.func @kernel(%arg0: i32, %arg1: memref<1x64x16xf32, #tpu.memory_space<vmem>>, %arg2: memref<16x512xf32, #tpu.memory_space<vmem>>, %arg3: memref<128x512xf32, #tpu.memory_space<vmem>>, %arg4: memref<1x512xf32, #tpu.memory_space<vmem>>, %arg5: memref<128x512xf32, #tpu.memory_space<vmem>>, %arg6: memref<128x512xf32, #tpu.memory_space<vmem>>, %arg7: memref<1x512xf32, #tpu.memory_space<vmem>>, %arg8: memref<128x128xf32, #tpu.memory_space<vmem>>, %arg9: memref<1x128xf32, #tpu.memory_space<vmem>>, %arg10: memref<8x128xf32, #tpu.memory_space<vmem>>, %arg11: memref<64x512xf32, #tpu.memory_space<vmem>>, %arg12: memref<64x128xf32, #tpu.memory_space<vmem>>) attributes {dimension_semantics = [#tpu.dimension_semantics<parallel>], iteration_bounds = array<i64: 1>, scalar_prefetch = 0 : i64, scratch_operands = 2 : i64, tpu.core_type = #tpu.core_type<tc>, window_params = [{transform_indices = @transform_0, window_bounds = array<i64: 1, 64, 16>}, {pipeline_mode = #tpu.pipeline_mode<synchronous>, transform_indices = @transform_1, window_bounds = array<i64: 16, 512>}, {pipeline_mode = #tpu.pipeline_mode<synchronous>, transform_indices = @transform_2, window_bounds = array<i64: 128, 512>}, {pipeline_mode = #tpu.pipeline_mode<synchronous>, transform_indices = @transform_3, window_bounds = array<i64: 1, 512>}, {pipeline_mode = #tpu.pipeline_mode<synchronous>, transform_indices = @transform_4, window_bounds = array<i64: 128, 512>}, {pipeline_mode = #tpu.pipeline_mode<synchronous>, transform_indices = @transform_5, window_bounds = array<i64: 128, 512>}, {pipeline_mode = #tpu.pipeline_mode<synchronous>, transform_indices = @transform_6, window_bounds = array<i64: 1, 512>}, {pipeline_mode = #tpu.pipeline_mode<synchronous>, transform_indices = @transform_7, window_bounds = array<i64: 128, 128>}, {pipeline_mode = #tpu.pipeline_mode<synchronous>, transform_indices = @transform_8, window_bounds = array<i64: 1, 128>}, {transform_indices = @transform_9, window_bounds = array<i64: 8, 128>}]} {
    %c0 = arith.constant 0 : index
    %c0_0 = arith.constant 0 : index
    %c0_1 = arith.constant 0 : index
    %0 = vector.load %arg1[%c0, %c0_0, %c0_1] : memref<1x64x16xf32, #tpu.memory_space<vmem>>, vector<1x64x16xf32>
    %1 = vector.shape_cast %0 : vector<1x64x16xf32> to vector<64x16xf32>
    %c0_2 = arith.constant 0 : index
    %c0_3 = arith.constant 0 : index
    %2 = vector.load %arg2[%c0_2, %c0_3] : memref<16x512xf32, #tpu.memory_space<vmem>>, vector<16x512xf32>
    %cst = arith.constant dense<0.000000e+00> : vector<64x512xf32>
    %3 = tpu.matmul %1, %2, %cst {dimension_numbers = #tpu.dot_dimension_numbers<[1], [0], [0], [1], [0, 0, 1, 1], [], []>} : vector<64x16xf32>, vector<16x512xf32>, vector<64x512xf32> -> vector<64x512xf32>
    %c0_4 = arith.constant 0 : index
    %c0_5 = arith.constant 0 : index
    %4 = vector.load %arg4[%c0_4, %c0_5] : memref<1x512xf32, #tpu.memory_space<vmem>>, vector<1x512xf32>
    %5 = vector.broadcast %4 : vector<1x512xf32> to vector<64x512xf32>
    %6 = arith.addf %3, %5 : vector<64x512xf32>
    %c0_6 = arith.constant 0 : index
    %c0_7 = arith.constant 0 : index
    %7 = vector.load %arg11[%c0_6, %c0_7] : memref<64x512xf32, #tpu.memory_space<vmem>>, vector<64x512xf32>
    tpu.vector_store %arg11[%c0_6, %c0_7], %6 {strides = array<i32>} : memref<64x512xf32, #tpu.memory_space<vmem>>, vector<64x512xf32>,
    %cst_8 = arith.constant 0.000000e+00 : f32
    %8 = vector.broadcast %cst_8 : f32 to vector<8x128xf32>
    %cst_9 = arith.constant 0.000000e+00 : f32
    %9 = vector.broadcast %cst_9 : f32 to vector<8x128xf32>
    %c0_10 = arith.constant 0 : index
    %c0_11 = arith.constant 0 : index
    %10 = vector.load %arg11[%c0_10, %c0_11] : memref<64x512xf32, #tpu.memory_space<vmem>>, vector<8x512xf32>
    %c0_12 = arith.constant 0 : index
    %c0_13 = arith.constant 0 : index
    %11 = vector.load %arg3[%c0_12, %c0_13] : memref<128x512xf32, #tpu.memory_space<vmem>>, vector<128x512xf32>
    %cst_14 = arith.constant dense<0.000000e+00> : vector<8x512xf32>
    %12 = tpu.matmul %8, %11, %cst_14 {dimension_numbers = #tpu.dot_dimension_numbers<[1], [0], [0], [1], [0, 0, 1, 1], [], []>} : vector<8x128xf32>, vector<128x512xf32>, vector<8x512xf32> -> vector<8x512xf32>
    %13 = arith.addf %10, %12 : vector<8x512xf32>
    %14 = arith.negf %13 : vector<8x512xf32>
    %15 = math.exp %14 : vector<8x512xf32>
    %cst_15 = arith.constant 1.000000e+00 : f32
    %16 = vector.broadcast %cst_15 : f32 to vector<8x512xf32>
    %17 = arith.addf %16, %15 : vector<8x512xf32>
    %18 = arith.divf %16, %17 : vector<8x512xf32>
    %19 = vector.extract_strided_slice %18 {offsets = [0, 0], sizes = [8, 128], strides = [1, 1]} : vector<8x512xf32> to vector<8x128xf32>
    %20 = vector.extract_strided_slice %18 {offsets = [0, 128], sizes = [8, 128], strides = [1, 1]} : vector<8x512xf32> to vector<8x128xf32>
    %21 = vector.extract_strided_slice %18 {offsets = [0, 256], sizes = [8, 128], strides = [1, 1]} : vector<8x512xf32> to vector<8x128xf32>
    %cst_16 = arith.constant 2.000000e+00 : f32
    %22 = vector.broadcast %cst_16 : f32 to vector<8x128xf32>
    %23 = arith.mulf %22, %21 : vector<8x128xf32>
    %cst_17 = arith.constant 1.000000e+00 : f32
    %24 = vector.broadcast %cst_17 : f32 to vector<8x128xf32>
    %25 = arith.subf %23, %24 : vector<8x128xf32>
    %26 = vector.extract_strided_slice %18 {offsets = [0, 384], sizes = [8, 128], strides = [1, 1]} : vector<8x512xf32> to vector<8x128xf32>
    %27 = arith.mulf %20, %9 : vector<8x128xf32>
    %28 = arith.mulf %19, %25 : vector<8x128xf32>
    %29 = arith.addf %27, %28 : vector<8x128xf32>
    %30 = math.tanh %29 : vector<8x128xf32>
    %31 = arith.mulf %26, %30 : vector<8x128xf32>
    %c0_18 = arith.constant 0 : index
    %c0_19 = arith.constant 0 : index
    %32 = vector.load %arg12[%c0_18, %c0_19] : memref<64x128xf32, #tpu.memory_space<vmem>>, vector<8x128xf32>
    tpu.vector_store %arg12[%c0_18, %c0_19], %31 {strides = array<i32>} : memref<64x128xf32, #tpu.memory_space<vmem>>, vector<8x128xf32>,
    %c8 = arith.constant 8 : index
    %c0_20 = arith.constant 0 : index
    %33 = vector.load %arg11[%c8, %c0_20] : memref<64x512xf32, #tpu.memory_space<vmem>>, vector<8x512xf32>
    %c0_21 = arith.constant 0 : index
    %c0_22 = arith.constant 0 : index
    %34 = vector.load %arg3[%c0_21, %c0_22] : memref<128x512xf32, #tpu.memory_space<vmem>>, vector<128x512xf32>
    %cst_23 = arith.constant dense<0.000000e+00> : vector<8x512xf32>
    %35 = tpu.matmul %31, %34, %cst_23 {dimension_numbers = #tpu.dot_dimension_numbers<[1], [0], [0], [1], [0, 0, 1, 1], [], []>} : vector<8x128xf32>, vector<128x512xf32>, vector<8x512xf32> -> vector<8x512xf32>
    %36 = arith.addf %33, %35 : vector<8x512xf32>
    %37 = arith.negf %36 : vector<8x512xf32>
    %38 = math.exp %37 : vector<8x512xf32>
    %cst_24 = arith.constant 1.000000e+00 : f32
    %39 = vector.broadcast %cst_24 : f32 to vector<8x512xf32>
    %40 = arith.addf %39, %38 : vector<8x512xf32>
    %41 = arith.divf %39, %40 : vector<8x512xf32>
    %42 = vector.extract_strided_slice %41 {offsets = [0, 0], sizes = [8, 128], strides = [1, 1]} : vector<8x512xf32> to vector<8x128xf32>
    %43 = vector.extract_strided_slice %41 {offsets = [0, 128], sizes = [8, 128], strides = [1, 1]} : vector<8x512xf32> to vector<8x128xf32>
    %44 = vector.extract_strided_slice %41 {offsets = [0, 256], sizes = [8, 128], strides = [1, 1]} : vector<8x512xf32> to vector<8x128xf32>
    %cst_25 = arith.constant 2.000000e+00 : f32
    %45 = vector.broadcast %cst_25 : f32 to vector<8x128xf32>
    %46 = arith.mulf %45, %44 : vector<8x128xf32>
    %cst_26 = arith.constant 1.000000e+00 : f32
    %47 = vector.broadcast %cst_26 : f32 to vector<8x128xf32>
    %48 = arith.subf %46, %47 : vector<8x128xf32>
    %49 = vector.extract_strided_slice %41 {offsets = [0, 384], sizes = [8, 128], strides = [1, 1]} : vector<8x512xf32> to vector<8x128xf32>
    %50 = arith.mulf %43, %29 : vector<8x128xf32>
    %51 = arith.mulf %42, %48 : vector<8x128xf32>
    %52 = arith.addf %50, %51 : vector<8x128xf32>
    %53 = math.tanh %52 : vector<8x128xf32>
    %54 = arith.mulf %49, %53 : vector<8x128xf32>
    %c8_27 = arith.constant 8 : index
    %c0_28 = arith.constant 0 : index
    %55 = vector.load %arg12[%c8_27, %c0_28] : memref<64x128xf32, #tpu.memory_space<vmem>>, vector<8x128xf32>
    tpu.vector_store %arg12[%c8_27, %c0_28], %54 {strides = array<i32>} : memref<64x128xf32, #tpu.memory_space<vmem>>, vector<8x128xf32>,
    %c16 = arith.constant 16 : index
    %c0_29 = arith.constant 0 : index
    %56 = vector.load %arg11[%c16, %c0_29] : memref<64x512xf32, #tpu.memory_space<vmem>>, vector<8x512xf32>
    %c0_30 = arith.constant 0 : index
    %c0_31 = arith.constant 0 : index
    %57 = vector.load %arg3[%c0_30, %c0_31] : memref<128x512xf32, #tpu.memory_space<vmem>>, vector<128x512xf32>
    %cst_32 = arith.constant dense<0.000000e+00> : vector<8x512xf32>
    %58 = tpu.matmul %54, %57, %cst_32 {dimension_numbers = #tpu.dot_dimension_numbers<[1], [0], [0], [1], [0, 0, 1, 1], [], []>} : vector<8x128xf32>, vector<128x512xf32>, vector<8x512xf32> -> vector<8x512xf32>
    %59 = arith.addf %56, %58 : vector<8x512xf32>
    %60 = arith.negf %59 : vector<8x512xf32>
    %61 = math.exp %60 : vector<8x512xf32>
    %cst_33 = arith.constant 1.000000e+00 : f32
    %62 = vector.broadcast %cst_33 : f32 to vector<8x512xf32>
    %63 = arith.addf %62, %61 : vector<8x512xf32>
    %64 = arith.divf %62, %63 : vector<8x512xf32>
    %65 = vector.extract_strided_slice %64 {offsets = [0, 0], sizes = [8, 128], strides = [1, 1]} : vector<8x512xf32> to vector<8x128xf32>
    %66 = vector.extract_strided_slice %64 {offsets = [0, 128], sizes = [8, 128], strides = [1, 1]} : vector<8x512xf32> to vector<8x128xf32>
    %67 = vector.extract_strided_slice %64 {offsets = [0, 256], sizes = [8, 128], strides = [1, 1]} : vector<8x512xf32> to vector<8x128xf32>
    %cst_34 = arith.constant 2.000000e+00 : f32
    %68 = vector.broadcast %cst_34 : f32 to vector<8x128xf32>
    %69 = arith.mulf %68, %67 : vector<8x128xf32>
    %cst_35 = arith.constant 1.000000e+00 : f32
    %70 = vector.broadcast %cst_35 : f32 to vector<8x128xf32>
    %71 = arith.subf %69, %70 : vector<8x128xf32>
    %72 = vector.extract_strided_slice %64 {offsets = [0, 384], sizes = [8, 128], strides = [1, 1]} : vector<8x512xf32> to vector<8x128xf32>
    %73 = arith.mulf %66, %52 : vector<8x128xf32>
    %74 = arith.mulf %65, %71 : vector<8x128xf32>
    %75 = arith.addf %73, %74 : vector<8x128xf32>
    %76 = math.tanh %75 : vector<8x128xf32>
    %77 = arith.mulf %72, %76 : vector<8x128xf32>
    %c16_36 = arith.constant 16 : index
    %c0_37 = arith.constant 0 : index
    %78 = vector.load %arg12[%c16_36, %c0_37] : memref<64x128xf32, #tpu.memory_space<vmem>>, vector<8x128xf32>
    tpu.vector_store %arg12[%c16_36, %c0_37], %77 {strides = array<i32>} : memref<64x128xf32, #tpu.memory_space<vmem>>, vector<8x128xf32>,
    %c24 = arith.constant 24 : index
    %c0_38 = arith.constant 0 : index
    %79 = vector.load %arg11[%c24, %c0_38] : memref<64x512xf32, #tpu.memory_space<vmem>>, vector<8x512xf32>
    %c0_39 = arith.constant 0 : index
    %c0_40 = arith.constant 0 : index
    %80 = vector.load %arg3[%c0_39, %c0_40] : memref<128x512xf32, #tpu.memory_space<vmem>>, vector<128x512xf32>
    %cst_41 = arith.constant dense<0.000000e+00> : vector<8x512xf32>
    %81 = tpu.matmul %77, %80, %cst_41 {dimension_numbers = #tpu.dot_dimension_numbers<[1], [0], [0], [1], [0, 0, 1, 1], [], []>} : vector<8x128xf32>, vector<128x512xf32>, vector<8x512xf32> -> vector<8x512xf32>
    %82 = arith.addf %79, %81 : vector<8x512xf32>
    %83 = arith.negf %82 : vector<8x512xf32>
    %84 = math.exp %83 : vector<8x512xf32>
    %cst_42 = arith.constant 1.000000e+00 : f32
    %85 = vector.broadcast %cst_42 : f32 to vector<8x512xf32>
    %86 = arith.addf %85, %84 : vector<8x512xf32>
    %87 = arith.divf %85, %86 : vector<8x512xf32>
    %88 = vector.extract_strided_slice %87 {offsets = [0, 0], sizes = [8, 128], strides = [1, 1]} : vector<8x512xf32> to vector<8x128xf32>
    %89 = vector.extract_strided_slice %87 {offsets = [0, 128], sizes = [8, 128], strides = [1, 1]} : vector<8x512xf32> to vector<8x128xf32>
    %90 = vector.extract_strided_slice %87 {offsets = [0, 256], sizes = [8, 128], strides = [1, 1]} : vector<8x512xf32> to vector<8x128xf32>
    %cst_43 = arith.constant 2.000000e+00 : f32
    %91 = vector.broadcast %cst_43 : f32 to vector<8x128xf32>
    %92 = arith.mulf %91, %90 : vector<8x128xf32>
    %cst_44 = arith.constant 1.000000e+00 : f32
    %93 = vector.broadcast %cst_44 : f32 to vector<8x128xf32>
    %94 = arith.subf %92, %93 : vector<8x128xf32>
    %95 = vector.extract_strided_slice %87 {offsets = [0, 384], sizes = [8, 128], strides = [1, 1]} : vector<8x512xf32> to vector<8x128xf32>
    %96 = arith.mulf %89, %75 : vector<8x128xf32>
    %97 = arith.mulf %88, %94 : vector<8x128xf32>
    %98 = arith.addf %96, %97 : vector<8x128xf32>
    %99 = math.tanh %98 : vector<8x128xf32>
    %100 = arith.mulf %95, %99 : vector<8x128xf32>
    %c24_45 = arith.constant 24 : index
    %c0_46 = arith.constant 0 : index
    %101 = vector.load %arg12[%c24_45, %c0_46] : memref<64x128xf32, #tpu.memory_space<vmem>>, vector<8x128xf32>
    tpu.vector_store %arg12[%c24_45, %c0_46], %100 {strides = array<i32>} : memref<64x128xf32, #tpu.memory_space<vmem>>, vector<8x128xf32>,
    %c32 = arith.constant 32 : index
    %c0_47 = arith.constant 0 : index
    %102 = vector.load %arg11[%c32, %c0_47] : memref<64x512xf32, #tpu.memory_space<vmem>>, vector<8x512xf32>
    %c0_48 = arith.constant 0 : index
    %c0_49 = arith.constant 0 : index
    %103 = vector.load %arg3[%c0_48, %c0_49] : memref<128x512xf32, #tpu.memory_space<vmem>>, vector<128x512xf32>
    %cst_50 = arith.constant dense<0.000000e+00> : vector<8x512xf32>
    %104 = tpu.matmul %100, %103, %cst_50 {dimension_numbers = #tpu.dot_dimension_numbers<[1], [0], [0], [1], [0, 0, 1, 1], [], []>} : vector<8x128xf32>, vector<128x512xf32>, vector<8x512xf32> -> vector<8x512xf32>
    %105 = arith.addf %102, %104 : vector<8x512xf32>
    %106 = arith.negf %105 : vector<8x512xf32>
    %107 = math.exp %106 : vector<8x512xf32>
    %cst_51 = arith.constant 1.000000e+00 : f32
    %108 = vector.broadcast %cst_51 : f32 to vector<8x512xf32>
    %109 = arith.addf %108, %107 : vector<8x512xf32>
    %110 = arith.divf %108, %109 : vector<8x512xf32>
    %111 = vector.extract_strided_slice %110 {offsets = [0, 0], sizes = [8, 128], strides = [1, 1]} : vector<8x512xf32> to vector<8x128xf32>
    %112 = vector.extract_strided_slice %110 {offsets = [0, 128], sizes = [8, 128], strides = [1, 1]} : vector<8x512xf32> to vector<8x128xf32>
    %113 = vector.extract_strided_slice %110 {offsets = [0, 256], sizes = [8, 128], strides = [1, 1]} : vector<8x512xf32> to vector<8x128xf32>
    %cst_52 = arith.constant 2.000000e+00 : f32
    %114 = vector.broadcast %cst_52 : f32 to vector<8x128xf32>
    %115 = arith.mulf %114, %113 : vector<8x128xf32>
    %cst_53 = arith.constant 1.000000e+00 : f32
    %116 = vector.broadcast %cst_53 : f32 to vector<8x128xf32>
    %117 = arith.subf %115, %116 : vector<8x128xf32>
    %118 = vector.extract_strided_slice %110 {offsets = [0, 384], sizes = [8, 128], strides = [1, 1]} : vector<8x512xf32> to vector<8x128xf32>
    %119 = arith.mulf %112, %98 : vector<8x128xf32>
    %120 = arith.mulf %111, %117 : vector<8x128xf32>
    %121 = arith.addf %119, %120 : vector<8x128xf32>
    %122 = math.tanh %121 : vector<8x128xf32>
    %123 = arith.mulf %118, %122 : vector<8x128xf32>
    %c32_54 = arith.constant 32 : index
    %c0_55 = arith.constant 0 : index
    %124 = vector.load %arg12[%c32_54, %c0_55] : memref<64x128xf32, #tpu.memory_space<vmem>>, vector<8x128xf32>
    tpu.vector_store %arg12[%c32_54, %c0_55], %123 {strides = array<i32>} : memref<64x128xf32, #tpu.memory_space<vmem>>, vector<8x128xf32>,
    %c40 = arith.constant 40 : index
    %c0_56 = arith.constant 0 : index
    %125 = vector.load %arg11[%c40, %c0_56] : memref<64x512xf32, #tpu.memory_space<vmem>>, vector<8x512xf32>
    %c0_57 = arith.constant 0 : index
    %c0_58 = arith.constant 0 : index
    %126 = vector.load %arg3[%c0_57, %c0_58] : memref<128x512xf32, #tpu.memory_space<vmem>>, vector<128x512xf32>
    %cst_59 = arith.constant dense<0.000000e+00> : vector<8x512xf32>
    %127 = tpu.matmul %123, %126, %cst_59 {dimension_numbers = #tpu.dot_dimension_numbers<[1], [0], [0], [1], [0, 0, 1, 1], [], []>} : vector<8x128xf32>, vector<128x512xf32>, vector<8x512xf32> -> vector<8x512xf32>
    %128 = arith.addf %125, %127 : vector<8x512xf32>
    %129 = arith.negf %128 : vector<8x512xf32>
    %130 = math.exp %129 : vector<8x512xf32>
    %cst_60 = arith.constant 1.000000e+00 : f32
    %131 = vector.broadcast %cst_60 : f32 to vector<8x512xf32>
    %132 = arith.addf %131, %130 : vector<8x512xf32>
    %133 = arith.divf %131, %132 : vector<8x512xf32>
    %134 = vector.extract_strided_slice %133 {offsets = [0, 0], sizes = [8, 128], strides = [1, 1]} : vector<8x512xf32> to vector<8x128xf32>
    %135 = vector.extract_strided_slice %133 {offsets = [0, 128], sizes = [8, 128], strides = [1, 1]} : vector<8x512xf32> to vector<8x128xf32>
    %136 = vector.extract_strided_slice %133 {offsets = [0, 256], sizes = [8, 128], strides = [1, 1]} : vector<8x512xf32> to vector<8x128xf32>
    %cst_61 = arith.constant 2.000000e+00 : f32
    %137 = vector.broadcast %cst_61 : f32 to vector<8x128xf32>
    %138 = arith.mulf %137, %136 : vector<8x128xf32>
    %cst_62 = arith.constant 1.000000e+00 : f32
    %139 = vector.broadcast %cst_62 : f32 to vector<8x128xf32>
    %140 = arith.subf %138, %139 : vector<8x128xf32>
    %141 = vector.extract_strided_slice %133 {offsets = [0, 384], sizes = [8, 128], strides = [1, 1]} : vector<8x512xf32> to vector<8x128xf32>
    %142 = arith.mulf %135, %121 : vector<8x128xf32>
    %143 = arith.mulf %134, %140 : vector<8x128xf32>
    %144 = arith.addf %142, %143 : vector<8x128xf32>
    %145 = math.tanh %144 : vector<8x128xf32>
    %146 = arith.mulf %141, %145 : vector<8x128xf32>
    %c40_63 = arith.constant 40 : index
    %c0_64 = arith.constant 0 : index
    %147 = vector.load %arg12[%c40_63, %c0_64] : memref<64x128xf32, #tpu.memory_space<vmem>>, vector<8x128xf32>
    tpu.vector_store %arg12[%c40_63, %c0_64], %146 {strides = array<i32>} : memref<64x128xf32, #tpu.memory_space<vmem>>, vector<8x128xf32>,
    %c48 = arith.constant 48 : index
    %c0_65 = arith.constant 0 : index
    %148 = vector.load %arg11[%c48, %c0_65] : memref<64x512xf32, #tpu.memory_space<vmem>>, vector<8x512xf32>
    %c0_66 = arith.constant 0 : index
    %c0_67 = arith.constant 0 : index
    %149 = vector.load %arg3[%c0_66, %c0_67] : memref<128x512xf32, #tpu.memory_space<vmem>>, vector<128x512xf32>
    %cst_68 = arith.constant dense<0.000000e+00> : vector<8x512xf32>
    %150 = tpu.matmul %146, %149, %cst_68 {dimension_numbers = #tpu.dot_dimension_numbers<[1], [0], [0], [1], [0, 0, 1, 1], [], []>} : vector<8x128xf32>, vector<128x512xf32>, vector<8x512xf32> -> vector<8x512xf32>
    %151 = arith.addf %148, %150 : vector<8x512xf32>
    %152 = arith.negf %151 : vector<8x512xf32>
    %153 = math.exp %152 : vector<8x512xf32>
    %cst_69 = arith.constant 1.000000e+00 : f32
    %154 = vector.broadcast %cst_69 : f32 to vector<8x512xf32>
    %155 = arith.addf %154, %153 : vector<8x512xf32>
    %156 = arith.divf %154, %155 : vector<8x512xf32>
    %157 = vector.extract_strided_slice %156 {offsets = [0, 0], sizes = [8, 128], strides = [1, 1]} : vector<8x512xf32> to vector<8x128xf32>
    %158 = vector.extract_strided_slice %156 {offsets = [0, 128], sizes = [8, 128], strides = [1, 1]} : vector<8x512xf32> to vector<8x128xf32>
    %159 = vector.extract_strided_slice %156 {offsets = [0, 256], sizes = [8, 128], strides = [1, 1]} : vector<8x512xf32> to vector<8x128xf32>
    %cst_70 = arith.constant 2.000000e+00 : f32
    %160 = vector.broadcast %cst_70 : f32 to vector<8x128xf32>
    %161 = arith.mulf %160, %159 : vector<8x128xf32>
    %cst_71 = arith.constant 1.000000e+00 : f32
    %162 = vector.broadcast %cst_71 : f32 to vector<8x128xf32>
    %163 = arith.subf %161, %162 : vector<8x128xf32>
    %164 = vector.extract_strided_slice %156 {offsets = [0, 384], sizes = [8, 128], strides = [1, 1]} : vector<8x512xf32> to vector<8x128xf32>
    %165 = arith.mulf %158, %144 : vector<8x128xf32>
    %166 = arith.mulf %157, %163 : vector<8x128xf32>
    %167 = arith.addf %165, %166 : vector<8x128xf32>
    %168 = math.tanh %167 : vector<8x128xf32>
    %169 = arith.mulf %164, %168 : vector<8x128xf32>
    %c48_72 = arith.constant 48 : index
    %c0_73 = arith.constant 0 : index
    %170 = vector.load %arg12[%c48_72, %c0_73] : memref<64x128xf32, #tpu.memory_space<vmem>>, vector<8x128xf32>
    tpu.vector_store %arg12[%c48_72, %c0_73], %169 {strides = array<i32>} : memref<64x128xf32, #tpu.memory_space<vmem>>, vector<8x128xf32>,
    %c56 = arith.constant 56 : index
    %c0_74 = arith.constant 0 : index
    %171 = vector.load %arg11[%c56, %c0_74] : memref<64x512xf32, #tpu.memory_space<vmem>>, vector<8x512xf32>
    %c0_75 = arith.constant 0 : index
    %c0_76 = arith.constant 0 : index
    %172 = vector.load %arg3[%c0_75, %c0_76] : memref<128x512xf32, #tpu.memory_space<vmem>>, vector<128x512xf32>
    %cst_77 = arith.constant dense<0.000000e+00> : vector<8x512xf32>
    %173 = tpu.matmul %169, %172, %cst_77 {dimension_numbers = #tpu.dot_dimension_numbers<[1], [0], [0], [1], [0, 0, 1, 1], [], []>} : vector<8x128xf32>, vector<128x512xf32>, vector<8x512xf32> -> vector<8x512xf32>
    %174 = arith.addf %171, %173 : vector<8x512xf32>
    %175 = arith.negf %174 : vector<8x512xf32>
    %176 = math.exp %175 : vector<8x512xf32>
    %cst_78 = arith.constant 1.000000e+00 : f32
    %177 = vector.broadcast %cst_78 : f32 to vector<8x512xf32>
    %178 = arith.addf %177, %176 : vector<8x512xf32>
    %179 = arith.divf %177, %178 : vector<8x512xf32>
    %180 = vector.extract_strided_slice %179 {offsets = [0, 0], sizes = [8, 128], strides = [1, 1]} : vector<8x512xf32> to vector<8x128xf32>
    %181 = vector.extract_strided_slice %179 {offsets = [0, 128], sizes = [8, 128], strides = [1, 1]} : vector<8x512xf32> to vector<8x128xf32>
    %182 = vector.extract_strided_slice %179 {offsets = [0, 256], sizes = [8, 128], strides = [1, 1]} : vector<8x512xf32> to vector<8x128xf32>
    %cst_79 = arith.constant 2.000000e+00 : f32
    %183 = vector.broadcast %cst_79 : f32 to vector<8x128xf32>
    %184 = arith.mulf %183, %182 : vector<8x128xf32>
    %cst_80 = arith.constant 1.000000e+00 : f32
    %185 = vector.broadcast %cst_80 : f32 to vector<8x128xf32>
    %186 = arith.subf %184, %185 : vector<8x128xf32>
    %187 = vector.extract_strided_slice %179 {offsets = [0, 384], sizes = [8, 128], strides = [1, 1]} : vector<8x512xf32> to vector<8x128xf32>
    %188 = arith.mulf %181, %167 : vector<8x128xf32>
    %189 = arith.mulf %180, %186 : vector<8x128xf32>
    %190 = arith.addf %188, %189 : vector<8x128xf32>
    %191 = math.tanh %190 : vector<8x128xf32>
    %192 = arith.mulf %187, %191 : vector<8x128xf32>
    %c56_81 = arith.constant 56 : index
    %c0_82 = arith.constant 0 : index
    %193 = vector.load %arg12[%c56_81, %c0_82] : memref<64x128xf32, #tpu.memory_space<vmem>>, vector<8x128xf32>
    tpu.vector_store %arg12[%c56_81, %c0_82], %192 {strides = array<i32>} : memref<64x128xf32, #tpu.memory_space<vmem>>, vector<8x128xf32>,
    %c0_83 = arith.constant 0 : index
    %c0_84 = arith.constant 0 : index
    %194 = vector.load %arg12[%c0_83, %c0_84] : memref<64x128xf32, #tpu.memory_space<vmem>>, vector<64x128xf32>
    %c0_85 = arith.constant 0 : index
    %c0_86 = arith.constant 0 : index
    %195 = vector.load %arg5[%c0_85, %c0_86] : memref<128x512xf32, #tpu.memory_space<vmem>>, vector<128x512xf32>
    %cst_87 = arith.constant dense<0.000000e+00> : vector<64x512xf32>
    %196 = tpu.matmul %194, %195, %cst_87 {dimension_numbers = #tpu.dot_dimension_numbers<[1], [0], [0], [1], [0, 0, 1, 1], [], []>} : vector<64x128xf32>, vector<128x512xf32>, vector<64x512xf32> -> vector<64x512xf32>
    %c0_88 = arith.constant 0 : index
    %c0_89 = arith.constant 0 : index
    %197 = vector.load %arg7[%c0_88, %c0_89] : memref<1x512xf32, #tpu.memory_space<vmem>>, vector<1x512xf32>
    %198 = vector.broadcast %197 : vector<1x512xf32> to vector<64x512xf32>
    %199 = arith.addf %196, %198 : vector<64x512xf32>
    %c0_90 = arith.constant 0 : index
    %c0_91 = arith.constant 0 : index
    %200 = vector.load %arg11[%c0_90, %c0_91] : memref<64x512xf32, #tpu.memory_space<vmem>>, vector<64x512xf32>
    tpu.vector_store %arg11[%c0_90, %c0_91], %199 {strides = array<i32>} : memref<64x512xf32, #tpu.memory_space<vmem>>, vector<64x512xf32>,
    %cst_92 = arith.constant 0.000000e+00 : f32
    %201 = vector.broadcast %cst_92 : f32 to vector<8x128xf32>
    %cst_93 = arith.constant 0.000000e+00 : f32
    %202 = vector.broadcast %cst_93 : f32 to vector<8x128xf32>
    %c0_94 = arith.constant 0 : index
    %c0_95 = arith.constant 0 : index
    %203 = vector.load %arg11[%c0_94, %c0_95] : memref<64x512xf32, #tpu.memory_space<vmem>>, vector<8x512xf32>
    %c0_96 = arith.constant 0 : index
    %c0_97 = arith.constant 0 : index
    %204 = vector.load %arg6[%c0_96, %c0_97] : memref<128x512xf32, #tpu.memory_space<vmem>>, vector<128x512xf32>
    %cst_98 = arith.constant dense<0.000000e+00> : vector<8x512xf32>
    %205 = tpu.matmul %201, %204, %cst_98 {dimension_numbers = #tpu.dot_dimension_numbers<[1], [0], [0], [1], [0, 0, 1, 1], [], []>} : vector<8x128xf32>, vector<128x512xf32>, vector<8x512xf32> -> vector<8x512xf32>
    %206 = arith.addf %203, %205 : vector<8x512xf32>
    %207 = arith.negf %206 : vector<8x512xf32>
    %208 = math.exp %207 : vector<8x512xf32>
    %cst_99 = arith.constant 1.000000e+00 : f32
    %209 = vector.broadcast %cst_99 : f32 to vector<8x512xf32>
    %210 = arith.addf %209, %208 : vector<8x512xf32>
    %211 = arith.divf %209, %210 : vector<8x512xf32>
    %212 = vector.extract_strided_slice %211 {offsets = [0, 0], sizes = [8, 128], strides = [1, 1]} : vector<8x512xf32> to vector<8x128xf32>
    %213 = vector.extract_strided_slice %211 {offsets = [0, 128], sizes = [8, 128], strides = [1, 1]} : vector<8x512xf32> to vector<8x128xf32>
    %214 = vector.extract_strided_slice %211 {offsets = [0, 256], sizes = [8, 128], strides = [1, 1]} : vector<8x512xf32> to vector<8x128xf32>
    %cst_100 = arith.constant 2.000000e+00 : f32
    %215 = vector.broadcast %cst_100 : f32 to vector<8x128xf32>
    %216 = arith.mulf %215, %214 : vector<8x128xf32>
    %cst_101 = arith.constant 1.000000e+00 : f32
    %217 = vector.broadcast %cst_101 : f32 to vector<8x128xf32>
    %218 = arith.subf %216, %217 : vector<8x128xf32>
    %219 = vector.extract_strided_slice %211 {offsets = [0, 384], sizes = [8, 128], strides = [1, 1]} : vector<8x512xf32> to vector<8x128xf32>
    %220 = arith.mulf %213, %202 : vector<8x128xf32>
    %221 = arith.mulf %212, %218 : vector<8x128xf32>
    %222 = arith.addf %220, %221 : vector<8x128xf32>
    %223 = math.tanh %222 : vector<8x128xf32>
    %224 = arith.mulf %219, %223 : vector<8x128xf32>
    %c8_102 = arith.constant 8 : index
    %c0_103 = arith.constant 0 : index
    %225 = vector.load %arg11[%c8_102, %c0_103] : memref<64x512xf32, #tpu.memory_space<vmem>>, vector<8x512xf32>
    %c0_104 = arith.constant 0 : index
    %c0_105 = arith.constant 0 : index
    %226 = vector.load %arg6[%c0_104, %c0_105] : memref<128x512xf32, #tpu.memory_space<vmem>>, vector<128x512xf32>
    %cst_106 = arith.constant dense<0.000000e+00> : vector<8x512xf32>
    %227 = tpu.matmul %224, %226, %cst_106 {dimension_numbers = #tpu.dot_dimension_numbers<[1], [0], [0], [1], [0, 0, 1, 1], [], []>} : vector<8x128xf32>, vector<128x512xf32>, vector<8x512xf32> -> vector<8x512xf32>
    %228 = arith.addf %225, %227 : vector<8x512xf32>
    %229 = arith.negf %228 : vector<8x512xf32>
    %230 = math.exp %229 : vector<8x512xf32>
    %cst_107 = arith.constant 1.000000e+00 : f32
    %231 = vector.broadcast %cst_107 : f32 to vector<8x512xf32>
    %232 = arith.addf %231, %230 : vector<8x512xf32>
    %233 = arith.divf %231, %232 : vector<8x512xf32>
    %234 = vector.extract_strided_slice %233 {offsets = [0, 0], sizes = [8, 128], strides = [1, 1]} : vector<8x512xf32> to vector<8x128xf32>
    %235 = vector.extract_strided_slice %233 {offsets = [0, 128], sizes = [8, 128], strides = [1, 1]} : vector<8x512xf32> to vector<8x128xf32>
    %236 = vector.extract_strided_slice %233 {offsets = [0, 256], sizes = [8, 128], strides = [1, 1]} : vector<8x512xf32> to vector<8x128xf32>
    %cst_108 = arith.constant 2.000000e+00 : f32
    %237 = vector.broadcast %cst_108 : f32 to vector<8x128xf32>
    %238 = arith.mulf %237, %236 : vector<8x128xf32>
    %cst_109 = arith.constant 1.000000e+00 : f32
    %239 = vector.broadcast %cst_109 : f32 to vector<8x128xf32>
    %240 = arith.subf %238, %239 : vector<8x128xf32>
    %241 = vector.extract_strided_slice %233 {offsets = [0, 384], sizes = [8, 128], strides = [1, 1]} : vector<8x512xf32> to vector<8x128xf32>
    %242 = arith.mulf %235, %222 : vector<8x128xf32>
    %243 = arith.mulf %234, %240 : vector<8x128xf32>
    %244 = arith.addf %242, %243 : vector<8x128xf32>
    %245 = math.tanh %244 : vector<8x128xf32>
    %246 = arith.mulf %241, %245 : vector<8x128xf32>
    %c16_110 = arith.constant 16 : index
    %c0_111 = arith.constant 0 : index
    %247 = vector.load %arg11[%c16_110, %c0_111] : memref<64x512xf32, #tpu.memory_space<vmem>>, vector<8x512xf32>
    %c0_112 = arith.constant 0 : index
    %c0_113 = arith.constant 0 : index
    %248 = vector.load %arg6[%c0_112, %c0_113] : memref<128x512xf32, #tpu.memory_space<vmem>>, vector<128x512xf32>
    %cst_114 = arith.constant dense<0.000000e+00> : vector<8x512xf32>
    %249 = tpu.matmul %246, %248, %cst_114 {dimension_numbers = #tpu.dot_dimension_numbers<[1], [0], [0], [1], [0, 0, 1, 1], [], []>} : vector<8x128xf32>, vector<128x512xf32>, vector<8x512xf32> -> vector<8x512xf32>
    %250 = arith.addf %247, %249 : vector<8x512xf32>
    %251 = arith.negf %250 : vector<8x512xf32>
    %252 = math.exp %251 : vector<8x512xf32>
    %cst_115 = arith.constant 1.000000e+00 : f32
    %253 = vector.broadcast %cst_115 : f32 to vector<8x512xf32>
    %254 = arith.addf %253, %252 : vector<8x512xf32>
    %255 = arith.divf %253, %254 : vector<8x512xf32>
    %256 = vector.extract_strided_slice %255 {offsets = [0, 0], sizes = [8, 128], strides = [1, 1]} : vector<8x512xf32> to vector<8x128xf32>
    %257 = vector.extract_strided_slice %255 {offsets = [0, 128], sizes = [8, 128], strides = [1, 1]} : vector<8x512xf32> to vector<8x128xf32>
    %258 = vector.extract_strided_slice %255 {offsets = [0, 256], sizes = [8, 128], strides = [1, 1]} : vector<8x512xf32> to vector<8x128xf32>
    %cst_116 = arith.constant 2.000000e+00 : f32
    %259 = vector.broadcast %cst_116 : f32 to vector<8x128xf32>
    %260 = arith.mulf %259, %258 : vector<8x128xf32>
    %cst_117 = arith.constant 1.000000e+00 : f32
    %261 = vector.broadcast %cst_117 : f32 to vector<8x128xf32>
    %262 = arith.subf %260, %261 : vector<8x128xf32>
    %263 = vector.extract_strided_slice %255 {offsets = [0, 384], sizes = [8, 128], strides = [1, 1]} : vector<8x512xf32> to vector<8x128xf32>
    %264 = arith.mulf %257, %244 : vector<8x128xf32>
    %265 = arith.mulf %256, %262 : vector<8x128xf32>
    %266 = arith.addf %264, %265 : vector<8x128xf32>
    %267 = math.tanh %266 : vector<8x128xf32>
    %268 = arith.mulf %263, %267 : vector<8x128xf32>
    %c24_118 = arith.constant 24 : index
    %c0_119 = arith.constant 0 : index
    %269 = vector.load %arg11[%c24_118, %c0_119] : memref<64x512xf32, #tpu.memory_space<vmem>>, vector<8x512xf32>
    %c0_120 = arith.constant 0 : index
    %c0_121 = arith.constant 0 : index
    %270 = vector.load %arg6[%c0_120, %c0_121] : memref<128x512xf32, #tpu.memory_space<vmem>>, vector<128x512xf32>
    %cst_122 = arith.constant dense<0.000000e+00> : vector<8x512xf32>
    %271 = tpu.matmul %268, %270, %cst_122 {dimension_numbers = #tpu.dot_dimension_numbers<[1], [0], [0], [1], [0, 0, 1, 1], [], []>} : vector<8x128xf32>, vector<128x512xf32>, vector<8x512xf32> -> vector<8x512xf32>
    %272 = arith.addf %269, %271 : vector<8x512xf32>
    %273 = arith.negf %272 : vector<8x512xf32>
    %274 = math.exp %273 : vector<8x512xf32>
    %cst_123 = arith.constant 1.000000e+00 : f32
    %275 = vector.broadcast %cst_123 : f32 to vector<8x512xf32>
    %276 = arith.addf %275, %274 : vector<8x512xf32>
    %277 = arith.divf %275, %276 : vector<8x512xf32>
    %278 = vector.extract_strided_slice %277 {offsets = [0, 0], sizes = [8, 128], strides = [1, 1]} : vector<8x512xf32> to vector<8x128xf32>
    %279 = vector.extract_strided_slice %277 {offsets = [0, 128], sizes = [8, 128], strides = [1, 1]} : vector<8x512xf32> to vector<8x128xf32>
    %280 = vector.extract_strided_slice %277 {offsets = [0, 256], sizes = [8, 128], strides = [1, 1]} : vector<8x512xf32> to vector<8x128xf32>
    %cst_124 = arith.constant 2.000000e+00 : f32
    %281 = vector.broadcast %cst_124 : f32 to vector<8x128xf32>
    %282 = arith.mulf %281, %280 : vector<8x128xf32>
    %cst_125 = arith.constant 1.000000e+00 : f32
    %283 = vector.broadcast %cst_125 : f32 to vector<8x128xf32>
    %284 = arith.subf %282, %283 : vector<8x128xf32>
    %285 = vector.extract_strided_slice %277 {offsets = [0, 384], sizes = [8, 128], strides = [1, 1]} : vector<8x512xf32> to vector<8x128xf32>
    %286 = arith.mulf %279, %266 : vector<8x128xf32>
    %287 = arith.mulf %278, %284 : vector<8x128xf32>
    %288 = arith.addf %286, %287 : vector<8x128xf32>
    %289 = math.tanh %288 : vector<8x128xf32>
    %290 = arith.mulf %285, %289 : vector<8x128xf32>
    %c32_126 = arith.constant 32 : index
    %c0_127 = arith.constant 0 : index
    %291 = vector.load %arg11[%c32_126, %c0_127] : memref<64x512xf32, #tpu.memory_space<vmem>>, vector<8x512xf32>
    %c0_128 = arith.constant 0 : index
    %c0_129 = arith.constant 0 : index
    %292 = vector.load %arg6[%c0_128, %c0_129] : memref<128x512xf32, #tpu.memory_space<vmem>>, vector<128x512xf32>
    %cst_130 = arith.constant dense<0.000000e+00> : vector<8x512xf32>
    %293 = tpu.matmul %290, %292, %cst_130 {dimension_numbers = #tpu.dot_dimension_numbers<[1], [0], [0], [1], [0, 0, 1, 1], [], []>} : vector<8x128xf32>, vector<128x512xf32>, vector<8x512xf32> -> vector<8x512xf32>
    %294 = arith.addf %291, %293 : vector<8x512xf32>
    %295 = arith.negf %294 : vector<8x512xf32>
    %296 = math.exp %295 : vector<8x512xf32>
    %cst_131 = arith.constant 1.000000e+00 : f32
    %297 = vector.broadcast %cst_131 : f32 to vector<8x512xf32>
    %298 = arith.addf %297, %296 : vector<8x512xf32>
    %299 = arith.divf %297, %298 : vector<8x512xf32>
    %300 = vector.extract_strided_slice %299 {offsets = [0, 0], sizes = [8, 128], strides = [1, 1]} : vector<8x512xf32> to vector<8x128xf32>
    %301 = vector.extract_strided_slice %299 {offsets = [0, 128], sizes = [8, 128], strides = [1, 1]} : vector<8x512xf32> to vector<8x128xf32>
    %302 = vector.extract_strided_slice %299 {offsets = [0, 256], sizes = [8, 128], strides = [1, 1]} : vector<8x512xf32> to vector<8x128xf32>
    %cst_132 = arith.constant 2.000000e+00 : f32
    %303 = vector.broadcast %cst_132 : f32 to vector<8x128xf32>
    %304 = arith.mulf %303, %302 : vector<8x128xf32>
    %cst_133 = arith.constant 1.000000e+00 : f32
    %305 = vector.broadcast %cst_133 : f32 to vector<8x128xf32>
    %306 = arith.subf %304, %305 : vector<8x128xf32>
    %307 = vector.extract_strided_slice %299 {offsets = [0, 384], sizes = [8, 128], strides = [1, 1]} : vector<8x512xf32> to vector<8x128xf32>
    %308 = arith.mulf %301, %288 : vector<8x128xf32>
    %309 = arith.mulf %300, %306 : vector<8x128xf32>
    %310 = arith.addf %308, %309 : vector<8x128xf32>
    %311 = math.tanh %310 : vector<8x128xf32>
    %312 = arith.mulf %307, %311 : vector<8x128xf32>
    %c40_134 = arith.constant 40 : index
    %c0_135 = arith.constant 0 : index
    %313 = vector.load %arg11[%c40_134, %c0_135] : memref<64x512xf32, #tpu.memory_space<vmem>>, vector<8x512xf32>
    %c0_136 = arith.constant 0 : index
    %c0_137 = arith.constant 0 : index
    %314 = vector.load %arg6[%c0_136, %c0_137] : memref<128x512xf32, #tpu.memory_space<vmem>>, vector<128x512xf32>
    %cst_138 = arith.constant dense<0.000000e+00> : vector<8x512xf32>
    %315 = tpu.matmul %312, %314, %cst_138 {dimension_numbers = #tpu.dot_dimension_numbers<[1], [0], [0], [1], [0, 0, 1, 1], [], []>} : vector<8x128xf32>, vector<128x512xf32>, vector<8x512xf32> -> vector<8x512xf32>
    %316 = arith.addf %313, %315 : vector<8x512xf32>
    %317 = arith.negf %316 : vector<8x512xf32>
    %318 = math.exp %317 : vector<8x512xf32>
    %cst_139 = arith.constant 1.000000e+00 : f32
    %319 = vector.broadcast %cst_139 : f32 to vector<8x512xf32>
    %320 = arith.addf %319, %318 : vector<8x512xf32>
    %321 = arith.divf %319, %320 : vector<8x512xf32>
    %322 = vector.extract_strided_slice %321 {offsets = [0, 0], sizes = [8, 128], strides = [1, 1]} : vector<8x512xf32> to vector<8x128xf32>
    %323 = vector.extract_strided_slice %321 {offsets = [0, 128], sizes = [8, 128], strides = [1, 1]} : vector<8x512xf32> to vector<8x128xf32>
    %324 = vector.extract_strided_slice %321 {offsets = [0, 256], sizes = [8, 128], strides = [1, 1]} : vector<8x512xf32> to vector<8x128xf32>
    %cst_140 = arith.constant 2.000000e+00 : f32
    %325 = vector.broadcast %cst_140 : f32 to vector<8x128xf32>
    %326 = arith.mulf %325, %324 : vector<8x128xf32>
    %cst_141 = arith.constant 1.000000e+00 : f32
    %327 = vector.broadcast %cst_141 : f32 to vector<8x128xf32>
    %328 = arith.subf %326, %327 : vector<8x128xf32>
    %329 = vector.extract_strided_slice %321 {offsets = [0, 384], sizes = [8, 128], strides = [1, 1]} : vector<8x512xf32> to vector<8x128xf32>
    %330 = arith.mulf %323, %310 : vector<8x128xf32>
    %331 = arith.mulf %322, %328 : vector<8x128xf32>
    %332 = arith.addf %330, %331 : vector<8x128xf32>
    %333 = math.tanh %332 : vector<8x128xf32>
    %334 = arith.mulf %329, %333 : vector<8x128xf32>
    %c48_142 = arith.constant 48 : index
    %c0_143 = arith.constant 0 : index
    %335 = vector.load %arg11[%c48_142, %c0_143] : memref<64x512xf32, #tpu.memory_space<vmem>>, vector<8x512xf32>
    %c0_144 = arith.constant 0 : index
    %c0_145 = arith.constant 0 : index
    %336 = vector.load %arg6[%c0_144, %c0_145] : memref<128x512xf32, #tpu.memory_space<vmem>>, vector<128x512xf32>
    %cst_146 = arith.constant dense<0.000000e+00> : vector<8x512xf32>
    %337 = tpu.matmul %334, %336, %cst_146 {dimension_numbers = #tpu.dot_dimension_numbers<[1], [0], [0], [1], [0, 0, 1, 1], [], []>} : vector<8x128xf32>, vector<128x512xf32>, vector<8x512xf32> -> vector<8x512xf32>
    %338 = arith.addf %335, %337 : vector<8x512xf32>
    %339 = arith.negf %338 : vector<8x512xf32>
    %340 = math.exp %339 : vector<8x512xf32>
    %cst_147 = arith.constant 1.000000e+00 : f32
    %341 = vector.broadcast %cst_147 : f32 to vector<8x512xf32>
    %342 = arith.addf %341, %340 : vector<8x512xf32>
    %343 = arith.divf %341, %342 : vector<8x512xf32>
    %344 = vector.extract_strided_slice %343 {offsets = [0, 0], sizes = [8, 128], strides = [1, 1]} : vector<8x512xf32> to vector<8x128xf32>
    %345 = vector.extract_strided_slice %343 {offsets = [0, 128], sizes = [8, 128], strides = [1, 1]} : vector<8x512xf32> to vector<8x128xf32>
    %346 = vector.extract_strided_slice %343 {offsets = [0, 256], sizes = [8, 128], strides = [1, 1]} : vector<8x512xf32> to vector<8x128xf32>
    %cst_148 = arith.constant 2.000000e+00 : f32
    %347 = vector.broadcast %cst_148 : f32 to vector<8x128xf32>
    %348 = arith.mulf %347, %346 : vector<8x128xf32>
    %cst_149 = arith.constant 1.000000e+00 : f32
    %349 = vector.broadcast %cst_149 : f32 to vector<8x128xf32>
    %350 = arith.subf %348, %349 : vector<8x128xf32>
    %351 = vector.extract_strided_slice %343 {offsets = [0, 384], sizes = [8, 128], strides = [1, 1]} : vector<8x512xf32> to vector<8x128xf32>
    %352 = arith.mulf %345, %332 : vector<8x128xf32>
    %353 = arith.mulf %344, %350 : vector<8x128xf32>
    %354 = arith.addf %352, %353 : vector<8x128xf32>
    %355 = math.tanh %354 : vector<8x128xf32>
    %356 = arith.mulf %351, %355 : vector<8x128xf32>
    %c56_150 = arith.constant 56 : index
    %c0_151 = arith.constant 0 : index
    %357 = vector.load %arg11[%c56_150, %c0_151] : memref<64x512xf32, #tpu.memory_space<vmem>>, vector<8x512xf32>
    %c0_152 = arith.constant 0 : index
    %c0_153 = arith.constant 0 : index
    %358 = vector.load %arg6[%c0_152, %c0_153] : memref<128x512xf32, #tpu.memory_space<vmem>>, vector<128x512xf32>
    %cst_154 = arith.constant dense<0.000000e+00> : vector<8x512xf32>
    %359 = tpu.matmul %356, %358, %cst_154 {dimension_numbers = #tpu.dot_dimension_numbers<[1], [0], [0], [1], [0, 0, 1, 1], [], []>} : vector<8x128xf32>, vector<128x512xf32>, vector<8x512xf32> -> vector<8x512xf32>
    %360 = arith.addf %357, %359 : vector<8x512xf32>
    %361 = arith.negf %360 : vector<8x512xf32>
    %362 = math.exp %361 : vector<8x512xf32>
    %cst_155 = arith.constant 1.000000e+00 : f32
    %363 = vector.broadcast %cst_155 : f32 to vector<8x512xf32>
    %364 = arith.addf %363, %362 : vector<8x512xf32>
    %365 = arith.divf %363, %364 : vector<8x512xf32>
    %366 = vector.extract_strided_slice %365 {offsets = [0, 0], sizes = [8, 128], strides = [1, 1]} : vector<8x512xf32> to vector<8x128xf32>
    %367 = vector.extract_strided_slice %365 {offsets = [0, 128], sizes = [8, 128], strides = [1, 1]} : vector<8x512xf32> to vector<8x128xf32>
    %368 = vector.extract_strided_slice %365 {offsets = [0, 256], sizes = [8, 128], strides = [1, 1]} : vector<8x512xf32> to vector<8x128xf32>
    %cst_156 = arith.constant 2.000000e+00 : f32
    %369 = vector.broadcast %cst_156 : f32 to vector<8x128xf32>
    %370 = arith.mulf %369, %368 : vector<8x128xf32>
    %cst_157 = arith.constant 1.000000e+00 : f32
    %371 = vector.broadcast %cst_157 : f32 to vector<8x128xf32>
    %372 = arith.subf %370, %371 : vector<8x128xf32>
    %373 = vector.extract_strided_slice %365 {offsets = [0, 384], sizes = [8, 128], strides = [1, 1]} : vector<8x512xf32> to vector<8x128xf32>
    %374 = arith.mulf %367, %354 : vector<8x128xf32>
    %375 = arith.mulf %366, %372 : vector<8x128xf32>
    %376 = arith.addf %374, %375 : vector<8x128xf32>
    %377 = math.tanh %376 : vector<8x128xf32>
    %378 = arith.mulf %373, %377 : vector<8x128xf32>
    %c0_158 = arith.constant 0 : index
    %c0_159 = arith.constant 0 : index
    %379 = vector.load %arg8[%c0_158, %c0_159] : memref<128x128xf32, #tpu.memory_space<vmem>>, vector<128x128xf32>
    %cst_160 = arith.constant dense<0.000000e+00> : vector<8x128xf32>
    %380 = tpu.matmul %378, %379, %cst_160 {dimension_numbers = #tpu.dot_dimension_numbers<[1], [0], [0], [1], [0, 0, 1, 1], [], []>} : vector<8x128xf32>, vector<128x128xf32>, vector<8x128xf32> -> vector<8x128xf32>
    %c0_161 = arith.constant 0 : index
    %c0_162 = arith.constant 0 : index
    %381 = vector.load %arg9[%c0_161, %c0_162] : memref<1x128xf32, #tpu.memory_space<vmem>>, vector<1x128xf32>
    %382 = vector.broadcast %381 : vector<1x128xf32> to vector<8x128xf32>
    %383 = arith.addf %380, %382 : vector<8x128xf32>
    %c0_163 = arith.constant 0 : index
    %c0_164 = arith.constant 0 : index
    %384 = vector.load %arg10[%c0_163, %c0_164] : memref<8x128xf32, #tpu.memory_space<vmem>>, vector<8x128xf32>
    tpu.vector_store %arg10[%c0_163, %c0_164], %383 {strides = array<i32>} : memref<8x128xf32, #tpu.memory_space<vmem>>, vector<8x128xf32>,
    return
  }
  func.func @transform_0(%arg0: i32) -> (i32, i32, i32) {
    %c0_i32 = arith.constant 0 : i32
    %c0_i32_0 = arith.constant 0 : i32
    %c0_i32_1 = arith.constant 0 : i32
    return %arg0, %c0_i32, %c0_i32_0 : i32, i32, i32
  }
  func.func @transform_1(%arg0: i32) -> (i32, i32) {
    %c0_i32 = arith.constant 0 : i32
    %c0_i32_0 = arith.constant 0 : i32
    %c0_i32_1 = arith.constant 0 : i32
    return %c0_i32, %c0_i32_0 : i32, i32
  }
  func.func @transform_2(%arg0: i32) -> (i32, i32) {
    %c0_i32 = arith.constant 0 : i32
    %c0_i32_0 = arith.constant 0 : i32
    %c0_i32_1 = arith.constant 0 : i32
    return %c0_i32, %c0_i32_0 : i32, i32
  }
  func.func @transform_3(%arg0: i32) -> (i32, i32) {
    %c0_i32 = arith.constant 0 : i32
    %c0_i32_0 = arith.constant 0 : i32
    %c0_i32_1 = arith.constant 0 : i32
    return %c0_i32, %c0_i32_0 : i32, i32
  }
  func.func @transform_4(%arg0: i32) -> (i32, i32) {
    %c0_i32 = arith.constant 0 : i32
    %c0_i32_0 = arith.constant 0 : i32
    %c0_i32_1 = arith.constant 0 : i32
    return %c0_i32, %c0_i32_0 : i32, i32
  }
  func.func @transform_5(%arg0: i32) -> (i32, i32) {
    %c0_i32 = arith.constant 0 : i32
    %c0_i32_0 = arith.constant 0 : i32
    %c0_i32_1 = arith.constant 0 : i32
    return %c0_i32, %c0_i32_0 : i32, i32
  }
  func.func @transform_6(%arg0: i32) -> (i32, i32) {
    %c0_i32 = arith.constant 0 : i32
    %c0_i32_0 = arith.constant 0 : i32
    %c0_i32_1 = arith.constant 0 : i32
    return %c0_i32, %c0_i32_0 : i32, i32
  }
  func.func @transform_7(%arg0: i32) -> (i32, i32) {
    %c0_i32 = arith.constant 0 : i32
    %c0_i32_0 = arith.constant 0 : i32
    %c0_i32_1 = arith.constant 0 : i32
    return %c0_i32, %c0_i32_0 : i32, i32
  }
  func.func @transform_8(%arg0: i32) -> (i32, i32) {
    %c0_i32 = arith.constant 0 : i32
    %c0_i32_0 = arith.constant 0 : i32
    %c0_i32_1 = arith.constant 0 : i32
    return %c0_i32, %c0_i32_0 : i32, i32
  }
  func.func @transform_9(%arg0: i32) -> (i32, i32) {
    %c0_i32 = arith.constant 0 : i32
    %c0_i32_0 = arith.constant 0 : i32
    return %arg0, %c0_i32 : i32, i32
  }
}

</mosaic_0001>

<llo_original>
// kernel: tpu_custom_call.1
$region0: #{tpu_custom_call.1}
  #allocation0 [shape = 'u32[]', space=smem, size = 0x4, offset = 0x4, fixed_abs, tag = 'smem constant byte address 0x4 - core index']
  #allocation1 [shape = 'u32[144,128]{1,0:T(1,128)}', space=vmem, size = 0x12000, scoped, tag = 'internal scratch']
  #allocation2 [shape = 'f32[64,512]{1,0:T(8,128)}', space=vmem, size = 0x20000, scoped, tag = 'scratch operand']
  #allocation3 [shape = 'f32[64,128]{1,0:T(8,128)}', space=vmem, size = 0x8000, scoped, tag = 'scratch operand']
  %s0 = inlined_call_operand.vmem [shape: f32[1,64,16], index: 0, kind: input, shape index: {}]
  %s1 = inlined_call_operand.vmem [shape: f32[16,512], index: 1, kind: input, shape index: {}]
  %s2 = inlined_call_operand.hbm [shape: f32[128,512], index: 2, kind: input, shape index: {}]
  %s3 = inlined_call_operand.vmem [shape: f32[1,512], index: 3, kind: input, shape index: {}]
  %s4 = inlined_call_operand.hbm [shape: f32[128,512], index: 4, kind: input, shape index: {}]
  %s5 = inlined_call_operand.hbm [shape: f32[128,512], index: 5, kind: input, shape index: {}]
  %s6 = inlined_call_operand.vmem [shape: f32[1,512], index: 6, kind: input, shape index: {}]
  %s7 = inlined_call_operand.hbm [shape: f32[128,128], index: 7, kind: input, shape index: {}]
  %s8 = inlined_call_operand.vmem [shape: f32[1,128], index: 8, kind: input, shape index: {}]
  %s9 = inlined_call_operand.hbm [shape: f32[8,128], index: 9, kind: output, shape index: {}]
  %s10 = sld [smem:[#allocation0]]
  $region62: #{tpu_custom_call.1} parent=0
    _
  %s12 = ssub.s32 1, %s10
  %s13 = scalar_select 0, %s12, %s10
  $region1: #{tpu_custom_call.1} parent=0
    #allocation4 [shape = 'u8[262144]{0}', space=vmem, size = 0x40000, scoped, tag = 'input window, operand 2, single buffered']
    #allocation5 [shape = 's32[1]{0}', space=sflag, size = 0x4, scoped, tag = 'scoped memory for tpu_custom_call.1']
    #allocation6 [shape = 's32[1]{0}', space=sflag, size = 0x4, scoped, tag = 'scoped memory for tpu_custom_call.1']
    #allocation7 [shape = 'u8[262144]{0}', space=vmem, size = 0x40000, scoped, tag = 'input window, operand 4, single buffered']
    #allocation8 [shape = 's32[1]{0}', space=sflag, size = 0x4, scoped, tag = 'scoped memory for tpu_custom_call.1']
    #allocation9 [shape = 'u8[262144]{0}', space=vmem, size = 0x40000, scoped, tag = 'input window, operand 5, single buffered']
    #allocation10 [shape = 'u8[65536]{0}', space=vmem, size = 0x10000, scoped, tag = 'input window, operand 7, single buffered']
    #allocation11 [shape = 's32[1]{0}', space=sflag, size = 0x4, scoped, tag = 'scoped memory for tpu_custom_call.1']
    #allocation12 [shape = 'u8[4096]{0}', space=vmem, size = 0x1000, scoped, tag = 'output window, operand 0, single buffered']
    %14 = vsyncpa [#allocation5], 0
    %15 = vsyncpa [#allocation8], 0
    %16 = vsyncpa [#allocation11], 0
    %17 = vsyncpa [#allocation6], 0
    // Predicated region
    $region2: #{tpu_custom_call.1} parent=1 // pred_check
      _
    $region3: #{tpu_custom_call.1} parent=1 // pred_check_branch
      %19 = sbr.rel (0) target = $region5
    $region4: #{tpu_custom_call.1} parent=1 // pred_region
      _
    $region5: #{tpu_custom_call.1} parent=1 // pred_fallthru
      _
    // Predicated region
    $region6: #{tpu_custom_call.1} parent=1 // pred_check
      _
    $region7: #{tpu_custom_call.1} parent=1 // pred_check_branch
      %21 = sbr.rel (0) target = $region9
    $region8: #{tpu_custom_call.1} parent=1 // pred_region
      _
    $region9: #{tpu_custom_call.1} parent=1 // pred_fallthru
      _
    // Predicated region
    $region10: #{tpu_custom_call.1} parent=1 // pred_check
      _
    $region11: #{tpu_custom_call.1} parent=1 // pred_check_branch
      %23 = sbr.rel (0) target = $region13
    $region12: #{tpu_custom_call.1} parent=1 // pred_region
      %s25 = ssub.s32 8192, 8192
      %26 = vsyncadd [#allocation5], %s25
      %s27 = sshll.u32 [#allocation4], 4
      %s28 = int_to_ptr.vmem [resolvable:$true] %s27
      %33 = dma.hbm_to_vmem [thread:$0]  %s2, 8192, %s28, [#allocation5], 512, 512, 32
    $region13: #{tpu_custom_call.1} parent=1 // pred_fallthru
      _
    // Predicated region
    $region14: #{tpu_custom_call.1} parent=1 // pred_check
      _
    $region15: #{tpu_custom_call.1} parent=1 // pred_check_branch
      %35 = sbr.rel (0) target = $region17
    $region16: #{tpu_custom_call.1} parent=1 // pred_region
      _
    $region17: #{tpu_custom_call.1} parent=1 // pred_fallthru
      _
    // Predicated region
    $region18: #{tpu_custom_call.1} parent=1 // pred_check
      _
    $region19: #{tpu_custom_call.1} parent=1 // pred_check_branch
      %37 = sbr.rel (0) target = $region21
    $region20: #{tpu_custom_call.1} parent=1 // pred_region
      %s39 = ssub.s32 8192, 8192
      %40 = vsyncadd [#allocation8], %s39
      %s41 = sshll.u32 [#allocation7], 4
      %s42 = int_to_ptr.vmem [resolvable:$true] %s41
      %47 = dma.hbm_to_vmem [thread:$0]  %s4, 8192, %s42, [#allocation8], 512, 512, 32
    $region21: #{tpu_custom_call.1} parent=1 // pred_fallthru
      _
    // Predicated region
    $region22: #{tpu_custom_call.1} parent=1 // pred_check
      _
    $region23: #{tpu_custom_call.1} parent=1 // pred_check_branch
      %49 = sbr.rel (0) target = $region25
    $region24: #{tpu_custom_call.1} parent=1 // pred_region
      %s51 = ssub.s32 8192, 8192
      %52 = vsyncadd [#allocation8], %s51
      %s53 = sshll.u32 [#allocation9], 4
      %s54 = int_to_ptr.vmem [resolvable:$true] %s53
      %59 = dma.hbm_to_vmem [thread:$0]  %s5, 8192, %s54, [#allocation8], 512, 512, 32
    $region25: #{tpu_custom_call.1} parent=1 // pred_fallthru
      _
    // Predicated region
    $region26: #{tpu_custom_call.1} parent=1 // pred_check
      _
    $region27: #{tpu_custom_call.1} parent=1 // pred_check_branch
      %61 = sbr.rel (0) target = $region29
    $region28: #{tpu_custom_call.1} parent=1 // pred_region
      _
    $region29: #{tpu_custom_call.1} parent=1 // pred_fallthru
      _
    // Predicated region
    $region30: #{tpu_custom_call.1} parent=1 // pred_check
      _
    $region31: #{tpu_custom_call.1} parent=1 // pred_check_branch
      %63 = sbr.rel (0) target = $region33
    $region32: #{tpu_custom_call.1} parent=1 // pred_region
      %s65 = ssub.s32 2048, 2048
      %66 = vsyncadd [#allocation11], %s65
      %s67 = sshll.u32 [#allocation10], 4
      %s68 = int_to_ptr.vmem [resolvable:$true] %s67
      %73 = dma.hbm_to_vmem [thread:$0]  %s7, 2048, %s68, [#allocation11], 128, 128, 8
    $region33: #{tpu_custom_call.1} parent=1 // pred_fallthru
      _
    // Predicated region
    $region34: #{tpu_custom_call.1} parent=1 // pred_check
      _
    $region35: #{tpu_custom_call.1} parent=1 // pred_check_branch
      %75 = sbr.rel (0) target = $region37
    $region36: #{tpu_custom_call.1} parent=1 // pred_region
      _
    $region37: #{tpu_custom_call.1} parent=1 // pred_fallthru
      _
    // Predicated region
    $region38: #{tpu_custom_call.1} parent=1 // pred_check
      _
    $region39: #{tpu_custom_call.1} parent=1 // pred_check_branch
      %77 = sbr.rel (0) target = $region41
    $region40: #{tpu_custom_call.1} parent=1 // pred_region
      %78 = dma.done [#allocation5], 8192
    $region41: #{tpu_custom_call.1} parent=1 // pred_fallthru
      _
    // Predicated region
    $region42: #{tpu_custom_call.1} parent=1 // pred_check
      _
    $region43: #{tpu_custom_call.1} parent=1 // pred_check_branch
      %80 = sbr.rel (0) target = $region45
    $region44: #{tpu_custom_call.1} parent=1 // pred_region
      %81 = dma.done [#allocation8], 8192
    $region45: #{tpu_custom_call.1} parent=1 // pred_fallthru
      _
    // Predicated region
    $region46: #{tpu_custom_call.1} parent=1 // pred_check
      _
    $region47: #{tpu_custom_call.1} parent=1 // pred_check_branch
      %83 = sbr.rel (0) target = $region49
    $region48: #{tpu_custom_call.1} parent=1 // pred_region
      %84 = dma.done [#allocation8], 8192
    $region49: #{tpu_custom_call.1} parent=1 // pred_fallthru
      _
    // Predicated region
    $region50: #{tpu_custom_call.1} parent=1 // pred_check
      _
    $region51: #{tpu_custom_call.1} parent=1 // pred_check_branch
      %86 = sbr.rel (0) target = $region53
    $region52: #{tpu_custom_call.1} parent=1 // pred_region
      %87 = dma.done [#allocation11], 2048
    $region53: #{tpu_custom_call.1} parent=1 // pred_fallthru
      _
    %v88 = vld [vmem:[%s0] sm:$0xff]
    %v89 = vld [vmem:[%s0 + $0x8] sm:$0xff]
    %v90 = vld [vmem:[%s0 + $0x10] sm:$0xff]
    %v91 = vld [vmem:[%s0 + $0x18] sm:$0xff]
    %v92 = vld [vmem:[%s0 + $0x20] sm:$0xff]
    %v93 = vld [vmem:[%s0 + $0x28] sm:$0xff]
    %v94 = vld [vmem:[%s0 + $0x30] sm:$0xff]
    %v95 = vld [vmem:[%s0 + $0x38] sm:$0xff]
    %v96 = vld [vmem:[%s1] sm:$0xff]
    %v97 = vld [vmem:[%s1 + $0x8] sm:$0xff]
    %v98 = vld [vmem:[%s1 + $0x10] sm:$0xff]
    %v99 = vld [vmem:[%s1 + $0x18] sm:$0xff]
    %v100 = vld [vmem:[%s1 + $0x20] sm:$0xff]
    %v101 = vld [vmem:[%s1 + $0x28] sm:$0xff]
    %v102 = vld [vmem:[%s1 + $0x30] sm:$0xff]
    %v103 = vld [vmem:[%s1 + $0x38] sm:$0xff]
    %v104 = vld [vmem:[%s3] sm:$0xf]
    %v106 = vlaneseq
    %v107 = vshrl.u32 %v106, 7
    %v108 = vsub.s32 0, %v107
    %v109 = vrot.slane %v104, %v108
    %v110 = vlaneseq
    %v111 = vshrl.u32 %v110, 7
    %v112 = vsub.s32 1, %v111
    %v113 = vrot.slane %v104, %v112
    %v114 = vlaneseq
    %v115 = vshrl.u32 %v114, 7
    %v116 = vsub.s32 2, %v115
    %v117 = vrot.slane %v104, %v116
    %v118 = vlaneseq
    %v119 = vshrl.u32 %v118, 7
    %v120 = vsub.s32 3, %v119
    %v121 = vrot.slane %v104, %v120
    %vm126 = vcmask 130048
    %v128 = vsel %vm126, %v88, 0
    %v131 = vsel %vm126, %v89, 0
    %v134 = vsel %vm126, %v90, 0
    %v137 = vsel %vm126, %v91, 0
    %v140 = vsel %vm126, %v92, 0
    %v143 = vsel %vm126, %v93, 0
    %v146 = vsel %vm126, %v94, 0
    %v149 = vsel %vm126, %v95, 0
    %151 = vmatprep.subr.mxu0 %v97
    %152 = vmatpush1.msra.mxu0 %v96
    %153 = vmatprep.subr.mxu0 %v101
    %154 = vmatpush1.msra.mxu0 %v100
    %155 = vmatprep.subr.mxu0 0.0
    %156 = vmatpush1.msra.mxu0 0.0
    %157 = vmatprep.subr.mxu0 0.0
    %158 = vmatpush1.msra.mxu0 0.0
    %159 = vmatprep.subr.mxu0 0.0
    %160 = vmatpush1.msra.mxu0 0.0
    %161 = vmatprep.subr.mxu0 0.0
    %162 = vmatpush1.msra.mxu0 0.0
    %163 = vmatprep.subr.mxu0 0.0
    %164 = vmatpush1.msra.mxu0 0.0
    %165 = vmatprep.subr.mxu0 0.0
    %166 = vmatpush1.msra.mxu0 0.0
    %167 = vmatprep.subr.mxu0 0.0
    %168 = vmatpush1.msra.mxu0 0.0
    %169 = vmatprep.subr.mxu0 0.0
    %170 = vmatpush1.msra.mxu0 0.0
    %171 = vmatprep.subr.mxu0 0.0
    %172 = vmatpush1.msra.mxu0 0.0
    %173 = vmatprep.subr.mxu0 0.0
    %174 = vmatpush1.msra.mxu0 0.0
    %175 = vmatprep.subr.mxu0 0.0
    %176 = vmatpush1.msra.mxu0 0.0
    %177 = vmatprep.subr.mxu0 0.0
    %178 = vmatpush1.msra.mxu0 0.0
    %179 = vmatprep.subr.mxu0 0.0
    %180 = vmatpush1.msra.mxu0 0.0
    %181 = vmatprep.subr.mxu0 0.0
    %182 = vmatpush1.msra.mxu0 0.0
    %183 = vmatprep.subr.mxu0 0.0
    %184 = vmatpush1.msra.mxu0 0.0
    %185 = vmatprep.subr.mxu0 0.0
    %186 = vmatpush1.msra.mxu0 0.0
    %187 = vmatprep.subr.mxu0 0.0
    %188 = vmatpush1.msra.mxu0 0.0
    %189 = vmatprep.subr.mxu0 0.0
    %190 = vmatpush1.msra.mxu0 0.0
    %191 = vmatprep.subr.mxu0 0.0
    %192 = vmatpush1.msra.mxu0 0.0
    %193 = vmatprep.subr.mxu0 0.0
    %194 = vmatpush1.msra.mxu0 0.0
    %195 = vmatprep.subr.mxu0 0.0
    %196 = vmatpush1.msra.mxu0 0.0
    %197 = vmatprep.subr.mxu0 0.0
    %198 = vmatpush1.msra.mxu0 0.0
    %199 = vmatprep.subr.mxu0 0.0
    %200 = vmatpush1.msra.mxu0 0.0
    %201 = vmatprep.subr.mxu0 0.0
    %202 = vmatpush1.msra.mxu0 0.0
    %203 = vmatprep.subr.mxu0 0.0
    %204 = vmatpush1.msra.mxu0 0.0
    %205 = vmatprep.subr.mxu0 0.0
    %206 = vmatpush1.msra.mxu0 0.0
    %207 = vmatprep.subr.mxu0 0.0
    %208 = vmatpush1.msra.mxu0 0.0
    %209 = vmatprep.subr.mxu0 0.0
    %210 = vmatpush1.msra.mxu0 0.0
    %211 = vmatprep.subr.mxu0 0.0
    %212 = vmatpush1.msra.mxu0 0.0
    %213 = vmatprep.subr.mxu0 0.0
    %214 = vmatpush1.msra.mxu0 0.0
    %215 = vmatprep.mubr.f32.mxu0 0.0
    %216 = vmatmul.mubr.f32.gmra.mrb[0].mxu0 %v128
    %v217 = vpop.f32.mrb[0].mxu0
    %v218 = vadd.f32 %v109, %v217
    %v219 = vpop.f32.mrb[0].mxu0
    %v220 = vadd.f32 %v113, %v219
    %221 = vmatprep.mubr.f32.mxu0 0.0
    %222 = vmatmul.mubr.f32.gmra.mrb[0].mxu0 %v131
    %v223 = vpop.f32.mrb[0].mxu0
    %v224 = vadd.f32 %v109, %v223
    %v225 = vpop.f32.mrb[0].mxu0
    %v226 = vadd.f32 %v113, %v225
    %227 = vmatprep.mubr.f32.mxu0 0.0
    %228 = vmatmul.mubr.f32.gmra.mrb[0].mxu0 %v134
    %v229 = vpop.f32.mrb[0].mxu0
    %v230 = vadd.f32 %v109, %v229
    %v231 = vpop.f32.mrb[0].mxu0
    %v232 = vadd.f32 %v113, %v231
    %233 = vmatprep.mubr.f32.mxu0 0.0
    %234 = vmatmul.mubr.f32.gmra.mrb[0].mxu0 %v137
    %v235 = vpop.f32.mrb[0].mxu0
    %v236 = vadd.f32 %v109, %v235
    %v237 = vpop.f32.mrb[0].mxu0
    %v238 = vadd.f32 %v113, %v237
    %239 = vmatprep.mubr.f32.mxu0 0.0
    %240 = vmatmul.mubr.f32.gmra.mrb[0].mxu0 %v140
    %v241 = vpop.f32.mrb[0].mxu0
    %v242 = vadd.f32 %v109, %v241
    %v243 = vpop.f32.mrb[0].mxu0
    %v244 = vadd.f32 %v113, %v243
    %245 = vmatprep.mubr.f32.mxu0 0.0
    %246 = vmatmul.mubr.f32.gmra.mrb[0].mxu0 %v143
    %v247 = vpop.f32.mrb[0].mxu0
    %v248 = vadd.f32 %v109, %v247
    %v249 = vpop.f32.mrb[0].mxu0
    %v250 = vadd.f32 %v113, %v249
    %251 = vmatprep.mubr.f32.mxu0 0.0
    %252 = vmatmul.mubr.f32.gmra.mrb[0].mxu0 %v146
    %v253 = vpop.f32.mrb[0].mxu0
    %v254 = vadd.f32 %v109, %v253
    %v255 = vpop.f32.mrb[0].mxu0
    %v256 = vadd.f32 %v113, %v255
    %257 = vmatprep.mubr.f32.mxu0 0.0
    %258 = vmatmul.mubr.f32.gmra.mrb[0].mxu0 %v149
    %v259 = vpop.f32.mrb[0].mxu0
    %v260 = vadd.f32 %v109, %v259
    %v261 = vpop.f32.mrb[0].mxu0
    %v262 = vadd.f32 %v113, %v261
    %263 = vdwg.mxu0
    %264 = vmatprep.subr.mxu0 %v99
    %265 = vmatpush1.msra.mxu0 %v98
    %266 = vmatprep.subr.mxu0 %v103
    %267 = vmatpush1.msra.mxu0 %v102
    %268 = vmatprep.subr.mxu0 0.0
    %269 = vmatpush1.msra.mxu0 0.0
    %270 = vmatprep.subr.mxu0 0.0
    %271 = vmatpush1.msra.mxu0 0.0
    %272 = vmatprep.subr.mxu0 0.0
    %273 = vmatpush1.msra.mxu0 0.0
    %274 = vmatprep.subr.mxu0 0.0
    %275 = vmatpush1.msra.mxu0 0.0
    %276 = vmatprep.subr.mxu0 0.0
    %277 = vmatpush1.msra.mxu0 0.0
    %278 = vmatprep.subr.mxu0 0.0
    %279 = vmatpush1.msra.mxu0 0.0
    %280 = vmatprep.subr.mxu0 0.0
    %281 = vmatpush1.msra.mxu0 0.0
    %282 = vmatprep.subr.mxu0 0.0
    %283 = vmatpush1.msra.mxu0 0.0
    %284 = vmatprep.subr.mxu0 0.0
    %285 = vmatpush1.msra.mxu0 0.0
    %286 = vmatprep.subr.mxu0 0.0
    %287 = vmatpush1.msra.mxu0 0.0
    %288 = vmatprep.subr.mxu0 0.0
    %289 = vmatpush1.msra.mxu0 0.0
    %290 = vmatprep.subr.mxu0 0.0
    %291 = vmatpush1.msra.mxu0 0.0
    %292 = vmatprep.subr.mxu0 0.0
    %293 = vmatpush1.msra.mxu0 0.0
    %294 = vmatprep.subr.mxu0 0.0
    %295 = vmatpush1.msra.mxu0 0.0
    %296 = vmatprep.subr.mxu0 0.0
    %297 = vmatpush1.msra.mxu0 0.0
    %298 = vmatprep.subr.mxu0 0.0
    %299 = vmatpush1.msra.mxu0 0.0
    %300 = vmatprep.subr.mxu0 0.0
    %301 = vmatpush1.msra.mxu0 0.0
    %302 = vmatprep.subr.mxu0 0.0
    %303 = vmatpush1.msra.mxu0 0.0
    %304 = vmatprep.subr.mxu0 0.0
    %305 = vmatpush1.msra.mxu0 0.0
    %306 = vmatprep.subr.mxu0 0.0
    %307 = vmatpush1.msra.mxu0 0.0
    %308 = vmatprep.subr.mxu0 0.0
    %309 = vmatpush1.msra.mxu0 0.0
    %310 = vmatprep.subr.mxu0 0.0
    %311 = vmatpush1.msra.mxu0 0.0
    %312 = vmatprep.subr.mxu0 0.0
    %313 = vmatpush1.msra.mxu0 0.0
    %314 = vmatprep.subr.mxu0 0.0
    %315 = vmatpush1.msra.mxu0 0.0
    %316 = vmatprep.subr.mxu0 0.0
    %317 = vmatpush1.msra.mxu0 0.0
    %318 = vmatprep.subr.mxu0 0.0
    %319 = vmatpush1.msra.mxu0 0.0
    %320 = vmatprep.subr.mxu0 0.0
    %321 = vmatpush1.msra.mxu0 0.0
    %322 = vmatprep.subr.mxu0 0.0
    %323 = vmatpush1.msra.mxu0 0.0
    %324 = vmatprep.subr.mxu0 0.0
    %325 = vmatpush1.msra.mxu0 0.0
    %326 = vmatprep.subr.mxu0 0.0
    %327 = vmatpush1.msra.mxu0 0.0
    %328 = vmatprep.mubr.f32.mxu0 0.0
    %329 = vmatmul.mubr.f32.gmra.mrb[0].mxu0 %v128
    %v330 = vpop.f32.mrb[0].mxu0
    %v331 = vadd.f32 %v117, %v330
    %v332 = vpop.f32.mrb[0].mxu0
    %v333 = vadd.f32 %v121, %v332
    %334 = vmatprep.mubr.f32.mxu0 0.0
    %335 = vmatmul.mubr.f32.gmra.mrb[0].mxu0 %v131
    %v336 = vpop.f32.mrb[0].mxu0
    %v337 = vadd.f32 %v117, %v336
    %v338 = vpop.f32.mrb[0].mxu0
    %v339 = vadd.f32 %v121, %v338
    %340 = vmatprep.mubr.f32.mxu0 0.0
    %341 = vmatmul.mubr.f32.gmra.mrb[0].mxu0 %v134
    %v342 = vpop.f32.mrb[0].mxu0
    %v343 = vadd.f32 %v117, %v342
    %v344 = vpop.f32.mrb[0].mxu0
    %v345 = vadd.f32 %v121, %v344
    %346 = vmatprep.mubr.f32.mxu0 0.0
    %347 = vmatmul.mubr.f32.gmra.mrb[0].mxu0 %v137
    %v348 = vpop.f32.mrb[0].mxu0
    %v349 = vadd.f32 %v117, %v348
    %v350 = vpop.f32.mrb[0].mxu0
    %v351 = vadd.f32 %v121, %v350
    %352 = vmatprep.mubr.f32.mxu0 0.0
    %353 = vmatmul.mubr.f32.gmra.mrb[0].mxu0 %v140
    %v354 = vpop.f32.mrb[0].mxu0
    %v355 = vadd.f32 %v117, %v354
    %v356 = vpop.f32.mrb[0].mxu0
    %v357 = vadd.f32 %v121, %v356
    %358 = vmatprep.mubr.f32.mxu0 0.0
    %359 = vmatmul.mubr.f32.gmra.mrb[0].mxu0 %v143
    %v360 = vpop.f32.mrb[0].mxu0
    %v361 = vadd.f32 %v117, %v360
    %v362 = vpop.f32.mrb[0].mxu0
    %v363 = vadd.f32 %v121, %v362
    %364 = vmatprep.mubr.f32.mxu0 0.0
    %365 = vmatmul.mubr.f32.gmra.mrb[0].mxu0 %v146
    %v366 = vpop.f32.mrb[0].mxu0
    %v367 = vadd.f32 %v117, %v366
    %v368 = vpop.f32.mrb[0].mxu0
    %v369 = vadd.f32 %v121, %v368
    %370 = vmatprep.mubr.f32.mxu0 0.0
    %371 = vmatmul.mubr.f32.gmra.mrb[0].mxu0 %v149
    %v372 = vpop.f32.mrb[0].mxu0
    %v373 = vadd.f32 %v117, %v372
    %v374 = vpop.f32.mrb[0].mxu0
    %v375 = vadd.f32 %v121, %v374
    %376 = vdwg.mxu0
    %377 = vst [vmem:[#allocation2] sm:$0xff] %v218
    %378 = vst [vmem:[#allocation2 + $0x8] sm:$0xff] %v220
    %379 = vst [vmem:[#allocation2 + $0x10] sm:$0xff] %v331
    %380 = vst [vmem:[#allocation2 + $0x18] sm:$0xff] %v333
    %381 = vst [vmem:[#allocation2 + $0x20] sm:$0xff] %v224
    %382 = vst [vmem:[#allocation2 + $0x28] sm:$0xff] %v226
    %383 = vst [vmem:[#allocation2 + $0x30] sm:$0xff] %v337
    %384 = vst [vmem:[#allocation2 + $0x38] sm:$0xff] %v339
    %385 = vst [vmem:[#allocation2 + $0x40] sm:$0xff] %v230
    %386 = vst [vmem:[#allocation2 + $0x48] sm:$0xff] %v232
    %387 = vst [vmem:[#allocation2 + $0x50] sm:$0xff] %v343
    %388 = vst [vmem:[#allocation2 + $0x58] sm:$0xff] %v345
    %389 = vst [vmem:[#allocation2 + $0x60] sm:$0xff] %v236
    %390 = vst [vmem:[#allocation2 + $0x68] sm:$0xff] %v238
    %391 = vst [vmem:[#allocation2 + $0x70] sm:$0xff] %v349
    %392 = vst [vmem:[#allocation2 + $0x78] sm:$0xff] %v351
    %393 = vst [vmem:[#allocation2 + $0x80] sm:$0xff] %v242
    %394 = vst [vmem:[#allocation2 + $0x88] sm:$0xff] %v244
    %395 = vst [vmem:[#allocation2 + $0x90] sm:$0xff] %v355
    %396 = vst [vmem:[#allocation2 + $0x98] sm:$0xff] %v357
    %397 = vst [vmem:[#allocation2 + $0xa0] sm:$0xff] %v248
    %398 = vst [vmem:[#allocation2 + $0xa8] sm:$0xff] %v250
    %399 = vst [vmem:[#allocation2 + $0xb0] sm:$0xff] %v361
    %400 = vst [vmem:[#allocation2 + $0xb8] sm:$0xff] %v363
    %401 = vst [vmem:[#allocation2 + $0xc0] sm:$0xff] %v254
    %402 = vst [vmem:[#allocation2 + $0xc8] sm:$0xff] %v256
    %403 = vst [vmem:[#allocation2 + $0xd0] sm:$0xff] %v367
    %404 = vst [vmem:[#allocation2 + $0xd8] sm:$0xff] %v369
    %405 = vst [vmem:[#allocation2 + $0xe0] sm:$0xff] %v260
    %406 = vst [vmem:[#allocation2 + $0xe8] sm:$0xff] %v262
    %407 = vst [vmem:[#allocation2 + $0xf0] sm:$0xff] %v373
    %408 = vst [vmem:[#allocation2 + $0xf8] sm:$0xff] %v375
    %v409 = vld [vmem:[#allocation2] sm:$0xff]
    %v410 = vld [vmem:[#allocation2 + $0x8] sm:$0xff]
    %v411 = vld [vmem:[#allocation2 + $0x10] sm:$0xff]
    %v412 = vld [vmem:[#allocation2 + $0x18] sm:$0xff]
    %v413 = vld [vmem:[#allocation4] sm:$0xff]
    %v414 = vld [vmem:[#allocation4 + $0x8] sm:$0xff]
    %v415 = vld [vmem:[#allocation4 + $0x10] sm:$0xff]
    %v416 = vld [vmem:[#allocation4 + $0x18] sm:$0xff]
    %v417 = vld [vmem:[#allocation4 + $0x20] sm:$0xff]
    %v418 = vld [vmem:[#allocation4 + $0x28] sm:$0xff]
    %v419 = vld [vmem:[#allocation4 + $0x30] sm:$0xff]
    %v420 = vld [vmem:[#allocation4 + $0x38] sm:$0xff]
    %v421 = vld [vmem:[#allocation4 + $0x40] sm:$0xff]
    %v422 = vld [vmem:[#allocation4 + $0x48] sm:$0xff]
    %v423 = vld [vmem:[#allocation4 + $0x50] sm:$0xff]
    %v424 = vld [vmem:[#allocation4 + $0x58] sm:$0xff]
    %v425 = vld [vmem:[#allocation4 + $0x60] sm:$0xff]
    %v426 = vld [vmem:[#allocation4 + $0x68] sm:$0xff]
    %v427 = vld [vmem:[#allocation4 + $0x70] sm:$0xff]
    %v428 = vld [vmem:[#allocation4 + $0x78] sm:$0xff]
    %v429 = vld [vmem:[#allocation4 + $0x80] sm:$0xff]
    %v430 = vld [vmem:[#allocation4 + $0x88] sm:$0xff]
    %v431 = vld [vmem:[#allocation4 + $0x90] sm:$0xff]
    %v432 = vld [vmem:[#allocation4 + $0x98] sm:$0xff]
    %v433 = vld [vmem:[#allocation4 + $0xa0] sm:$0xff]
    %v434 = vld [vmem:[#allocation4 + $0xa8] sm:$0xff]
    %v435 = vld [vmem:[#allocation4 + $0xb0] sm:$0xff]
    %v436 = vld [vmem:[#allocation4 + $0xb8] sm:$0xff]
    %v437 = vld [vmem:[#allocation4 + $0xc0] sm:$0xff]
    %v438 = vld [vmem:[#allocation4 + $0xc8] sm:$0xff]
    %v439 = vld [vmem:[#allocation4 + $0xd0] sm:$0xff]
    %v440 = vld [vmem:[#allocation4 + $0xd8] sm:$0xff]
    %v441 = vld [vmem:[#allocation4 + $0xe0] sm:$0xff]
    %v442 = vld [vmem:[#allocation4 + $0xe8] sm:$0xff]
    %v443 = vld [vmem:[#allocation4 + $0xf0] sm:$0xff]
    %v444 = vld [vmem:[#allocation4 + $0xf8] sm:$0xff]
    %v445 = vld [vmem:[#allocation4 + $0x100] sm:$0xff]
    %v446 = vld [vmem:[#allocation4 + $0x108] sm:$0xff]
    %v447 = vld [vmem:[#allocation4 + $0x110] sm:$0xff]
    %v448 = vld [vmem:[#allocation4 + $0x118] sm:$0xff]
    %v449 = vld [vmem:[#allocation4 + $0x120] sm:$0xff]
    %v450 = vld [vmem:[#allocation4 + $0x128] sm:$0xff]
    %v451 = vld [vmem:[#allocation4 + $0x130] sm:$0xff]
    %v452 = vld [vmem:[#allocation4 + $0x138] sm:$0xff]
    %v453 = vld [vmem:[#allocation4 + $0x140] sm:$0xff]
    %v454 = vld [vmem:[#allocation4 + $0x148] sm:$0xff]
    %v455 = vld [vmem:[#allocation4 + $0x150] sm:$0xff]
    %v456 = vld [vmem:[#allocation4 + $0x158] sm:$0xff]
    %v457 = vld [vmem:[#allocation4 + $0x160] sm:$0xff]
    %v458 = vld [vmem:[#allocation4 + $0x168] sm:$0xff]
    %v459 = vld [vmem:[#allocation4 + $0x170] sm:$0xff]
    %v460 = vld [vmem:[#allocation4 + $0x178] sm:$0xff]
    %v461 = vld [vmem:[#allocation4 + $0x180] sm:$0xff]
    %v462 = vld [vmem:[#allocation4 + $0x188] sm:$0xff]
    %v463 = vld [vmem:[#allocation4 + $0x190] sm:$0xff]
    %v464 = vld [vmem:[#allocation4 + $0x198] sm:$0xff]
    %v465 = vld [vmem:[#allocation4 + $0x1a0] sm:$0xff]
    %v466 = vld [vmem:[#allocation4 + $0x1a8] sm:$0xff]
    %v467 = vld [vmem:[#allocation4 + $0x1b0] sm:$0xff]
    %v468 = vld [vmem:[#allocation4 + $0x1b8] sm:$0xff]
    %v469 = vld [vmem:[#allocation4 + $0x1c0] sm:$0xff]
    %v470 = vld [vmem:[#allocation4 + $0x1c8] sm:$0xff]
    %v471 = vld [vmem:[#allocation4 + $0x1d0] sm:$0xff]
    %v472 = vld [vmem:[#allocation4 + $0x1d8] sm:$0xff]
    %v473 = vld [vmem:[#allocation4 + $0x1e0] sm:$0xff]
    %v474 = vld [vmem:[#allocation4 + $0x1e8] sm:$0xff]
    %v475 = vld [vmem:[#allocation4 + $0x1f0] sm:$0xff]
    %v476 = vld [vmem:[#allocation4 + $0x1f8] sm:$0xff]
    %477 = vmatprep.subr.mxu0 %v414
    %478 = vmatpush1.msra.mxu0 %v413
    %479 = vmatprep.subr.mxu0 %v418
    %480 = vmatpush1.msra.mxu0 %v417
    %481 = vmatprep.subr.mxu0 %v422
    %482 = vmatpush1.msra.mxu0 %v421
    %483 = vmatprep.subr.mxu0 %v426
    %484 = vmatpush1.msra.mxu0 %v425
    %485 = vmatprep.subr.mxu0 %v430
    %486 = vmatpush1.msra.mxu0 %v429
    %487 = vmatprep.subr.mxu0 %v434
    %488 = vmatpush1.msra.mxu0 %v433
    %489 = vmatprep.subr.mxu0 %v438
    %490 = vmatpush1.msra.mxu0 %v437
    %491 = vmatprep.subr.mxu0 %v442
    %492 = vmatpush1.msra.mxu0 %v441
    %493 = vmatprep.subr.mxu0 %v446
    %494 = vmatpush1.msra.mxu0 %v445
    %495 = vmatprep.subr.mxu0 %v450
    %496 = vmatpush1.msra.mxu0 %v449
    %497 = vmatprep.subr.mxu0 %v454
    %498 = vmatpush1.msra.mxu0 %v453
    %499 = vmatprep.subr.mxu0 %v458
    %500 = vmatpush1.msra.mxu0 %v457
    %501 = vmatprep.subr.mxu0 %v462
    %502 = vmatpush1.msra.mxu0 %v461
    %503 = vmatprep.subr.mxu0 %v466
    %504 = vmatpush1.msra.mxu0 %v465
    %505 = vmatprep.subr.mxu0 %v470
    %506 = vmatpush1.msra.mxu0 %v469
    %507 = vmatprep.subr.mxu0 %v474
    %508 = vmatpush1.msra.mxu0 %v473
    %509 = vmatprep.subr.mxu0 0.0
    %510 = vmatpush1.msra.mxu0 0.0
    %511 = vmatprep.subr.mxu0 0.0
    %512 = vmatpush1.msra.mxu0 0.0
    %513 = vmatprep.subr.mxu0 0.0
    %514 = vmatpush1.msra.mxu0 0.0
    %515 = vmatprep.subr.mxu0 0.0
    %516 = vmatpush1.msra.mxu0 0.0
    %517 = vmatprep.subr.mxu0 0.0
    %518 = vmatpush1.msra.mxu0 0.0
    %519 = vmatprep.subr.mxu0 0.0
    %520 = vmatpush1.msra.mxu0 0.0
    %521 = vmatprep.subr.mxu0 0.0
    %522 = vmatpush1.msra.mxu0 0.0
    %523 = vmatprep.subr.mxu0 0.0
    %524 = vmatpush1.msra.mxu0 0.0
    %525 = vmatprep.subr.mxu0 0.0
    %526 = vmatpush1.msra.mxu0 0.0
    %527 = vmatprep.subr.mxu0 0.0
    %528 = vmatpush1.msra.mxu0 0.0
    %529 = vmatprep.subr.mxu0 0.0
    %530 = vmatpush1.msra.mxu0 0.0
    %531 = vmatprep.subr.mxu0 0.0
    %532 = vmatpush1.msra.mxu0 0.0
    %533 = vmatprep.subr.mxu0 0.0
    %534 = vmatpush1.msra.mxu0 0.0
    %535 = vmatprep.subr.mxu0 0.0
    %536 = vmatpush1.msra.mxu0 0.0
    %537 = vmatprep.subr.mxu0 0.0
    %538 = vmatpush1.msra.mxu0 0.0
    %539 = vmatprep.subr.mxu0 0.0
    %540 = vmatpush1.msra.mxu0 0.0
    %541 = vmatprep.mubr.f32.mxu0 0.0
    %542 = vmatmul.mubr.f32.gmra.mrb[0].mxu0 0.0
    %v543 = vpop.f32.mrb[0].mxu0
    %v544 = vadd.f32 0.0, %v543
    %v545 = vpop.f32.mrb[0].mxu0
    %v546 = vadd.f32 0.0, %v545
    %547 = vdwg.mxu0
    %548 = vmatprep.subr.mxu0 %v416
    %549 = vmatpush1.msra.mxu0 %v415
    %550 = vmatprep.subr.mxu0 %v420
    %551 = vmatpush1.msra.mxu0 %v419
    %552 = vmatprep.subr.mxu0 %v424
    %553 = vmatpush1.msra.mxu0 %v423
    %554 = vmatprep.subr.mxu0 %v428
    %555 = vmatpush1.msra.mxu0 %v427
    %556 = vmatprep.subr.mxu0 %v432
    %557 = vmatpush1.msra.mxu0 %v431
    %558 = vmatprep.subr.mxu0 %v436
    %559 = vmatpush1.msra.mxu0 %v435
    %560 = vmatprep.subr.mxu0 %v440
    %561 = vmatpush1.msra.mxu0 %v439
    %562 = vmatprep.subr.mxu0 %v444
    %563 = vmatpush1.msra.mxu0 %v443
    %564 = vmatprep.subr.mxu0 %v448
    %565 = vmatpush1.msra.mxu0 %v447
    %566 = vmatprep.subr.mxu0 %v452
    %567 = vmatpush1.msra.mxu0 %v451
    %568 = vmatprep.subr.mxu0 %v456
    %569 = vmatpush1.msra.mxu0 %v455
    %570 = vmatprep.subr.mxu0 %v460
    %571 = vmatpush1.msra.mxu0 %v459
    %572 = vmatprep.subr.mxu0 %v464
    %573 = vmatpush1.msra.mxu0 %v463
    %574 = vmatprep.subr.mxu0 %v468
    %575 = vmatpush1.msra.mxu0 %v467
    %576 = vmatprep.subr.mxu0 %v472
    %577 = vmatpush1.msra.mxu0 %v471
    %578 = vmatprep.subr.mxu0 %v476
    %579 = vmatpush1.msra.mxu0 %v475
    %580 = vmatprep.subr.mxu0 0.0
    %581 = vmatpush1.msra.mxu0 0.0
    %582 = vmatprep.subr.mxu0 0.0
    %583 = vmatpush1.msra.mxu0 0.0
    %584 = vmatprep.subr.mxu0 0.0
    %585 = vmatpush1.msra.mxu0 0.0
    %586 = vmatprep.subr.mxu0 0.0
    %587 = vmatpush1.msra.mxu0 0.0
    %588 = vmatprep.subr.mxu0 0.0
    %589 = vmatpush1.msra.mxu0 0.0
    %590 = vmatprep.subr.mxu0 0.0
    %591 = vmatpush1.msra.mxu0 0.0
    %592 = vmatprep.subr.mxu0 0.0
    %593 = vmatpush1.msra.mxu0 0.0
    %594 = vmatprep.subr.mxu0 0.0
    %595 = vmatpush1.msra.mxu0 0.0
    %596 = vmatprep.subr.mxu0 0.0
    %597 = vmatpush1.msra.mxu0 0.0
    %598 = vmatprep.subr.mxu0 0.0
    %599 = vmatpush1.msra.mxu0 0.0
    %600 = vmatprep.subr.mxu0 0.0
    %601 = vmatpush1.msra.mxu0 0.0
    %602 = vmatprep.subr.mxu0 0.0
    %603 = vmatpush1.msra.mxu0 0.0
    %604 = vmatprep.subr.mxu0 0.0
    %605 = vmatpush1.msra.mxu0 0.0
    %606 = vmatprep.subr.mxu0 0.0
    %607 = vmatpush1.msra.mxu0 0.0
    %608 = vmatprep.subr.mxu0 0.0
    %609 = vmatpush1.msra.mxu0 0.0
    %610 = vmatprep.subr.mxu0 0.0
    %611 = vmatpush1.msra.mxu0 0.0
    %612 = vmatprep.mubr.f32.mxu0 0.0
    %613 = vmatmul.mubr.f32.gmra.mrb[0].mxu0 0.0
    %v614 = vpop.f32.mrb[0].mxu0
    %v615 = vadd.f32 0.0, %v614
    %v616 = vpop.f32.mrb[0].mxu0
    %v617 = vadd.f32 0.0, %v616
    %618 = vdwg.mxu0
    %v619 = vadd.f32 %v409, %v544
    %v620 = vadd.f32 %v410, %v546
    %v621 = vadd.f32 %v411, %v615
    %v622 = vadd.f32 %v412, %v617
    %v623 = vxor.u32 %v619, 2147483648
    %v624 = vxor.u32 %v620, 2147483648
    %v625 = vxor.u32 %v621, 2147483648
    %v626 = vxor.u32 %v622, 2147483648
    %v627 = vmul.f32 %v623, 1.442695
    %v628 = vpow.pop %v627
    %v629 = vmul.f32 %v624, 1.442695
    %v630 = vpow.pop %v629
    %v631 = vmul.f32 %v625, 1.442695
    %v632 = vpow.pop %v631
    %v633 = vmul.f32 %v626, 1.442695
    %v634 = vpow.pop %v633
    %v635 = vadd.f32 %v628, 1.0
    %v636 = vadd.f32 %v630, 1.0
    %v637 = vadd.f32 %v632, 1.0
    %v638 = vadd.f32 %v634, 1.0
    %v639 = vrcp.pop %v635
    %v640 = vmul.f32 1.0, %v639
    %v641 = vrcp.pop %v636
    %v642 = vmul.f32 1.0, %v641
    %v643 = vrcp.pop %v637
    %v644 = vmul.f32 1.0, %v643
    %v645 = vrcp.pop %v638
    %v646 = vmul.f32 1.0, %v645
    %v647 = vmul.f32 %v644, 2.0
    %v648 = vsub.f32 %v647, 1.0
    %v649 = vmul.f32 %v642, 0.0
    %v650 = vmul.f32 %v640, %v648
    %v651 = vadd.f32 %v649, %v650
    %v652 = vtanh.pop %v651
    %v653 = vmul.f32 %v646, %v652
    %654 = vst [vmem:[#allocation3] sm:$0xff] %v653
    %v655 = vld [vmem:[#allocation2 + $0x20] sm:$0xff]
    %v656 = vld [vmem:[#allocation2 + $0x28] sm:$0xff]
    %v657 = vld [vmem:[#allocation2 + $0x30] sm:$0xff]
    %v658 = vld [vmem:[#allocation2 + $0x38] sm:$0xff]
    %v659 = vld [vmem:[#allocation4] sm:$0xff]
    %v660 = vld [vmem:[#allocation4 + $0x8] sm:$0xff]
    %v661 = vld [vmem:[#allocation4 + $0x10] sm:$0xff]
    %v662 = vld [vmem:[#allocation4 + $0x18] sm:$0xff]
    %v663 = vld [vmem:[#allocation4 + $0x20] sm:$0xff]
    %v664 = vld [vmem:[#allocation4 + $0x28] sm:$0xff]
    %v665 = vld [vmem:[#allocation4 + $0x30] sm:$0xff]
    %v666 = vld [vmem:[#allocation4 + $0x38] sm:$0xff]
    %v667 = vld [vmem:[#allocation4 + $0x40] sm:$0xff]
    %v668 = vld [vmem:[#allocation4 + $0x48] sm:$0xff]
    %v669 = vld [vmem:[#allocation4 + $0x50] sm:$0xff]
    %v670 = vld [vmem:[#allocation4 + $0x58] sm:$0xff]
    %v671 = vld [vmem:[#allocation4 + $0x60] sm:$0xff]
    %v672 = vld [vmem:[#allocation4 + $0x68] sm:$0xff]
    %v673 = vld [vmem:[#allocation4 + $0x70] sm:$0xff]
    %v674 = vld [vmem:[#allocation4 + $0x78] sm:$0xff]
    %v675 = vld [vmem:[#allocation4 + $0x80] sm:$0xff]
    %v676 = vld [vmem:[#allocation4 + $0x88] sm:$0xff]
    %v677 = vld [vmem:[#allocation4 + $0x90] sm:$0xff]
    %v678 = vld [vmem:[#allocation4 + $0x98] sm:$0xff]
    %v679 = vld [vmem:[#allocation4 + $0xa0] sm:$0xff]
    %v680 = vld [vmem:[#allocation4 + $0xa8] sm:$0xff]
    %v681 = vld [vmem:[#allocation4 + $0xb0] sm:$0xff]
    %v682 = vld [vmem:[#allocation4 + $0xb8] sm:$0xff]
    %v683 = vld [vmem:[#allocation4 + $0xc0] sm:$0xff]
    %v684 = vld [vmem:[#allocation4 + $0xc8] sm:$0xff]
    %v685 = vld [vmem:[#allocation4 + $0xd0] sm:$0xff]
    %v686 = vld [vmem:[#allocation4 + $0xd8] sm:$0xff]
    %v687 = vld [vmem:[#allocation4 + $0xe0] sm:$0xff]
    %v688 = vld [vmem:[#allocation4 + $0xe8] sm:$0xff]
    %v689 = vld [vmem:[#allocation4 + $0xf0] sm:$0xff]
    %v690 = vld [vmem:[#allocation4 + $0xf8] sm:$0xff]
    %v691 = vld [vmem:[#allocation4 + $0x100] sm:$0xff]
    %v692 = vld [vmem:[#allocation4 + $0x108] sm:$0xff]
    %v693 = vld [vmem:[#allocation4 + $0x110] sm:$0xff]
    %v694 = vld [vmem:[#allocation4 + $0x118] sm:$0xff]
    %v695 = vld [vmem:[#allocation4 + $0x120] sm:$0xff]
    %v696 = vld [vmem:[#allocation4 + $0x128] sm:$0xff]
    %v697 = vld [vmem:[#allocation4 + $0x130] sm:$0xff]
    %v698 = vld [vmem:[#allocation4 + $0x138] sm:$0xff]
    %v699 = vld [vmem:[#allocation4 + $0x140] sm:$0xff]
    %v700 = vld [vmem:[#allocation4 + $0x148] sm:$0xff]
    %v701 = vld [vmem:[#allocation4 + $0x150] sm:$0xff]
    %v702 = vld [vmem:[#allocation4 + $0x158] sm:$0xff]
    %v703 = vld [vmem:[#allocation4 + $0x160] sm:$0xff]
    %v704 = vld [vmem:[#allocation4 + $0x168] sm:$0xff]
    %v705 = vld [vmem:[#allocation4 + $0x170] sm:$0xff]
    %v706 = vld [vmem:[#allocation4 + $0x178] sm:$0xff]
    %v707 = vld [vmem:[#allocation4 + $0x180] sm:$0xff]
    %v708 = vld [vmem:[#allocation4 + $0x188] sm:$0xff]
    %v709 = vld [vmem:[#allocation4 + $0x190] sm:$0xff]
    %v710 = vld [vmem:[#allocation4 + $0x198] sm:$0xff]
    %v711 = vld [vmem:[#allocation4 + $0x1a0] sm:$0xff]
    %v712 = vld [vmem:[#allocation4 + $0x1a8] sm:$0xff]
    %v713 = vld [vmem:[#allocation4 + $0x1b0] sm:$0xff]
    %v714 = vld [vmem:[#allocation4 + $0x1b8] sm:$0xff]
    %v715 = vld [vmem:[#allocation4 + $0x1c0] sm:$0xff]
    %v716 = vld [vmem:[#allocation4 + $0x1c8] sm:$0xff]
    %v717 = vld [vmem:[#allocation4 + $0x1d0] sm:$0xff]
    %v718 = vld [vmem:[#allocation4 + $0x1d8] sm:$0xff]
    %v719 = vld [vmem:[#allocation4 + $0x1e0] sm:$0xff]
    %v720 = vld [vmem:[#allocation4 + $0x1e8] sm:$0xff]
    %v721 = vld [vmem:[#allocation4 + $0x1f0] sm:$0xff]
    %v722 = vld [vmem:[#allocation4 + $0x1f8] sm:$0xff]
    %723 = vmatprep.subr.mxu0 %v660
    %724 = vmatpush1.msra.mxu0 %v659
    %725 = vmatprep.subr.mxu0 %v664
    %726 = vmatpush1.msra.mxu0 %v663
    %727 = vmatprep.subr.mxu0 %v668
    %728 = vmatpush1.msra.mxu0 %v667
    %729 = vmatprep.subr.mxu0 %v672
    %730 = vmatpush1.msra.mxu0 %v671
    %731 = vmatprep.subr.mxu0 %v676
    %732 = vmatpush1.msra.mxu0 %v675
    %733 = vmatprep.subr.mxu0 %v680
    %734 = vmatpush1.msra.mxu0 %v679
    %735 = vmatprep.subr.mxu0 %v684
    %736 = vmatpush1.msra.mxu0 %v683
    %737 = vmatprep.subr.mxu0 %v688
    %738 = vmatpush1.msra.mxu0 %v687
    %739 = vmatprep.subr.mxu0 %v692
    %740 = vmatpush1.msra.mxu0 %v691
    %741 = vmatprep.subr.mxu0 %v696
    %742 = vmatpush1.msra.mxu0 %v695
    %743 = vmatprep.subr.mxu0 %v700
    %744 = vmatpush1.msra.mxu0 %v699
    %745 = vmatprep.subr.mxu0 %v704
    %746 = vmatpush1.msra.mxu0 %v703
    %747 = vmatprep.subr.mxu0 %v708
    %748 = vmatpush1.msra.mxu0 %v707
    %749 = vmatprep.subr.mxu0 %v712
    %750 = vmatpush1.msra.mxu0 %v711
    %751 = vmatprep.subr.mxu0 %v716
    %752 = vmatpush1.msra.mxu0 %v715
    %753 = vmatprep.subr.mxu0 %v720
    %754 = vmatpush1.msra.mxu0 %v719
    %755 = vmatprep.subr.mxu0 0.0
    %756 = vmatpush1.msra.mxu0 0.0
    %757 = vmatprep.subr.mxu0 0.0
    %758 = vmatpush1.msra.mxu0 0.0
    %759 = vmatprep.subr.mxu0 0.0
    %760 = vmatpush1.msra.mxu0 0.0
    %761 = vmatprep.subr.mxu0 0.0
    %762 = vmatpush1.msra.mxu0 0.0
    %763 = vmatprep.subr.mxu0 0.0
    %764 = vmatpush1.msra.mxu0 0.0
    %765 = vmatprep.subr.mxu0 0.0
    %766 = vmatpush1.msra.mxu0 0.0
    %767 = vmatprep.subr.mxu0 0.0
    %768 = vmatpush1.msra.mxu0 0.0
    %769 = vmatprep.subr.mxu0 0.0
    %770 = vmatpush1.msra.mxu0 0.0
    %771 = vmatprep.subr.mxu0 0.0
    %772 = vmatpush1.msra.mxu0 0.0
    %773 = vmatprep.subr.mxu0 0.0
    %774 = vmatpush1.msra.mxu0 0.0
    %775 = vmatprep.subr.mxu0 0.0
    %776 = vmatpush1.msra.mxu0 0.0
    %777 = vmatprep.subr.mxu0 0.0
    %778 = vmatpush1.msra.mxu0 0.0
    %779 = vmatprep.subr.mxu0 0.0
    %780 = vmatpush1.msra.mxu0 0.0
    %781 = vmatprep.subr.mxu0 0.0
    %782 = vmatpush1.msra.mxu0 0.0
    %783 = vmatprep.subr.mxu0 0.0
    %784 = vmatpush1.msra.mxu0 0.0
    %785 = vmatprep.subr.mxu0 0.0
    %786 = vmatpush1.msra.mxu0 0.0
    %787 = vmatprep.mubr.f32.mxu0 0.0
    %788 = vmatmul.mubr.f32.gmra.mrb[0].mxu0 %v653
    %v789 = vpop.f32.mrb[0].mxu0
    %v790 = vadd.f32 0.0, %v789
    %v791 = vpop.f32.mrb[0].mxu0
    %v792 = vadd.f32 0.0, %v791
    %793 = vdwg.mxu0
    %794 = vmatprep.subr.mxu0 %v662
    %795 = vmatpush1.msra.mxu0 %v661
    %796 = vmatprep.subr.mxu0 %v666
    %797 = vmatpush1.msra.mxu0 %v665
    %798 = vmatprep.subr.mxu0 %v670
    %799 = vmatpush1.msra.mxu0 %v669
    %800 = vmatprep.subr.mxu0 %v674
    %801 = vmatpush1.msra.mxu0 %v673
    %802 = vmatprep.subr.mxu0 %v678
    %803 = vmatpush1.msra.mxu0 %v677
    %804 = vmatprep.subr.mxu0 %v682
    %805 = vmatpush1.msra.mxu0 %v681
    %806 = vmatprep.subr.mxu0 %v686
    %807 = vmatpush1.msra.mxu0 %v685
    %808 = vmatprep.subr.mxu0 %v690
    %809 = vmatpush1.msra.mxu0 %v689
    %810 = vmatprep.subr.mxu0 %v694
    %811 = vmatpush1.msra.mxu0 %v693
    %812 = vmatprep.subr.mxu0 %v698
    %813 = vmatpush1.msra.mxu0 %v697
    %814 = vmatprep.subr.mxu0 %v702
    %815 = vmatpush1.msra.mxu0 %v701
    %816 = vmatprep.subr.mxu0 %v706
    %817 = vmatpush1.msra.mxu0 %v705
    %818 = vmatprep.subr.mxu0 %v710
    %819 = vmatpush1.msra.mxu0 %v709
    %820 = vmatprep.subr.mxu0 %v714
    %821 = vmatpush1.msra.mxu0 %v713
    %822 = vmatprep.subr.mxu0 %v718
    %823 = vmatpush1.msra.mxu0 %v717
    %824 = vmatprep.subr.mxu0 %v722
    %825 = vmatpush1.msra.mxu0 %v721
    %826 = vmatprep.subr.mxu0 0.0
    %827 = vmatpush1.msra.mxu0 0.0
    %828 = vmatprep.subr.mxu0 0.0
    %829 = vmatpush1.msra.mxu0 0.0
    %830 = vmatprep.subr.mxu0 0.0
    %831 = vmatpush1.msra.mxu0 0.0
    %832 = vmatprep.subr.mxu0 0.0
    %833 = vmatpush1.msra.mxu0 0.0
    %834 = vmatprep.subr.mxu0 0.0
    %835 = vmatpush1.msra.mxu0 0.0
    %836 = vmatprep.subr.mxu0 0.0
    %837 = vmatpush1.msra.mxu0 0.0
    %838 = vmatprep.subr.mxu0 0.0
    %839 = vmatpush1.msra.mxu0 0.0
    %840 = vmatprep.subr.mxu0 0.0
    %841 = vmatpush1.msra.mxu0 0.0
    %842 = vmatprep.subr.mxu0 0.0
    %843 = vmatpush1.msra.mxu0 0.0
    %844 = vmatprep.subr.mxu0 0.0
    %845 = vmatpush1.msra.mxu0 0.0
    %846 = vmatprep.subr.mxu0 0.0
    %847 = vmatpush1.msra.mxu0 0.0
    %848 = vmatprep.subr.mxu0 0.0
    %849 = vmatpush1.msra.mxu0 0.0
    %850 = vmatprep.subr.mxu0 0.0
    %851 = vmatpush1.msra.mxu0 0.0
    %852 = vmatprep.subr.mxu0 0.0
    %853 = vmatpush1.msra.mxu0 0.0
    %854 = vmatprep.subr.mxu0 0.0
    %855 = vmatpush1.msra.mxu0 0.0
    %856 = vmatprep.subr.mxu0 0.0
    %857 = vmatpush1.msra.mxu0 0.0
    %858 = vmatprep.mubr.f32.mxu0 0.0
    %859 = vmatmul.mubr.f32.gmra.mrb[0].mxu0 %v653
    %v860 = vpop.f32.mrb[0].mxu0
    %v861 = vadd.f32 0.0, %v860
    %v862 = vpop.f32.mrb[0].mxu0
    %v863 = vadd.f32 0.0, %v862
    %864 = vdwg.mxu0
    %v865 = vadd.f32 %v655, %v790
    %v866 = vadd.f32 %v656, %v792
    %v867 = vadd.f32 %v657, %v861
    %v868 = vadd.f32 %v658, %v863
    %v869 = vxor.u32 %v865, 2147483648
    %v870 = vxor.u32 %v866, 2147483648
    %v871 = vxor.u32 %v867, 2147483648
    %v872 = vxor.u32 %v868, 2147483648
    %v873 = vmul.f32 %v869, 1.442695
    %v874 = vpow.pop %v873
    %v875 = vmul.f32 %v870, 1.442695
    %v876 = vpow.pop %v875
    %v877 = vmul.f32 %v871, 1.442695
    %v878 = vpow.pop %v877
    %v879 = vmul.f32 %v872, 1.442695
    %v880 = vpow.pop %v879
    %v881 = vadd.f32 %v874, 1.0
    %v882 = vadd.f32 %v876, 1.0
    %v883 = vadd.f32 %v878, 1.0
    %v884 = vadd.f32 %v880, 1.0
    %v885 = vrcp.pop %v881
    %v886 = vmul.f32 1.0, %v885
    %v887 = vrcp.pop %v882
    %v888 = vmul.f32 1.0, %v887
    %v889 = vrcp.pop %v883
    %v890 = vmul.f32 1.0, %v889
    %v891 = vrcp.pop %v884
    %v892 = vmul.f32 1.0, %v891
    %v893 = vmul.f32 %v890, 2.0
    %v894 = vsub.f32 %v893, 1.0
    %v895 = vmul.f32 %v888, %v651
    %v896 = vmul.f32 %v886, %v894
    %v897 = vadd.f32 %v895, %v896
    %v898 = vtanh.pop %v897
    %v899 = vmul.f32 %v892, %v898
    %900 = vst [vmem:[#allocation3 + $0x8] sm:$0xff] %v899
    %v901 = vld [vmem:[#allocation2 + $0x40] sm:$0xff]
    %v902 = vld [vmem:[#allocation2 + $0x48] sm:$0xff]
    %v903 = vld [vmem:[#allocation2 + $0x50] sm:$0xff]
    %v904 = vld [vmem:[#allocation2 + $0x58] sm:$0xff]
    %v905 = vld [vmem:[#allocation4] sm:$0xff]
    %v906 = vld [vmem:[#allocation4 + $0x8] sm:$0xff]
    %v907 = vld [vmem:[#allocation4 + $0x10] sm:$0xff]
    %v908 = vld [vmem:[#allocation4 + $0x18] sm:$0xff]
    %v909 = vld [vmem:[#allocation4 + $0x20] sm:$0xff]
    %v910 = vld [vmem:[#allocation4 + $0x28] sm:$0xff]
    %v911 = vld [vmem:[#allocation4 + $0x30] sm:$0xff]
    %v912 = vld [vmem:[#allocation4 + $0x38] sm:$0xff]
    %v913 = vld [vmem:[#allocation4 + $0x40] sm:$0xff]
    %v914 = vld [vmem:[#allocation4 + $0x48] sm:$0xff]
    %v915 = vld [vmem:[#allocation4 + $0x50] sm:$0xff]
    %v916 = vld [vmem:[#allocation4 + $0x58] sm:$0xff]
    %v917 = vld [vmem:[#allocation4 + $0x60] sm:$0xff]
    %v918 = vld [vmem:[#allocation4 + $0x68] sm:$0xff]
    %v919 = vld [vmem:[#allocation4 + $0x70] sm:$0xff]
    %v920 = vld [vmem:[#allocation4 + $0x78] sm:$0xff]
    %v921 = vld [vmem:[#allocation4 + $0x80] sm:$0xff]
    %v922 = vld [vmem:[#allocation4 + $0x88] sm:$0xff]
    %v923 = vld [vmem:[#allocation4 + $0x90] sm:$0xff]
    %v924 = vld [vmem:[#allocation4 + $0x98] sm:$0xff]
    %v925 = vld [vmem:[#allocation4 + $0xa0] sm:$0xff]
    %v926 = vld [vmem:[#allocation4 + $0xa8] sm:$0xff]
    %v927 = vld [vmem:[#allocation4 + $0xb0] sm:$0xff]
    %v928 = vld [vmem:[#allocation4 + $0xb8] sm:$0xff]
    %v929 = vld [vmem:[#allocation4 + $0xc0] sm:$0xff]
    %v930 = vld [vmem:[#allocation4 + $0xc8] sm:$0xff]
    %v931 = vld [vmem:[#allocation4 + $0xd0] sm:$0xff]
    %v932 = vld [vmem:[#allocation4 + $0xd8] sm:$0xff]
    %v933 = vld [vmem:[#allocation4 + $0xe0] sm:$0xff]
    %v934 = vld [vmem:[#allocation4 + $0xe8] sm:$0xff]
    %v935 = vld [vmem:[#allocation4 + $0xf0] sm:$0xff]
    %v936 = vld [vmem:[#allocation4 + $0xf8] sm:$0xff]
    %v937 = vld [vmem:[#allocation4 + $0x100] sm:$0xff]
    %v938 = vld [vmem:[#allocation4 + $0x108] sm:$0xff]
    %v939 = vld [vmem:[#allocation4 + $0x110] sm:$0xff]
    %v940 = vld [vmem:[#allocation4 + $0x118] sm:$0xff]
    %v941 = vld [vmem:[#allocation4 + $0x120] sm:$0xff]
    %v942 = vld [vmem:[#allocation4 + $0x128] sm:$0xff]
    %v943 = vld [vmem:[#allocation4 + $0x130] sm:$0xff]
    %v944 = vld [vmem:[#allocation4 + $0x138] sm:$0xff]
    %v945 = vld [vmem:[#allocation4 + $0x140] sm:$0xff]
    %v946 = vld [vmem:[#allocation4 + $0x148] sm:$0xff]
    %v947 = vld [vmem:[#allocation4 + $0x150] sm:$0xff]
    %v948 = vld [vmem:[#allocation4 + $0x158] sm:$0xff]
    %v949 = vld [vmem:[#allocation4 + $0x160] sm:$0xff]
    %v950 = vld [vmem:[#allocation4 + $0x168] sm:$0xff]
    %v951 = vld [vmem:[#allocation4 + $0x170] sm:$0xff]
    %v952 = vld [vmem:[#allocation4 + $0x178] sm:$0xff]
    %v953 = vld [vmem:[#allocation4 + $0x180] sm:$0xff]
    %v954 = vld [vmem:[#allocation4 + $0x188] sm:$0xff]
    %v955 = vld [vmem:[#allocation4 + $0x190] sm:$0xff]
    %v956 = vld [vmem:[#allocation4 + $0x198] sm:$0xff]
    %v957 = vld [vmem:[#allocation4 + $0x1a0] sm:$0xff]
    %v958 = vld [vmem:[#allocation4 + $0x1a8] sm:$0xff]
    %v959 = vld [vmem:[#allocation4 + $0x1b0] sm:$0xff]
    %v960 = vld [vmem:[#allocation4 + $0x1b8] sm:$0xff]
    %v961 = vld [vmem:[#allocation4 + $0x1c0] sm:$0xff]
    %v962 = vld [vmem:[#allocation4 + $0x1c8] sm:$0xff]
    %v963 = vld [vmem:[#allocation4 + $0x1d0] sm:$0xff]
    %v964 = vld [vmem:[#allocation4 + $0x1d8] sm:$0xff]
    %v965 = vld [vmem:[#allocation4 + $0x1e0] sm:$0xff]
    %v966 = vld [vmem:[#allocation4 + $0x1e8] sm:$0xff]
    %v967 = vld [vmem:[#allocation4 + $0x1f0] sm:$0xff]
    %v968 = vld [vmem:[#allocation4 + $0x1f8] sm:$0xff]
    %969 = vmatprep.subr.mxu0 %v906
    %970 = vmatpush1.msra.mxu0 %v905
    %971 = vmatprep.subr.mxu0 %v910
    %972 = vmatpush1.msra.mxu0 %v909
    %973 = vmatprep.subr.mxu0 %v914
    %974 = vmatpush1.msra.mxu0 %v913
    %975 = vmatprep.subr.mxu0 %v918
    %976 = vmatpush1.msra.mxu0 %v917
    %977 = vmatprep.subr.mxu0 %v922
    %978 = vmatpush1.msra.mxu0 %v921
    %979 = vmatprep.subr.mxu0 %v926
    %980 = vmatpush1.msra.mxu0 %v925
    %981 = vmatprep.subr.mxu0 %v930
    %982 = vmatpush1.msra.mxu0 %v929
    %983 = vmatprep.subr.mxu0 %v934
    %984 = vmatpush1.msra.mxu0 %v933
    %985 = vmatprep.subr.mxu0 %v938
    %986 = vmatpush1.msra.mxu0 %v937
    %987 = vmatprep.subr.mxu0 %v942
    %988 = vmatpush1.msra.mxu0 %v941
    %989 = vmatprep.subr.mxu0 %v946
    %990 = vmatpush1.msra.mxu0 %v945
    %991 = vmatprep.subr.mxu0 %v950
    %992 = vmatpush1.msra.mxu0 %v949
    %993 = vmatprep.subr.mxu0 %v954
    %994 = vmatpush1.msra.mxu0 %v953
    %995 = vmatprep.subr.mxu0 %v958
    %996 = vmatpush1.msra.mxu0 %v957
    %997 = vmatprep.subr.mxu0 %v962
    %998 = vmatpush1.msra.mxu0 %v961
    %999 = vmatprep.subr.mxu0 %v966
    %1000 = vmatpush1.msra.mxu0 %v965
    %1001 = vmatprep.subr.mxu0 0.0
    %1002 = vmatpush1.msra.mxu0 0.0
    %1003 = vmatprep.subr.mxu0 0.0
    %1004 = vmatpush1.msra.mxu0 0.0
    %1005 = vmatprep.subr.mxu0 0.0
    %1006 = vmatpush1.msra.mxu0 0.0
    %1007 = vmatprep.subr.mxu0 0.0
    %1008 = vmatpush1.msra.mxu0 0.0
    %1009 = vmatprep.subr.mxu0 0.0
    %1010 = vmatpush1.msra.mxu0 0.0
    %1011 = vmatprep.subr.mxu0 0.0
    %1012 = vmatpush1.msra.mxu0 0.0
    %1013 = vmatprep.subr.mxu0 0.0
    %1014 = vmatpush1.msra.mxu0 0.0
    %1015 = vmatprep.subr.mxu0 0.0
    %1016 = vmatpush1.msra.mxu0 0.0
    %1017 = vmatprep.subr.mxu0 0.0
    %1018 = vmatpush1.msra.mxu0 0.0
    %1019 = vmatprep.subr.mxu0 0.0
    %1020 = vmatpush1.msra.mxu0 0.0
    %1021 = vmatprep.subr.mxu0 0.0
    %1022 = vmatpush1.msra.mxu0 0.0
    %1023 = vmatprep.subr.mxu0 0.0
    %1024 = vmatpush1.msra.mxu0 0.0
    %1025 = vmatprep.subr.mxu0 0.0
    %1026 = vmatpush1.msra.mxu0 0.0
    %1027 = vmatprep.subr.mxu0 0.0
    %1028 = vmatpush1.msra.mxu0 0.0
    %1029 = vmatprep.subr.mxu0 0.0
    %1030 = vmatpush1.msra.mxu0 0.0
    %1031 = vmatprep.subr.mxu0 0.0
    %1032 = vmatpush1.msra.mxu0 0.0
    %1033 = vmatprep.mubr.f32.mxu0 0.0
    %1034 = vmatmul.mubr.f32.gmra.mrb[0].mxu0 %v899
    %v1035 = vpop.f32.mrb[0].mxu0
    %v1036 = vadd.f32 0.0, %v1035
    %v1037 = vpop.f32.mrb[0].mxu0
    %v1038 = vadd.f32 0.0, %v1037
    %1039 = vdwg.mxu0
    %1040 = vmatprep.subr.mxu0 %v908
    %1041 = vmatpush1.msra.mxu0 %v907
    %1042 = vmatprep.subr.mxu0 %v912
    %1043 = vmatpush1.msra.mxu0 %v911
    %1044 = vmatprep.subr.mxu0 %v916
    %1045 = vmatpush1.msra.mxu0 %v915
    %1046 = vmatprep.subr.mxu0 %v920
    %1047 = vmatpush1.msra.mxu0 %v919
    %1048 = vmatprep.subr.mxu0 %v924
    %1049 = vmatpush1.msra.mxu0 %v923
    %1050 = vmatprep.subr.mxu0 %v928
    %1051 = vmatpush1.msra.mxu0 %v927
    %1052 = vmatprep.subr.mxu0 %v932
    %1053 = vmatpush1.msra.mxu0 %v931
    %1054 = vmatprep.subr.mxu0 %v936
    %1055 = vmatpush1.msra.mxu0 %v935
    %1056 = vmatprep.subr.mxu0 %v940
    %1057 = vmatpush1.msra.mxu0 %v939
    %1058 = vmatprep.subr.mxu0 %v944
    %1059 = vmatpush1.msra.mxu0 %v943
    %1060 = vmatprep.subr.mxu0 %v948
    %1061 = vmatpush1.msra.mxu0 %v947
    %1062 = vmatprep.subr.mxu0 %v952
    %1063 = vmatpush1.msra.mxu0 %v951
    %1064 = vmatprep.subr.mxu0 %v956
    %1065 = vmatpush1.msra.mxu0 %v955
    %1066 = vmatprep.subr.mxu0 %v960
    %1067 = vmatpush1.msra.mxu0 %v959
    %1068 = vmatprep.subr.mxu0 %v964
    %1069 = vmatpush1.msra.mxu0 %v963
    %1070 = vmatprep.subr.mxu0 %v968
    %1071 = vmatpush1.msra.mxu0 %v967
    %1072 = vmatprep.subr.mxu0 0.0
    %1073 = vmatpush1.msra.mxu0 0.0
    %1074 = vmatprep.subr.mxu0 0.0
    %1075 = vmatpush1.msra.mxu0 0.0
    %1076 = vmatprep.subr.mxu0 0.0
    %1077 = vmatpush1.msra.mxu0 0.0
    %1078 = vmatprep.subr.mxu0 0.0
    %1079 = vmatpush1.msra.mxu0 0.0
    %1080 = vmatprep.subr.mxu0 0.0
    %1081 = vmatpush1.msra.mxu0 0.0
    %1082 = vmatprep.subr.mxu0 0.0
    %1083 = vmatpush1.msra.mxu0 0.0
    %1084 = vmatprep.subr.mxu0 0.0
    %1085 = vmatpush1.msra.mxu0 0.0
    %1086 = vmatprep.subr.mxu0 0.0
    %1087 = vmatpush1.msra.mxu0 0.0
    %1088 = vmatprep.subr.mxu0 0.0
    %1089 = vmatpush1.msra.mxu0 0.0
    %1090 = vmatprep.subr.mxu0 0.0
    %1091 = vmatpush1.msra.mxu0 0.0
    %1092 = vmatprep.subr.mxu0 0.0
    %1093 = vmatpush1.msra.mxu0 0.0
    %1094 = vmatprep.subr.mxu0 0.0
    %1095 = vmatpush1.msra.mxu0 0.0
    %1096 = vmatprep.subr.mxu0 0.0
    %1097 = vmatpush1.msra.mxu0 0.0
    %1098 = vmatprep.subr.mxu0 0.0
    %1099 = vmatpush1.msra.mxu0 0.0
    %1100 = vmatprep.subr.mxu0 0.0
    %1101 = vmatpush1.msra.mxu0 0.0
    %1102 = vmatprep.subr.mxu0 0.0
    %1103 = vmatpush1.msra.mxu0 0.0
    %1104 = vmatprep.mubr.f32.mxu0 0.0
    %1105 = vmatmul.mubr.f32.gmra.mrb[0].mxu0 %v899
    %v1106 = vpop.f32.mrb[0].mxu0
    %v1107 = vadd.f32 0.0, %v1106
    %v1108 = vpop.f32.mrb[0].mxu0
    %v1109 = vadd.f32 0.0, %v1108
    %1110 = vdwg.mxu0
    %v1111 = vadd.f32 %v901, %v1036
    %v1112 = vadd.f32 %v902, %v1038
    %v1113 = vadd.f32 %v903, %v1107
    %v1114 = vadd.f32 %v904, %v1109
    %v1115 = vxor.u32 %v1111, 2147483648
    %v1116 = vxor.u32 %v1112, 2147483648
    %v1117 = vxor.u32 %v1113, 2147483648
    %v1118 = vxor.u32 %v1114, 2147483648
    %v1119 = vmul.f32 %v1115, 1.442695
    %v1120 = vpow.pop %v1119
    %v1121 = vmul.f32 %v1116, 1.442695
    %v1122 = vpow.pop %v1121
    %v1123 = vmul.f32 %v1117, 1.442695
    %v1124 = vpow.pop %v1123
    %v1125 = vmul.f32 %v1118, 1.442695
    %v1126 = vpow.pop %v1125
    %v1127 = vadd.f32 %v1120, 1.0
    %v1128 = vadd.f32 %v1122, 1.0
    %v1129 = vadd.f32 %v1124, 1.0
    %v1130 = vadd.f32 %v1126, 1.0
    %v1131 = vrcp.pop %v1127
    %v1132 = vmul.f32 1.0, %v1131
    %v1133 = vrcp.pop %v1128
    %v1134 = vmul.f32 1.0, %v1133
    %v1135 = vrcp.pop %v1129
    %v1136 = vmul.f32 1.0, %v1135
    %v1137 = vrcp.pop %v1130
    %v1138 = vmul.f32 1.0, %v1137
    %v1139 = vmul.f32 %v1136, 2.0
    %v1140 = vsub.f32 %v1139, 1.0
    %v1141 = vmul.f32 %v1134, %v897
    %v1142 = vmul.f32 %v1132, %v1140
    %v1143 = vadd.f32 %v1141, %v1142
    %v1144 = vtanh.pop %v1143
    %v1145 = vmul.f32 %v1138, %v1144
    %1146 = vst [vmem:[#allocation3 + $0x10] sm:$0xff] %v1145
    %v1147 = vld [vmem:[#allocation2 + $0x60] sm:$0xff]
    %v1148 = vld [vmem:[#allocation2 + $0x68] sm:$0xff]
    %v1149 = vld [vmem:[#allocation2 + $0x70] sm:$0xff]
    %v1150 = vld [vmem:[#allocation2 + $0x78] sm:$0xff]
    %v1151 = vld [vmem:[#allocation4] sm:$0xff]
    %v1152 = vld [vmem:[#allocation4 + $0x8] sm:$0xff]
    %v1153 = vld [vmem:[#allocation4 + $0x10] sm:$0xff]
    %v1154 = vld [vmem:[#allocation4 + $0x18] sm:$0xff]
    %v1155 = vld [vmem:[#allocation4 + $0x20] sm:$0xff]
    %v1156 = vld [vmem:[#allocation4 + $0x28] sm:$0xff]
    %v1157 = vld [vmem:[#allocation4 + $0x30] sm:$0xff]
    %v1158 = vld [vmem:[#allocation4 + $0x38] sm:$0xff]
    %v1159 = vld [vmem:[#allocation4 + $0x40] sm:$0xff]
    %v1160 = vld [vmem:[#allocation4 + $0x48] sm:$0xff]
    %v1161 = vld [vmem:[#allocation4 + $0x50] sm:$0xff]
    %v1162 = vld [vmem:[#allocation4 + $0x58] sm:$0xff]
    %v1163 = vld [vmem:[#allocation4 + $0x60] sm:$0xff]
    %v1164 = vld [vmem:[#allocation4 + $0x68] sm:$0xff]
    %v1165 = vld [vmem:[#allocation4 + $0x70] sm:$0xff]
    %v1166 = vld [vmem:[#allocation4 + $0x78] sm:$0xff]
    %v1167 = vld [vmem:[#allocation4 + $0x80] sm:$0xff]
    %v1168 = vld [vmem:[#allocation4 + $0x88] sm:$0xff]
    %v1169 = vld [vmem:[#allocation4 + $0x90] sm:$0xff]
    %v1170 = vld [vmem:[#allocation4 + $0x98] sm:$0xff]
    %v1171 = vld [vmem:[#allocation4 + $0xa0] sm:$0xff]
    %v1172 = vld [vmem:[#allocation4 + $0xa8] sm:$0xff]
    %v1173 = vld [vmem:[#allocation4 + $0xb0] sm:$0xff]
    %v1174 = vld [vmem:[#allocation4 + $0xb8] sm:$0xff]
    %v1175 = vld [vmem:[#allocation4 + $0xc0] sm:$0xff]
    %v1176 = vld [vmem:[#allocation4 + $0xc8] sm:$0xff]
    %v1177 = vld [vmem:[#allocation4 + $0xd0] sm:$0xff]
    %v1178 = vld [vmem:[#allocation4 + $0xd8] sm:$0xff]
    %v1179 = vld [vmem:[#allocation4 + $0xe0] sm:$0xff]
    %v1180 = vld [vmem:[#allocation4 + $0xe8] sm:$0xff]
    %v1181 = vld [vmem:[#allocation4 + $0xf0] sm:$0xff]
    %v1182 = vld [vmem:[#allocation4 + $0xf8] sm:$0xff]
    %v1183 = vld [vmem:[#allocation4 + $0x100] sm:$0xff]
    %v1184 = vld [vmem:[#allocation4 + $0x108] sm:$0xff]
    %v1185 = vld [vmem:[#allocation4 + $0x110] sm:$0xff]
    %v1186 = vld [vmem:[#allocation4 + $0x118] sm:$0xff]
    %v1187 = vld [vmem:[#allocation4 + $0x120] sm:$0xff]
    %v1188 = vld [vmem:[#allocation4 + $0x128] sm:$0xff]
    %v1189 = vld [vmem:[#allocation4 + $0x130] sm:$0xff]
    %v1190 = vld [vmem:[#allocation4 + $0x138] sm:$0xff]
    %v1191 = vld [vmem:[#allocation4 + $0x140] sm:$0xff]
    %v1192 = vld [vmem:[#allocation4 + $0x148] sm:$0xff]
    %v1193 = vld [vmem:[#allocation4 + $0x150] sm:$0xff]
    %v1194 = vld [vmem:[#allocation4 + $0x158] sm:$0xff]
    %v1195 = vld [vmem:[#allocation4 + $0x160] sm:$0xff]
    %v1196 = vld [vmem:[#allocation4 + $0x168] sm:$0xff]
    %v1197 = vld [vmem:[#allocation4 + $0x170] sm:$0xff]
    %v1198 = vld [vmem:[#allocation4 + $0x178] sm:$0xff]
    %v1199 = vld [vmem:[#allocation4 + $0x180] sm:$0xff]
    %v1200 = vld [vmem:[#allocation4 + $0x188] sm:$0xff]
    %v1201 = vld [vmem:[#allocation4 + $0x190] sm:$0xff]
    %v1202 = vld [vmem:[#allocation4 + $0x198] sm:$0xff]
    %v1203 = vld [vmem:[#allocation4 + $0x1a0] sm:$0xff]
    %v1204 = vld [vmem:[#allocation4 + $0x1a8] sm:$0xff]
    %v1205 = vld [vmem:[#allocation4 + $0x1b0] sm:$0xff]
    %v1206 = vld [vmem:[#allocation4 + $0x1b8] sm:$0xff]
    %v1207 = vld [vmem:[#allocation4 + $0x1c0] sm:$0xff]
    %v1208 = vld [vmem:[#allocation4 + $0x1c8] sm:$0xff]
    %v1209 = vld [vmem:[#allocation4 + $0x1d0] sm:$0xff]
    %v1210 = vld [vmem:[#allocation4 + $0x1d8] sm:$0xff]
    %v1211 = vld [vmem:[#allocation4 + $0x1e0] sm:$0xff]
    %v1212 = vld [vmem:[#allocation4 + $0x1e8] sm:$0xff]
    %v1213 = vld [vmem:[#allocation4 + $0x1f0] sm:$0xff]
    %v1214 = vld [vmem:[#allocation4 + $0x1f8] sm:$0xff]
    %1215 = vmatprep.subr.mxu0 %v1152
    %1216 = vmatpush1.msra.mxu0 %v1151
    %1217 = vmatprep.subr.mxu0 %v1156
    %1218 = vmatpush1.msra.mxu0 %v1155
    %1219 = vmatprep.subr.mxu0 %v1160
    %1220 = vmatpush1.msra.mxu0 %v1159
    %1221 = vmatprep.subr.mxu0 %v1164
    %1222 = vmatpush1.msra.mxu0 %v1163
    %1223 = vmatprep.subr.mxu0 %v1168
    %1224 = vmatpush1.msra.mxu0 %v1167
    %1225 = vmatprep.subr.mxu0 %v1172
    %1226 = vmatpush1.msra.mxu0 %v1171
    %1227 = vmatprep.subr.mxu0 %v1176
    %1228 = vmatpush1.msra.mxu0 %v1175
    %1229 = vmatprep.subr.mxu0 %v1180
    %1230 = vmatpush1.msra.mxu0 %v1179
    %1231 = vmatprep.subr.mxu0 %v1184
    %1232 = vmatpush1.msra.mxu0 %v1183
    %1233 = vmatprep.subr.mxu0 %v1188
    %1234 = vmatpush1.msra.mxu0 %v1187
    %1235 = vmatprep.subr.mxu0 %v1192
    %1236 = vmatpush1.msra.mxu0 %v1191
    %1237 = vmatprep.subr.mxu0 %v1196
    %1238 = vmatpush1.msra.mxu0 %v1195
    %1239 = vmatprep.subr.mxu0 %v1200
    %1240 = vmatpush1.msra.mxu0 %v1199
    %1241 = vmatprep.subr.mxu0 %v1204
    %1242 = vmatpush1.msra.mxu0 %v1203
    %1243 = vmatprep.subr.mxu0 %v1208
    %1244 = vmatpush1.msra.mxu0 %v1207
    %1245 = vmatprep.subr.mxu0 %v1212
    %1246 = vmatpush1.msra.mxu0 %v1211
    %1247 = vmatprep.subr.mxu0 0.0
    %1248 = vmatpush1.msra.mxu0 0.0
    %1249 = vmatprep.subr.mxu0 0.0
    %1250 = vmatpush1.msra.mxu0 0.0
    %1251 = vmatprep.subr.mxu0 0.0
    %1252 = vmatpush1.msra.mxu0 0.0
    %1253 = vmatprep.subr.mxu0 0.0
    %1254 = vmatpush1.msra.mxu0 0.0
    %1255 = vmatprep.subr.mxu0 0.0
    %1256 = vmatpush1.msra.mxu0 0.0
    %1257 = vmatprep.subr.mxu0 0.0
    %1258 = vmatpush1.msra.mxu0 0.0
    %1259 = vmatprep.subr.mxu0 0.0
    %1260 = vmatpush1.msra.mxu0 0.0
    %1261 = vmatprep.subr.mxu0 0.0
    %1262 = vmatpush1.msra.mxu0 0.0
    %1263 = vmatprep.subr.mxu0 0.0
    %1264 = vmatpush1.msra.mxu0 0.0
    %1265 = vmatprep.subr.mxu0 0.0
    %1266 = vmatpush1.msra.mxu0 0.0
    %1267 = vmatprep.subr.mxu0 0.0
    %1268 = vmatpush1.msra.mxu0 0.0
    %1269 = vmatprep.subr.mxu0 0.0
    %1270 = vmatpush1.msra.mxu0 0.0
    %1271 = vmatprep.subr.mxu0 0.0
    %1272 = vmatpush1.msra.mxu0 0.0
    %1273 = vmatprep.subr.mxu0 0.0
    %1274 = vmatpush1.msra.mxu0 0.0
    %1275 = vmatprep.subr.mxu0 0.0
    %1276 = vmatpush1.msra.mxu0 0.0
    %1277 = vmatprep.subr.mxu0 0.0
    %1278 = vmatpush1.msra.mxu0 0.0
    %1279 = vmatprep.mubr.f32.mxu0 0.0
    %1280 = vmatmul.mubr.f32.gmra.mrb[0].mxu0 %v1145
    %v1281 = vpop.f32.mrb[0].mxu0
    %v1282 = vadd.f32 0.0, %v1281
    %v1283 = vpop.f32.mrb[0].mxu0
    %v1284 = vadd.f32 0.0, %v1283
    %1285 = vdwg.mxu0
    %1286 = vmatprep.subr.mxu0 %v1154
    %1287 = vmatpush1.msra.mxu0 %v1153
    %1288 = vmatprep.subr.mxu0 %v1158
    %1289 = vmatpush1.msra.mxu0 %v1157
    %1290 = vmatprep.subr.mxu0 %v1162
    %1291 = vmatpush1.msra.mxu0 %v1161
    %1292 = vmatprep.subr.mxu0 %v1166
    %1293 = vmatpush1.msra.mxu0 %v1165
    %1294 = vmatprep.subr.mxu0 %v1170
    %1295 = vmatpush1.msra.mxu0 %v1169
    %1296 = vmatprep.subr.mxu0 %v1174
    %1297 = vmatpush1.msra.mxu0 %v1173
    %1298 = vmatprep.subr.mxu0 %v1178
    %1299 = vmatpush1.msra.mxu0 %v1177
    %1300 = vmatprep.subr.mxu0 %v1182
    %1301 = vmatpush1.msra.mxu0 %v1181
    %1302 = vmatprep.subr.mxu0 %v1186
    %1303 = vmatpush1.msra.mxu0 %v1185
    %1304 = vmatprep.subr.mxu0 %v1190
    %1305 = vmatpush1.msra.mxu0 %v1189
    %1306 = vmatprep.subr.mxu0 %v1194
    %1307 = vmatpush1.msra.mxu0 %v1193
    %1308 = vmatprep.subr.mxu0 %v1198
    %1309 = vmatpush1.msra.mxu0 %v1197
    %1310 = vmatprep.subr.mxu0 %v1202
    %1311 = vmatpush1.msra.mxu0 %v1201
    %1312 = vmatprep.subr.mxu0 %v1206
    %1313 = vmatpush1.msra.mxu0 %v1205
    %1314 = vmatprep.subr.mxu0 %v1210
    %1315 = vmatpush1.msra.mxu0 %v1209
    %1316 = vmatprep.subr.mxu0 %v1214
    %1317 = vmatpush1.msra.mxu0 %v1213
    %1318 = vmatprep.subr.mxu0 0.0
    %1319 = vmatpush1.msra.mxu0 0.0
    %1320 = vmatprep.subr.mxu0 0.0
    %1321 = vmatpush1.msra.mxu0 0.0
    %1322 = vmatprep.subr.mxu0 0.0
    %1323 = vmatpush1.msra.mxu0 0.0
    %1324 = vmatprep.subr.mxu0 0.0
    %1325 = vmatpush1.msra.mxu0 0.0
    %1326 = vmatprep.subr.mxu0 0.0
    %1327 = vmatpush1.msra.mxu0 0.0
    %1328 = vmatprep.subr.mxu0 0.0
    %1329 = vmatpush1.msra.mxu0 0.0
    %1330 = vmatprep.subr.mxu0 0.0
    %1331 = vmatpush1.msra.mxu0 0.0
    %1332 = vmatprep.subr.mxu0 0.0
    %1333 = vmatpush1.msra.mxu0 0.0
    %1334 = vmatprep.subr.mxu0 0.0
    %1335 = vmatpush1.msra.mxu0 0.0
    %1336 = vmatprep.subr.mxu0 0.0
    %1337 = vmatpush1.msra.mxu0 0.0
    %1338 = vmatprep.subr.mxu0 0.0
    %1339 = vmatpush1.msra.mxu0 0.0
    %1340 = vmatprep.subr.mxu0 0.0
    %1341 = vmatpush1.msra.mxu0 0.0
    %1342 = vmatprep.subr.mxu0 0.0
    %1343 = vmatpush1.msra.mxu0 0.0
    %1344 = vmatprep.subr.mxu0 0.0
    %1345 = vmatpush1.msra.mxu0 0.0
    %1346 = vmatprep.subr.mxu0 0.0
    %1347 = vmatpush1.msra.mxu0 0.0
    %1348 = vmatprep.subr.mxu0 0.0
    %1349 = vmatpush1.msra.mxu0 0.0
    %1350 = vmatprep.mubr.f32.mxu0 0.0
    %1351 = vmatmul.mubr.f32.gmra.mrb[0].mxu0 %v1145
    %v1352 = vpop.f32.mrb[0].mxu0
    %v1353 = vadd.f32 0.0, %v1352
    %v1354 = vpop.f32.mrb[0].mxu0
    %v1355 = vadd.f32 0.0, %v1354
    %1356 = vdwg.mxu0
    %v1357 = vadd.f32 %v1147, %v1282
    %v1358 = vadd.f32 %v1148, %v1284
    %v1359 = vadd.f32 %v1149, %v1353
    %v1360 = vadd.f32 %v1150, %v1355
    %v1361 = vxor.u32 %v1357, 2147483648
    %v1362 = vxor.u32 %v1358, 2147483648
    %v1363 = vxor.u32 %v1359, 2147483648
    %v1364 = vxor.u32 %v1360, 2147483648
    %v1365 = vmul.f32 %v1361, 1.442695
    %v1366 = vpow.pop %v1365
    %v1367 = vmul.f32 %v1362, 1.442695
    %v1368 = vpow.pop %v1367
    %v1369 = vmul.f32 %v1363, 1.442695
    %v1370 = vpow.pop %v1369
    %v1371 = vmul.f32 %v1364, 1.442695
    %v1372 = vpow.pop %v1371
    %v1373 = vadd.f32 %v1366, 1.0
    %v1374 = vadd.f32 %v1368, 1.0
    %v1375 = vadd.f32 %v1370, 1.0
    %v1376 = vadd.f32 %v1372, 1.0
    %v1377 = vrcp.pop %v1373
    %v1378 = vmul.f32 1.0, %v1377
    %v1379 = vrcp.pop %v1374
    %v1380 = vmul.f32 1.0, %v1379
    %v1381 = vrcp.pop %v1375
    %v1382 = vmul.f32 1.0, %v1381
    %v1383 = vrcp.pop %v1376
    %v1384 = vmul.f32 1.0, %v1383
    %v1385 = vmul.f32 %v1382, 2.0
    %v1386 = vsub.f32 %v1385, 1.0
    %v1387 = vmul.f32 %v1380, %v1143
    %v1388 = vmul.f32 %v1378, %v1386
    %v1389 = vadd.f32 %v1387, %v1388
    %v1390 = vtanh.pop %v1389
    %v1391 = vmul.f32 %v1384, %v1390
    %1392 = vst [vmem:[#allocation3 + $0x18] sm:$0xff] %v1391
    %v1393 = vld [vmem:[#allocation2 + $0x80] sm:$0xff]
    %v1394 = vld [vmem:[#allocation2 + $0x88] sm:$0xff]
    %v1395 = vld [vmem:[#allocation2 + $0x90] sm:$0xff]
    %v1396 = vld [vmem:[#allocation2 + $0x98] sm:$0xff]
    %v1397 = vld [vmem:[#allocation4] sm:$0xff]
    %v1398 = vld [vmem:[#allocation4 + $0x8] sm:$0xff]
    %v1399 = vld [vmem:[#allocation4 + $0x10] sm:$0xff]
    %v1400 = vld [vmem:[#allocation4 + $0x18] sm:$0xff]
    %v1401 = vld [vmem:[#allocation4 + $0x20] sm:$0xff]
    %v1402 = vld [vmem:[#allocation4 + $0x28] sm:$0xff]
    %v1403 = vld [vmem:[#allocation4 + $0x30] sm:$0xff]
    %v1404 = vld [vmem:[#allocation4 + $0x38] sm:$0xff]
    %v1405 = vld [vmem:[#allocation4 + $0x40] sm:$0xff]
    %v1406 = vld [vmem:[#allocation4 + $0x48] sm:$0xff]
    %v1407 = vld [vmem:[#allocation4 + $0x50] sm:$0xff]
    %v1408 = vld [vmem:[#allocation4 + $0x58] sm:$0xff]
    %v1409 = vld [vmem:[#allocation4 + $0x60] sm:$0xff]
    %v1410 = vld [vmem:[#allocation4 + $0x68] sm:$0xff]
    %v1411 = vld [vmem:[#allocation4 + $0x70] sm:$0xff]
    %v1412 = vld [vmem:[#allocation4 + $0x78] sm:$0xff]
    %v1413 = vld [vmem:[#allocation4 + $0x80] sm:$0xff]
    %v1414 = vld [vmem:[#allocation4 + $0x88] sm:$0xff]
    %v1415 = vld [vmem:[#allocation4 + $0x90] sm:$0xff]
    %v1416 = vld [vmem:[#allocation4 + $0x98] sm:$0xff]
    %v1417 = vld [vmem:[#allocation4 + $0xa0] sm:$0xff]
    %v1418 = vld [vmem:[#allocation4 + $0xa8] sm:$0xff]
    %v1419 = vld [vmem:[#allocation4 + $0xb0] sm:$0xff]
    %v1420 = vld [vmem:[#allocation4 + $0xb8] sm:$0xff]
    %v1421 = vld [vmem:[#allocation4 + $0xc0] sm:$0xff]
    %v1422 = vld [vmem:[#allocation4 + $0xc8] sm:$0xff]
    %v1423 = vld [vmem:[#allocation4 + $0xd0] sm:$0xff]
    %v1424 = vld [vmem:[#allocation4 + $0xd8] sm:$0xff]
    %v1425 = vld [vmem:[#allocation4 + $0xe0] sm:$0xff]
    %v1426 = vld [vmem:[#allocation4 + $0xe8] sm:$0xff]
    %v1427 = vld [vmem:[#allocation4 + $0xf0] sm:$0xff]
    %v1428 = vld [vmem:[#allocation4 + $0xf8] sm:$0xff]
    %v1429 = vld [vmem:[#allocation4 + $0x100] sm:$0xff]
    %v1430 = vld [vmem:[#allocation4 + $0x108] sm:$0xff]
    %v1431 = vld [vmem:[#allocation4 + $0x110] sm:$0xff]
    %v1432 = vld [vmem:[#allocation4 + $0x118] sm:$0xff]
    %v1433 = vld [vmem:[#allocation4 + $0x120] sm:$0xff]
    %v1434 = vld [vmem:[#allocation4 + $0x128] sm:$0xff]
    %v1435 = vld [vmem:[#allocation4 + $0x130] sm:$0xff]
    %v1436 = vld [vmem:[#allocation4 + $0x138] sm:$0xff]
    %v1437 = vld [vmem:[#allocation4 + $0x140] sm:$0xff]
    %v1438 = vld [vmem:[#allocation4 + $0x148] sm:$0xff]
    %v1439 = vld [vmem:[#allocation4 + $0x150] sm:$0xff]
    %v1440 = vld [vmem:[#allocation4 + $0x158] sm:$0xff]
    %v1441 = vld [vmem:[#allocation4 + $0x160] sm:$0xff]
    %v1442 = vld [vmem:[#allocation4 + $0x168] sm:$0xff]
    %v1443 = vld [vmem:[#allocation4 + $0x170] sm:$0xff]
    %v1444 = vld [vmem:[#allocation4 + $0x178] sm:$0xff]
    %v1445 = vld [vmem:[#allocation4 + $0x180] sm:$0xff]
    %v1446 = vld [vmem:[#allocation4 + $0x188] sm:$0xff]
    %v1447 = vld [vmem:[#allocation4 + $0x190] sm:$0xff]
    %v1448 = vld [vmem:[#allocation4 + $0x198] sm:$0xff]
    %v1449 = vld [vmem:[#allocation4 + $0x1a0] sm:$0xff]
    %v1450 = vld [vmem:[#allocation4 + $0x1a8] sm:$0xff]
    %v1451 = vld [vmem:[#allocation4 + $0x1b0] sm:$0xff]
    %v1452 = vld [vmem:[#allocation4 + $0x1b8] sm:$0xff]
    %v1453 = vld [vmem:[#allocation4 + $0x1c0] sm:$0xff]
    %v1454 = vld [vmem:[#allocation4 + $0x1c8] sm:$0xff]
    %v1455 = vld [vmem:[#allocation4 + $0x1d0] sm:$0xff]
    %v1456 = vld [vmem:[#allocation4 + $0x1d8] sm:$0xff]
    %v1457 = vld [vmem:[#allocation4 + $0x1e0] sm:$0xff]
    %v1458 = vld [vmem:[#allocation4 + $0x1e8] sm:$0xff]
    %v1459 = vld [vmem:[#allocation4 + $0x1f0] sm:$0xff]
    %v1460 = vld [vmem:[#allocation4 + $0x1f8] sm:$0xff]
    %1461 = vmatprep.subr.mxu0 %v1398
    %1462 = vmatpush1.msra.mxu0 %v1397
    %1463 = vmatprep.subr.mxu0 %v1402
    %1464 = vmatpush1.msra.mxu0 %v1401
    %1465 = vmatprep.subr.mxu0 %v1406
    %1466 = vmatpush1.msra.mxu0 %v1405
    %1467 = vmatprep.subr.mxu0 %v1410
    %1468 = vmatpush1.msra.mxu0 %v1409
    %1469 = vmatprep.subr.mxu0 %v1414
    %1470 = vmatpush1.msra.mxu0 %v1413
    %1471 = vmatprep.subr.mxu0 %v1418
    %1472 = vmatpush1.msra.mxu0 %v1417
    %1473 = vmatprep.subr.mxu0 %v1422
    %1474 = vmatpush1.msra.mxu0 %v1421
    %1475 = vmatprep.subr.mxu0 %v1426
    %1476 = vmatpush1.msra.mxu0 %v1425
    %1477 = vmatprep.subr.mxu0 %v1430
    %1478 = vmatpush1.msra.mxu0 %v1429
    %1479 = vmatprep.subr.mxu0 %v1434
    %1480 = vmatpush1.msra.mxu0 %v1433
    %1481 = vmatprep.subr.mxu0 %v1438
    %1482 = vmatpush1.msra.mxu0 %v1437
    %1483 = vmatprep.subr.mxu0 %v1442
    %1484 = vmatpush1.msra.mxu0 %v1441
    %1485 = vmatprep.subr.mxu0 %v1446
    %1486 = vmatpush1.msra.mxu0 %v1445
    %1487 = vmatprep.subr.mxu0 %v1450
    %1488 = vmatpush1.msra.mxu0 %v1449
    %1489 = vmatprep.subr.mxu0 %v1454
    %1490 = vmatpush1.msra.mxu0 %v1453
    %1491 = vmatprep.subr.mxu0 %v1458
    %1492 = vmatpush1.msra.mxu0 %v1457
    %1493 = vmatprep.subr.mxu0 0.0
    %1494 = vmatpush1.msra.mxu0 0.0
    %1495 = vmatprep.subr.mxu0 0.0
    %1496 = vmatpush1.msra.mxu0 0.0
    %1497 = vmatprep.subr.mxu0 0.0
    %1498 = vmatpush1.msra.mxu0 0.0
    %1499 = vmatprep.subr.mxu0 0.0
    %1500 = vmatpush1.msra.mxu0 0.0
    %1501 = vmatprep.subr.mxu0 0.0
    %1502 = vmatpush1.msra.mxu0 0.0
    %1503 = vmatprep.subr.mxu0 0.0
    %1504 = vmatpush1.msra.mxu0 0.0
    %1505 = vmatprep.subr.mxu0 0.0
    %1506 = vmatpush1.msra.mxu0 0.0
    %1507 = vmatprep.subr.mxu0 0.0
    %1508 = vmatpush1.msra.mxu0 0.0
    %1509 = vmatprep.subr.mxu0 0.0
    %1510 = vmatpush1.msra.mxu0 0.0
    %1511 = vmatprep.subr.mxu0 0.0
    %1512 = vmatpush1.msra.mxu0 0.0
    %1513 = vmatprep.subr.mxu0 0.0
    %1514 = vmatpush1.msra.mxu0 0.0
    %1515 = vmatprep.subr.mxu0 0.0
    %1516 = vmatpush1.msra.mxu0 0.0
    %1517 = vmatprep.subr.mxu0 0.0
    %1518 = vmatpush1.msra.mxu0 0.0
    %1519 = vmatprep.subr.mxu0 0.0
    %1520 = vmatpush1.msra.mxu0 0.0
    %1521 = vmatprep.subr.mxu0 0.0
    %1522 = vmatpush1.msra.mxu0 0.0
    %1523 = vmatprep.subr.mxu0 0.0
    %1524 = vmatpush1.msra.mxu0 0.0
    %1525 = vmatprep.mubr.f32.mxu0 0.0
    %1526 = vmatmul.mubr.f32.gmra.mrb[0].mxu0 %v1391
    %v1527 = vpop.f32.mrb[0].mxu0
    %v1528 = vadd.f32 0.0, %v1527
    %v1529 = vpop.f32.mrb[0].mxu0
    %v1530 = vadd.f32 0.0, %v1529
    %1531 = vdwg.mxu0
    %1532 = vmatprep.subr.mxu0 %v1400
    %1533 = vmatpush1.msra.mxu0 %v1399
    %1534 = vmatprep.subr.mxu0 %v1404
    %1535 = vmatpush1.msra.mxu0 %v1403
    %1536 = vmatprep.subr.mxu0 %v1408
    %1537 = vmatpush1.msra.mxu0 %v1407
    %1538 = vmatprep.subr.mxu0 %v1412
    %1539 = vmatpush1.msra.mxu0 %v1411
    %1540 = vmatprep.subr.mxu0 %v1416
    %1541 = vmatpush1.msra.mxu0 %v1415
    %1542 = vmatprep.subr.mxu0 %v1420
    %1543 = vmatpush1.msra.mxu0 %v1419
    %1544 = vmatprep.subr.mxu0 %v1424
    %1545 = vmatpush1.msra.mxu0 %v1423
    %1546 = vmatprep.subr.mxu0 %v1428
    %1547 = vmatpush1.msra.mxu0 %v1427
    %1548 = vmatprep.subr.mxu0 %v1432
    %1549 = vmatpush1.msra.mxu0 %v1431
    %1550 = vmatprep.subr.mxu0 %v1436
    %1551 = vmatpush1.msra.mxu0 %v1435
    %1552 = vmatprep.subr.mxu0 %v1440
    %1553 = vmatpush1.msra.mxu0 %v1439
    %1554 = vmatprep.subr.mxu0 %v1444
    %1555 = vmatpush1.msra.mxu0 %v1443
    %1556 = vmatprep.subr.mxu0 %v1448
    %1557 = vmatpush1.msra.mxu0 %v1447
    %1558 = vmatprep.subr.mxu0 %v1452
    %1559 = vmatpush1.msra.mxu0 %v1451
    %1560 = vmatprep.subr.mxu0 %v1456
    %1561 = vmatpush1.msra.mxu0 %v1455
    %1562 = vmatprep.subr.mxu0 %v1460
    %1563 = vmatpush1.msra.mxu0 %v1459
    %1564 = vmatprep.subr.mxu0 0.0
    %1565 = vmatpush1.msra.mxu0 0.0
    %1566 = vmatprep.subr.mxu0 0.0
    %1567 = vmatpush1.msra.mxu0 0.0
    %1568 = vmatprep.subr.mxu0 0.0
    %1569 = vmatpush1.msra.mxu0 0.0
    %1570 = vmatprep.subr.mxu0 0.0
    %1571 = vmatpush1.msra.mxu0 0.0
    %1572 = vmatprep.subr.mxu0 0.0
    %1573 = vmatpush1.msra.mxu0 0.0
    %1574 = vmatprep.subr.mxu0 0.0
    %1575 = vmatpush1.msra.mxu0 0.0
    %1576 = vmatprep.subr.mxu0 0.0
    %1577 = vmatpush1.msra.mxu0 0.0
    %1578 = vmatprep.subr.mxu0 0.0
    %1579 = vmatpush1.msra.mxu0 0.0
    %1580 = vmatprep.subr.mxu0 0.0
    %1581 = vmatpush1.msra.mxu0 0.0
    %1582 = vmatprep.subr.mxu0 0.0
    %1583 = vmatpush1.msra.mxu0 0.0
    %1584 = vmatprep.subr.mxu0 0.0
    %1585 = vmatpush1.msra.mxu0 0.0
    %1586 = vmatprep.subr.mxu0 0.0
    %1587 = vmatpush1.msra.mxu0 0.0
    %1588 = vmatprep.subr.mxu0 0.0
    %1589 = vmatpush1.msra.mxu0 0.0
    %1590 = vmatprep.subr.mxu0 0.0
    %1591 = vmatpush1.msra.mxu0 0.0
    %1592 = vmatprep.subr.mxu0 0.0
    %1593 = vmatpush1.msra.mxu0 0.0
    %1594 = vmatprep.subr.mxu0 0.0
    %1595 = vmatpush1.msra.mxu0 0.0
    %1596 = vmatprep.mubr.f32.mxu0 0.0
    %1597 = vmatmul.mubr.f32.gmra.mrb[0].mxu0 %v1391
    %v1598 = vpop.f32.mrb[0].mxu0
    %v1599 = vadd.f32 0.0, %v1598
    %v1600 = vpop.f32.mrb[0].mxu0
    %v1601 = vadd.f32 0.0, %v1600
    %1602 = vdwg.mxu0
    %v1603 = vadd.f32 %v1393, %v1528
    %v1604 = vadd.f32 %v1394, %v1530
    %v1605 = vadd.f32 %v1395, %v1599
    %v1606 = vadd.f32 %v1396, %v1601
    %v1607 = vxor.u32 %v1603, 2147483648
    %v1608 = vxor.u32 %v1604, 2147483648
    %v1609 = vxor.u32 %v1605, 2147483648
    %v1610 = vxor.u32 %v1606, 2147483648
    %v1611 = vmul.f32 %v1607, 1.442695
    %v1612 = vpow.pop %v1611
    %v1613 = vmul.f32 %v1608, 1.442695
    %v1614 = vpow.pop %v1613
    %v1615 = vmul.f32 %v1609, 1.442695
    %v1616 = vpow.pop %v1615
    %v1617 = vmul.f32 %v1610, 1.442695
    %v1618 = vpow.pop %v1617
    %v1619 = vadd.f32 %v1612, 1.0
    %v1620 = vadd.f32 %v1614, 1.0
    %v1621 = vadd.f32 %v1616, 1.0
    %v1622 = vadd.f32 %v1618, 1.0
    %v1623 = vrcp.pop %v1619
    %v1624 = vmul.f32 1.0, %v1623
    %v1625 = vrcp.pop %v1620
    %v1626 = vmul.f32 1.0, %v1625
    %v1627 = vrcp.pop %v1621
    %v1628 = vmul.f32 1.0, %v1627
    %v1629 = vrcp.pop %v1622
    %v1630 = vmul.f32 1.0, %v1629
    %v1631 = vmul.f32 %v1628, 2.0
    %v1632 = vsub.f32 %v1631, 1.0
    %v1633 = vmul.f32 %v1626, %v1389
    %v1634 = vmul.f32 %v1624, %v1632
    %v1635 = vadd.f32 %v1633, %v1634
    %v1636 = vtanh.pop %v1635
    %v1637 = vmul.f32 %v1630, %v1636
    %1638 = vst [vmem:[#allocation3 + $0x20] sm:$0xff] %v1637
    %v1639 = vld [vmem:[#allocation2 + $0xa0] sm:$0xff]
    %v1640 = vld [vmem:[#allocation2 + $0xa8] sm:$0xff]
    %v1641 = vld [vmem:[#allocation2 + $0xb0] sm:$0xff]
    %v1642 = vld [vmem:[#allocation2 + $0xb8] sm:$0xff]
    %v1643 = vld [vmem:[#allocation4] sm:$0xff]
    %v1644 = vld [vmem:[#allocation4 + $0x8] sm:$0xff]
    %v1645 = vld [vmem:[#allocation4 + $0x10] sm:$0xff]
    %v1646 = vld [vmem:[#allocation4 + $0x18] sm:$0xff]
    %v1647 = vld [vmem:[#allocation4 + $0x20] sm:$0xff]
    %v1648 = vld [vmem:[#allocation4 + $0x28] sm:$0xff]
    %v1649 = vld [vmem:[#allocation4 + $0x30] sm:$0xff]
    %v1650 = vld [vmem:[#allocation4 + $0x38] sm:$0xff]
    %v1651 = vld [vmem:[#allocation4 + $0x40] sm:$0xff]
    %v1652 = vld [vmem:[#allocation4 + $0x48] sm:$0xff]
    %v1653 = vld [vmem:[#allocation4 + $0x50] sm:$0xff]
    %v1654 = vld [vmem:[#allocation4 + $0x58] sm:$0xff]
    %v1655 = vld [vmem:[#allocation4 + $0x60] sm:$0xff]
    %v1656 = vld [vmem:[#allocation4 + $0x68] sm:$0xff]
    %v1657 = vld [vmem:[#allocation4 + $0x70] sm:$0xff]
    %v1658 = vld [vmem:[#allocation4 + $0x78] sm:$0xff]
    %v1659 = vld [vmem:[#allocation4 + $0x80] sm:$0xff]
    %v1660 = vld [vmem:[#allocation4 + $0x88] sm:$0xff]
    %v1661 = vld [vmem:[#allocation4 + $0x90] sm:$0xff]
    %v1662 = vld [vmem:[#allocation4 + $0x98] sm:$0xff]
    %v1663 = vld [vmem:[#allocation4 + $0xa0] sm:$0xff]
    %v1664 = vld [vmem:[#allocation4 + $0xa8] sm:$0xff]
    %v1665 = vld [vmem:[#allocation4 + $0xb0] sm:$0xff]
    %v1666 = vld [vmem:[#allocation4 + $0xb8] sm:$0xff]
    %v1667 = vld [vmem:[#allocation4 + $0xc0] sm:$0xff]
    %v1668 = vld [vmem:[#allocation4 + $0xc8] sm:$0xff]
    %v1669 = vld [vmem:[#allocation4 + $0xd0] sm:$0xff]
    %v1670 = vld [vmem:[#allocation4 + $0xd8] sm:$0xff]
    %v1671 = vld [vmem:[#allocation4 + $0xe0] sm:$0xff]
    %v1672 = vld [vmem:[#allocation4 + $0xe8] sm:$0xff]
    %v1673 = vld [vmem:[#allocation4 + $0xf0] sm:$0xff]
    %v1674 = vld [vmem:[#allocation4 + $0xf8] sm:$0xff]
    %v1675 = vld [vmem:[#allocation4 + $0x100] sm:$0xff]
    %v1676 = vld [vmem:[#allocation4 + $0x108] sm:$0xff]
    %v1677 = vld [vmem:[#allocation4 + $0x110] sm:$0xff]
    %v1678 = vld [vmem:[#allocation4 + $0x118] sm:$0xff]
    %v1679 = vld [vmem:[#allocation4 + $0x120] sm:$0xff]
    %v1680 = vld [vmem:[#allocation4 + $0x128] sm:$0xff]
    %v1681 = vld [vmem:[#allocation4 + $0x130] sm:$0xff]
    %v1682 = vld [vmem:[#allocation4 + $0x138] sm:$0xff]
    %v1683 = vld [vmem:[#allocation4 + $0x140] sm:$0xff]
    %v1684 = vld [vmem:[#allocation4 + $0x148] sm:$0xff]
    %v1685 = vld [vmem:[#allocation4 + $0x150] sm:$0xff]
    %v1686 = vld [vmem:[#allocation4 + $0x158] sm:$0xff]
    %v1687 = vld [vmem:[#allocation4 + $0x160] sm:$0xff]
    %v1688 = vld [vmem:[#allocation4 + $0x168] sm:$0xff]
    %v1689 = vld [vmem:[#allocation4 + $0x170] sm:$0xff]
    %v1690 = vld [vmem:[#allocation4 + $0x178] sm:$0xff]
    %v1691 = vld [vmem:[#allocation4 + $0x180] sm:$0xff]
    %v1692 = vld [vmem:[#allocation4 + $0x188] sm:$0xff]
    %v1693 = vld [vmem:[#allocation4 + $0x190] sm:$0xff]
    %v1694 = vld [vmem:[#allocation4 + $0x198] sm:$0xff]
    %v1695 = vld [vmem:[#allocation4 + $0x1a0] sm:$0xff]
    %v1696 = vld [vmem:[#allocation4 + $0x1a8] sm:$0xff]
    %v1697 = vld [vmem:[#allocation4 + $0x1b0] sm:$0xff]
    %v1698 = vld [vmem:[#allocation4 + $0x1b8] sm:$0xff]
    %v1699 = vld [vmem:[#allocation4 + $0x1c0] sm:$0xff]
    %v1700 = vld [vmem:[#allocation4 + $0x1c8] sm:$0xff]
    %v1701 = vld [vmem:[#allocation4 + $0x1d0] sm:$0xff]
    %v1702 = vld [vmem:[#allocation4 + $0x1d8] sm:$0xff]
    %v1703 = vld [vmem:[#allocation4 + $0x1e0] sm:$0xff]
    %v1704 = vld [vmem:[#allocation4 + $0x1e8] sm:$0xff]
    %v1705 = vld [vmem:[#allocation4 + $0x1f0] sm:$0xff]
    %v1706 = vld [vmem:[#allocation4 + $0x1f8] sm:$0xff]
    %1707 = vmatprep.subr.mxu0 %v1644
    %1708 = vmatpush1.msra.mxu0 %v1643
    %1709 = vmatprep.subr.mxu0 %v1648
    %1710 = vmatpush1.msra.mxu0 %v1647
    %1711 = vmatprep.subr.mxu0 %v1652
    %1712 = vmatpush1.msra.mxu0 %v1651
    %1713 = vmatprep.subr.mxu0 %v1656
    %1714 = vmatpush1.msra.mxu0 %v1655
    %1715 = vmatprep.subr.mxu0 %v1660
    %1716 = vmatpush1.msra.mxu0 %v1659
    %1717 = vmatprep.subr.mxu0 %v1664
    %1718 = vmatpush1.msra.mxu0 %v1663
    %1719 = vmatprep.subr.mxu0 %v1668
    %1720 = vmatpush1.msra.mxu0 %v1667
    %1721 = vmatprep.subr.mxu0 %v1672
    %1722 = vmatpush1.msra.mxu0 %v1671
    %1723 = vmatprep.subr.mxu0 %v1676
    %1724 = vmatpush1.msra.mxu0 %v1675
    %1725 = vmatprep.subr.mxu0 %v1680
    %1726 = vmatpush1.msra.mxu0 %v1679
    %1727 = vmatprep.subr.mxu0 %v1684
    %1728 = vmatpush1.msra.mxu0 %v1683
    %1729 = vmatprep.subr.mxu0 %v1688
    %1730 = vmatpush1.msra.mxu0 %v1687
    %1731 = vmatprep.subr.mxu0 %v1692
    %1732 = vmatpush1.msra.mxu0 %v1691
    %1733 = vmatprep.subr.mxu0 %v1696
    %1734 = vmatpush1.msra.mxu0 %v1695
    %1735 = vmatprep.subr.mxu0 %v1700
    %1736 = vmatpush1.msra.mxu0 %v1699
    %1737 = vmatprep.subr.mxu0 %v1704
    %1738 = vmatpush1.msra.mxu0 %v1703
    %1739 = vmatprep.subr.mxu0 0.0
    %1740 = vmatpush1.msra.mxu0 0.0
    %1741 = vmatprep.subr.mxu0 0.0
    %1742 = vmatpush1.msra.mxu0 0.0
    %1743 = vmatprep.subr.mxu0 0.0
    %1744 = vmatpush1.msra.mxu0 0.0
    %1745 = vmatprep.subr.mxu0 0.0
    %1746 = vmatpush1.msra.mxu0 0.0
    %1747 = vmatprep.subr.mxu0 0.0
    %1748 = vmatpush1.msra.mxu0 0.0
    %1749 = vmatprep.subr.mxu0 0.0
    %1750 = vmatpush1.msra.mxu0 0.0
    %1751 = vmatprep.subr.mxu0 0.0
    %1752 = vmatpush1.msra.mxu0 0.0
    %1753 = vmatprep.subr.mxu0 0.0
    %1754 = vmatpush1.msra.mxu0 0.0
    %1755 = vmatprep.subr.mxu0 0.0
    %1756 = vmatpush1.msra.mxu0 0.0
    %1757 = vmatprep.subr.mxu0 0.0
    %1758 = vmatpush1.msra.mxu0 0.0
    %1759 = vmatprep.subr.mxu0 0.0
    %1760 = vmatpush1.msra.mxu0 0.0
    %1761 = vmatprep.subr.mxu0 0.0
    %1762 = vmatpush1.msra.mxu0 0.0
    %1763 = vmatprep.subr.mxu0 0.0
    %1764 = vmatpush1.msra.mxu0 0.0
    %1765 = vmatprep.subr.mxu0 0.0
    %1766 = vmatpush1.msra.mxu0 0.0
    %1767 = vmatprep.subr.mxu0 0.0
    %1768 = vmatpush1.msra.mxu0 0.0
    %1769 = vmatprep.subr.mxu0 0.0
    %1770 = vmatpush1.msra.mxu0 0.0
    %1771 = vmatprep.mubr.f32.mxu0 0.0
    %1772 = vmatmul.mubr.f32.gmra.mrb[0].mxu0 %v1637
    %v1773 = vpop.f32.mrb[0].mxu0
    %v1774 = vadd.f32 0.0, %v1773
    %v1775 = vpop.f32.mrb[0].mxu0
    %v1776 = vadd.f32 0.0, %v1775
    %1777 = vdwg.mxu0
    %1778 = vmatprep.subr.mxu0 %v1646
    %1779 = vmatpush1.msra.mxu0 %v1645
    %1780 = vmatprep.subr.mxu0 %v1650
    %1781 = vmatpush1.msra.mxu0 %v1649
    %1782 = vmatprep.subr.mxu0 %v1654
    %1783 = vmatpush1.msra.mxu0 %v1653
    %1784 = vmatprep.subr.mxu0 %v1658
    %1785 = vmatpush1.msra.mxu0 %v1657
    %1786 = vmatprep.subr.mxu0 %v1662
    %1787 = vmatpush1.msra.mxu0 %v1661
    %1788 = vmatprep.subr.mxu0 %v1666
    %1789 = vmatpush1.msra.mxu0 %v1665
    %1790 = vmatprep.subr.mxu0 %v1670
    %1791 = vmatpush1.msra.mxu0 %v1669
    %1792 = vmatprep.subr.mxu0 %v1674
    %1793 = vmatpush1.msra.mxu0 %v1673
    %1794 = vmatprep.subr.mxu0 %v1678
    %1795 = vmatpush1.msra.mxu0 %v1677
    %1796 = vmatprep.subr.mxu0 %v1682
    %1797 = vmatpush1.msra.mxu0 %v1681
    %1798 = vmatprep.subr.mxu0 %v1686
    %1799 = vmatpush1.msra.mxu0 %v1685
    %1800 = vmatprep.subr.mxu0 %v1690
    %1801 = vmatpush1.msra.mxu0 %v1689
    %1802 = vmatprep.subr.mxu0 %v1694
    %1803 = vmatpush1.msra.mxu0 %v1693
    %1804 = vmatprep.subr.mxu0 %v1698
    %1805 = vmatpush1.msra.mxu0 %v1697
    %1806 = vmatprep.subr.mxu0 %v1702
    %1807 = vmatpush1.msra.mxu0 %v1701
    %1808 = vmatprep.subr.mxu0 %v1706
    %1809 = vmatpush1.msra.mxu0 %v1705
    %1810 = vmatprep.subr.mxu0 0.0
    %1811 = vmatpush1.msra.mxu0 0.0
    %1812 = vmatprep.subr.mxu0 0.0
    %1813 = vmatpush1.msra.mxu0 0.0
    %1814 = vmatprep.subr.mxu0 0.0
    %1815 = vmatpush1.msra.mxu0 0.0
    %1816 = vmatprep.subr.mxu0 0.0
    %1817 = vmatpush1.msra.mxu0 0.0
    %1818 = vmatprep.subr.mxu0 0.0
    %1819 = vmatpush1.msra.mxu0 0.0
    %1820 = vmatprep.subr.mxu0 0.0
    %1821 = vmatpush1.msra.mxu0 0.0
    %1822 = vmatprep.subr.mxu0 0.0
    %1823 = vmatpush1.msra.mxu0 0.0
    %1824 = vmatprep.subr.mxu0 0.0
    %1825 = vmatpush1.msra.mxu0 0.0
    %1826 = vmatprep.subr.mxu0 0.0
    %1827 = vmatpush1.msra.mxu0 0.0
    %1828 = vmatprep.subr.mxu0 0.0
    %1829 = vmatpush1.msra.mxu0 0.0
    %1830 = vmatprep.subr.mxu0 0.0
    %1831 = vmatpush1.msra.mxu0 0.0
    %1832 = vmatprep.subr.mxu0 0.0
    %1833 = vmatpush1.msra.mxu0 0.0
    %1834 = vmatprep.subr.mxu0 0.0
    %1835 = vmatpush1.msra.mxu0 0.0
    %1836 = vmatprep.subr.mxu0 0.0
    %1837 = vmatpush1.msra.mxu0 0.0
    %1838 = vmatprep.subr.mxu0 0.0
    %1839 = vmatpush1.msra.mxu0 0.0
    %1840 = vmatprep.subr.mxu0 0.0
    %1841 = vmatpush1.msra.mxu0 0.0
    %1842 = vmatprep.mubr.f32.mxu0 0.0
    %1843 = vmatmul.mubr.f32.gmra.mrb[0].mxu0 %v1637
    %v1844 = vpop.f32.mrb[0].mxu0
    %v1845 = vadd.f32 0.0, %v1844
    %v1846 = vpop.f32.mrb[0].mxu0
    %v1847 = vadd.f32 0.0, %v1846
    %1848 = vdwg.mxu0
    %v1849 = vadd.f32 %v1639, %v1774
    %v1850 = vadd.f32 %v1640, %v1776
    %v1851 = vadd.f32 %v1641, %v1845
    %v1852 = vadd.f32 %v1642, %v1847
    %v1853 = vxor.u32 %v1849, 2147483648
    %v1854 = vxor.u32 %v1850, 2147483648
    %v1855 = vxor.u32 %v1851, 2147483648
    %v1856 = vxor.u32 %v1852, 2147483648
    %v1857 = vmul.f32 %v1853, 1.442695
    %v1858 = vpow.pop %v1857
    %v1859 = vmul.f32 %v1854, 1.442695
    %v1860 = vpow.pop %v1859
    %v1861 = vmul.f32 %v1855, 1.442695
    %v1862 = vpow.pop %v1861
    %v1863 = vmul.f32 %v1856, 1.442695
    %v1864 = vpow.pop %v1863
    %v1865 = vadd.f32 %v1858, 1.0
    %v1866 = vadd.f32 %v1860, 1.0
    %v1867 = vadd.f32 %v1862, 1.0
    %v1868 = vadd.f32 %v1864, 1.0
    %v1869 = vrcp.pop %v1865
    %v1870 = vmul.f32 1.0, %v1869
    %v1871 = vrcp.pop %v1866
    %v1872 = vmul.f32 1.0, %v1871
    %v1873 = vrcp.pop %v1867
    %v1874 = vmul.f32 1.0, %v1873
    %v1875 = vrcp.pop %v1868
    %v1876 = vmul.f32 1.0, %v1875
    %v1877 = vmul.f32 %v1874, 2.0
    %v1878 = vsub.f32 %v1877, 1.0
    %v1879 = vmul.f32 %v1872, %v1635
    %v1880 = vmul.f32 %v1870, %v1878
    %v1881 = vadd.f32 %v1879, %v1880
    %v1882 = vtanh.pop %v1881
    %v1883 = vmul.f32 %v1876, %v1882
    %1884 = vst [vmem:[#allocation3 + $0x28] sm:$0xff] %v1883
    %v1885 = vld [vmem:[#allocation2 + $0xc0] sm:$0xff]
    %v1886 = vld [vmem:[#allocation2 + $0xc8] sm:$0xff]
    %v1887 = vld [vmem:[#allocation2 + $0xd0] sm:$0xff]
    %v1888 = vld [vmem:[#allocation2 + $0xd8] sm:$0xff]
    %v1889 = vld [vmem:[#allocation4] sm:$0xff]
    %v1890 = vld [vmem:[#allocation4 + $0x8] sm:$0xff]
    %v1891 = vld [vmem:[#allocation4 + $0x10] sm:$0xff]
    %v1892 = vld [vmem:[#allocation4 + $0x18] sm:$0xff]
    %v1893 = vld [vmem:[#allocation4 + $0x20] sm:$0xff]
    %v1894 = vld [vmem:[#allocation4 + $0x28] sm:$0xff]
    %v1895 = vld [vmem:[#allocation4 + $0x30] sm:$0xff]
    %v1896 = vld [vmem:[#allocation4 + $0x38] sm:$0xff]
    %v1897 = vld [vmem:[#allocation4 + $0x40] sm:$0xff]
    %v1898 = vld [vmem:[#allocation4 + $0x48] sm:$0xff]
    %v1899 = vld [vmem:[#allocation4 + $0x50] sm:$0xff]
    %v1900 = vld [vmem:[#allocation4 + $0x58] sm:$0xff]
    %v1901 = vld [vmem:[#allocation4 + $0x60] sm:$0xff]
    %v1902 = vld [vmem:[#allocation4 + $0x68] sm:$0xff]
    %v1903 = vld [vmem:[#allocation4 + $0x70] sm:$0xff]
    %v1904 = vld [vmem:[#allocation4 + $0x78] sm:$0xff]
    %v1905 = vld [vmem:[#allocation4 + $0x80] sm:$0xff]
    %v1906 = vld [vmem:[#allocation4 + $0x88] sm:$0xff]
    %v1907 = vld [vmem:[#allocation4 + $0x90] sm:$0xff]
    %v1908 = vld [vmem:[#allocation4 + $0x98] sm:$0xff]
    %v1909 = vld [vmem:[#allocation4 + $0xa0] sm:$0xff]
    %v1910 = vld [vmem:[#allocation4 + $0xa8] sm:$0xff]
    %v1911 = vld [vmem:[#allocation4 + $0xb0] sm:$0xff]
    %v1912 = vld [vmem:[#allocation4 + $0xb8] sm:$0xff]
    %v1913 = vld [vmem:[#allocation4 + $0xc0] sm:$0xff]
    %v1914 = vld [vmem:[#allocation4 + $0xc8] sm:$0xff]
    %v1915 = vld [vmem:[#allocation4 + $0xd0] sm:$0xff]
    %v1916 = vld [vmem:[#allocation4 + $0xd8] sm:$0xff]
    %v1917 = vld [vmem:[#allocation4 + $0xe0] sm:$0xff]
    %v1918 = vld [vmem:[#allocation4 + $0xe8] sm:$0xff]
    %v1919 = vld [vmem:[#allocation4 + $0xf0] sm:$0xff]
    %v1920 = vld [vmem:[#allocation4 + $0xf8] sm:$0xff]
    %v1921 = vld [vmem:[#allocation4 + $0x100] sm:$0xff]
    %v1922 = vld [vmem:[#allocation4 + $0x108] sm:$0xff]
    %v1923 = vld [vmem:[#allocation4 + $0x110] sm:$0xff]
    %v1924 = vld [vmem:[#allocation4 + $0x118] sm:$0xff]
    %v1925 = vld [vmem:[#allocation4 + $0x120] sm:$0xff]
    %v1926 = vld [vmem:[#allocation4 + $0x128] sm:$0xff]
    %v1927 = vld [vmem:[#allocation4 + $0x130] sm:$0xff]
    %v1928 = vld [vmem:[#allocation4 + $0x138] sm:$0xff]
    %v1929 = vld [vmem:[#allocation4 + $0x140] sm:$0xff]
    %v1930 = vld [vmem:[#allocation4 + $0x148] sm:$0xff]
    %v1931 = vld [vmem:[#allocation4 + $0x150] sm:$0xff]
    %v1932 = vld [vmem:[#allocation4 + $0x158] sm:$0xff]
    %v1933 = vld [vmem:[#allocation4 + $0x160] sm:$0xff]
    %v1934 = vld [vmem:[#allocation4 + $0x168] sm:$0xff]
    %v1935 = vld [vmem:[#allocation4 + $0x170] sm:$0xff]
    %v1936 = vld [vmem:[#allocation4 + $0x178] sm:$0xff]
    %v1937 = vld [vmem:[#allocation4 + $0x180] sm:$0xff]
    %v1938 = vld [vmem:[#allocation4 + $0x188] sm:$0xff]
    %v1939 = vld [vmem:[#allocation4 + $0x190] sm:$0xff]
    %v1940 = vld [vmem:[#allocation4 + $0x198] sm:$0xff]
    %v1941 = vld [vmem:[#allocation4 + $0x1a0] sm:$0xff]
    %v1942 = vld [vmem:[#allocation4 + $0x1a8] sm:$0xff]
    %v1943 = vld [vmem:[#allocation4 + $0x1b0] sm:$0xff]
    %v1944 = vld [vmem:[#allocation4 + $0x1b8] sm:$0xff]
    %v1945 = vld [vmem:[#allocation4 + $0x1c0] sm:$0xff]
    %v1946 = vld [vmem:[#allocation4 + $0x1c8] sm:$0xff]
    %v1947 = vld [vmem:[#allocation4 + $0x1d0] sm:$0xff]
    %v1948 = vld [vmem:[#allocation4 + $0x1d8] sm:$0xff]
    %v1949 = vld [vmem:[#allocation4 + $0x1e0] sm:$0xff]
    %v1950 = vld [vmem:[#allocation4 + $0x1e8] sm:$0xff]
    %v1951 = vld [vmem:[#allocation4 + $0x1f0] sm:$0xff]
    %v1952 = vld [vmem:[#allocation4 + $0x1f8] sm:$0xff]
    %1953 = vmatprep.subr.mxu0 %v1890
    %1954 = vmatpush1.msra.mxu0 %v1889
    %1955 = vmatprep.subr.mxu0 %v1894
    %1956 = vmatpush1.msra.mxu0 %v1893
    %1957 = vmatprep.subr.mxu0 %v1898
    %1958 = vmatpush1.msra.mxu0 %v1897
    %1959 = vmatprep.subr.mxu0 %v1902
    %1960 = vmatpush1.msra.mxu0 %v1901
    %1961 = vmatprep.subr.mxu0 %v1906
    %1962 = vmatpush1.msra.mxu0 %v1905
    %1963 = vmatprep.subr.mxu0 %v1910
    %1964 = vmatpush1.msra.mxu0 %v1909
    %1965 = vmatprep.subr.mxu0 %v1914
    %1966 = vmatpush1.msra.mxu0 %v1913
    %1967 = vmatprep.subr.mxu0 %v1918
    %1968 = vmatpush1.msra.mxu0 %v1917
    %1969 = vmatprep.subr.mxu0 %v1922
    %1970 = vmatpush1.msra.mxu0 %v1921
    %1971 = vmatprep.subr.mxu0 %v1926
    %1972 = vmatpush1.msra.mxu0 %v1925
    %1973 = vmatprep.subr.mxu0 %v1930
    %1974 = vmatpush1.msra.mxu0 %v1929
    %1975 = vmatprep.subr.mxu0 %v1934
    %1976 = vmatpush1.msra.mxu0 %v1933
    %1977 = vmatprep.subr.mxu0 %v1938
    %1978 = vmatpush1.msra.mxu0 %v1937
    %1979 = vmatprep.subr.mxu0 %v1942
    %1980 = vmatpush1.msra.mxu0 %v1941
    %1981 = vmatprep.subr.mxu0 %v1946
    %1982 = vmatpush1.msra.mxu0 %v1945
    %1983 = vmatprep.subr.mxu0 %v1950
    %1984 = vmatpush1.msra.mxu0 %v1949
    %1985 = vmatprep.subr.mxu0 0.0
    %1986 = vmatpush1.msra.mxu0 0.0
    %1987 = vmatprep.subr.mxu0 0.0
    %1988 = vmatpush1.msra.mxu0 0.0
    %1989 = vmatprep.subr.mxu0 0.0
    %1990 = vmatpush1.msra.mxu0 0.0
    %1991 = vmatprep.subr.mxu0 0.0
    %1992 = vmatpush1.msra.mxu0 0.0
    %1993 = vmatprep.subr.mxu0 0.0
    %1994 = vmatpush1.msra.mxu0 0.0
    %1995 = vmatprep.subr.mxu0 0.0
    %1996 = vmatpush1.msra.mxu0 0.0
    %1997 = vmatprep.subr.mxu0 0.0
    %1998 = vmatpush1.msra.mxu0 0.0
    %1999 = vmatprep.subr.mxu0 0.0
    %2000 = vmatpush1.msra.mxu0 0.0
    %2001 = vmatprep.subr.mxu0 0.0
    %2002 = vmatpush1.msra.mxu0 0.0
    %2003 = vmatprep.subr.mxu0 0.0
    %2004 = vmatpush1.msra.mxu0 0.0
    %2005 = vmatprep.subr.mxu0 0.0
    %2006 = vmatpush1.msra.mxu0 0.0
    %2007 = vmatprep.subr.mxu0 0.0
    %2008 = vmatpush1.msra.mxu0 0.0
    %2009 = vmatprep.subr.mxu0 0.0
    %2010 = vmatpush1.msra.mxu0 0.0
    %2011 = vmatprep.subr.mxu0 0.0
    %2012 = vmatpush1.msra.mxu0 0.0
    %2013 = vmatprep.subr.mxu0 0.0
    %2014 = vmatpush1.msra.mxu0 0.0
    %2015 = vmatprep.subr.mxu0 0.0
    %2016 = vmatpush1.msra.mxu0 0.0
    %2017 = vmatprep.mubr.f32.mxu0 0.0
    %2018 = vmatmul.mubr.f32.gmra.mrb[0].mxu0 %v1883
    %v2019 = vpop.f32.mrb[0].mxu0
    %v2020 = vadd.f32 0.0, %v2019
    %v2021 = vpop.f32.mrb[0].mxu0
    %v2022 = vadd.f32 0.0, %v2021
    %2023 = vdwg.mxu0
    %2024 = vmatprep.subr.mxu0 %v1892
    %2025 = vmatpush1.msra.mxu0 %v1891
    %2026 = vmatprep.subr.mxu0 %v1896
    %2027 = vmatpush1.msra.mxu0 %v1895
    %2028 = vmatprep.subr.mxu0 %v1900
    %2029 = vmatpush1.msra.mxu0 %v1899
    %2030 = vmatprep.subr.mxu0 %v1904
    %2031 = vmatpush1.msra.mxu0 %v1903
    %2032 = vmatprep.subr.mxu0 %v1908
    %2033 = vmatpush1.msra.mxu0 %v1907
    %2034 = vmatprep.subr.mxu0 %v1912
    %2035 = vmatpush1.msra.mxu0 %v1911
    %2036 = vmatprep.subr.mxu0 %v1916
    %2037 = vmatpush1.msra.mxu0 %v1915
    %2038 = vmatprep.subr.mxu0 %v1920
    %2039 = vmatpush1.msra.mxu0 %v1919
    %2040 = vmatprep.subr.mxu0 %v1924
    %2041 = vmatpush1.msra.mxu0 %v1923
    %2042 = vmatprep.subr.mxu0 %v1928
    %2043 = vmatpush1.msra.mxu0 %v1927
    %2044 = vmatprep.subr.mxu0 %v1932
    %2045 = vmatpush1.msra.mxu0 %v1931
    %2046 = vmatprep.subr.mxu0 %v1936
    %2047 = vmatpush1.msra.mxu0 %v1935
    %2048 = vmatprep.subr.mxu0 %v1940
    %2049 = vmatpush1.msra.mxu0 %v1939
    %2050 = vmatprep.subr.mxu0 %v1944
    %2051 = vmatpush1.msra.mxu0 %v1943
    %2052 = vmatprep.subr.mxu0 %v1948
    %2053 = vmatpush1.msra.mxu0 %v1947
    %2054 = vmatprep.subr.mxu0 %v1952
    %2055 = vmatpush1.msra.mxu0 %v1951
    %2056 = vmatprep.subr.mxu0 0.0
    %2057 = vmatpush1.msra.mxu0 0.0
    %2058 = vmatprep.subr.mxu0 0.0
    %2059 = vmatpush1.msra.mxu0 0.0
    %2060 = vmatprep.subr.mxu0 0.0
    %2061 = vmatpush1.msra.mxu0 0.0
    %2062 = vmatprep.subr.mxu0 0.0
    %2063 = vmatpush1.msra.mxu0 0.0
    %2064 = vmatprep.subr.mxu0 0.0
    %2065 = vmatpush1.msra.mxu0 0.0
    %2066 = vmatprep.subr.mxu0 0.0
    %2067 = vmatpush1.msra.mxu0 0.0
    %2068 = vmatprep.subr.mxu0 0.0
    %2069 = vmatpush1.msra.mxu0 0.0
    %2070 = vmatprep.subr.mxu0 0.0
    %2071 = vmatpush1.msra.mxu0 0.0
    %2072 = vmatprep.subr.mxu0 0.0
    %2073 = vmatpush1.msra.mxu0 0.0
    %2074 = vmatprep.subr.mxu0 0.0
    %2075 = vmatpush1.msra.mxu0 0.0
    %2076 = vmatprep.subr.mxu0 0.0
    %2077 = vmatpush1.msra.mxu0 0.0
    %2078 = vmatprep.subr.mxu0 0.0
    %2079 = vmatpush1.msra.mxu0 0.0
    %2080 = vmatprep.subr.mxu0 0.0
    %2081 = vmatpush1.msra.mxu0 0.0
    %2082 = vmatprep.subr.mxu0 0.0
    %2083 = vmatpush1.msra.mxu0 0.0
    %2084 = vmatprep.subr.mxu0 0.0
    %2085 = vmatpush1.msra.mxu0 0.0
    %2086 = vmatprep.subr.mxu0 0.0
    %2087 = vmatpush1.msra.mxu0 0.0
    %2088 = vmatprep.mubr.f32.mxu0 0.0
    %2089 = vmatmul.mubr.f32.gmra.mrb[0].mxu0 %v1883
    %v2090 = vpop.f32.mrb[0].mxu0
    %v2091 = vadd.f32 0.0, %v2090
    %v2092 = vpop.f32.mrb[0].mxu0
    %v2093 = vadd.f32 0.0, %v2092
    %2094 = vdwg.mxu0
    %v2095 = vadd.f32 %v1885, %v2020
    %v2096 = vadd.f32 %v1886, %v2022
    %v2097 = vadd.f32 %v1887, %v2091
    %v2098 = vadd.f32 %v1888, %v2093
    %v2099 = vxor.u32 %v2095, 2147483648
    %v2100 = vxor.u32 %v2096, 2147483648
    %v2101 = vxor.u32 %v2097, 2147483648
    %v2102 = vxor.u32 %v2098, 2147483648
    %v2103 = vmul.f32 %v2099, 1.442695
    %v2104 = vpow.pop %v2103
    %v2105 = vmul.f32 %v2100, 1.442695
    %v2106 = vpow.pop %v2105
    %v2107 = vmul.f32 %v2101, 1.442695
    %v2108 = vpow.pop %v2107
    %v2109 = vmul.f32 %v2102, 1.442695
    %v2110 = vpow.pop %v2109
    %v2111 = vadd.f32 %v2104, 1.0
    %v2112 = vadd.f32 %v2106, 1.0
    %v2113 = vadd.f32 %v2108, 1.0
    %v2114 = vadd.f32 %v2110, 1.0
    %v2115 = vrcp.pop %v2111
    %v2116 = vmul.f32 1.0, %v2115
    %v2117 = vrcp.pop %v2112
    %v2118 = vmul.f32 1.0, %v2117
    %v2119 = vrcp.pop %v2113
    %v2120 = vmul.f32 1.0, %v2119
    %v2121 = vrcp.pop %v2114
    %v2122 = vmul.f32 1.0, %v2121
    %v2123 = vmul.f32 %v2120, 2.0
    %v2124 = vsub.f32 %v2123, 1.0
    %v2125 = vmul.f32 %v2118, %v1881
    %v2126 = vmul.f32 %v2116, %v2124
    %v2127 = vadd.f32 %v2125, %v2126
    %v2128 = vtanh.pop %v2127
    %v2129 = vmul.f32 %v2122, %v2128
    %2130 = vst [vmem:[#allocation3 + $0x30] sm:$0xff] %v2129
    %v2131 = vld [vmem:[#allocation2 + $0xe0] sm:$0xff]
    %v2132 = vld [vmem:[#allocation2 + $0xe8] sm:$0xff]
    %v2133 = vld [vmem:[#allocation2 + $0xf0] sm:$0xff]
    %v2134 = vld [vmem:[#allocation2 + $0xf8] sm:$0xff]
    %v2135 = vld [vmem:[#allocation4] sm:$0xff]
    %v2136 = vld [vmem:[#allocation4 + $0x8] sm:$0xff]
    %v2137 = vld [vmem:[#allocation4 + $0x10] sm:$0xff]
    %v2138 = vld [vmem:[#allocation4 + $0x18] sm:$0xff]
    %v2139 = vld [vmem:[#allocation4 + $0x20] sm:$0xff]
    %v2140 = vld [vmem:[#allocation4 + $0x28] sm:$0xff]
    %v2141 = vld [vmem:[#allocation4 + $0x30] sm:$0xff]
    %v2142 = vld [vmem:[#allocation4 + $0x38] sm:$0xff]
    %v2143 = vld [vmem:[#allocation4 + $0x40] sm:$0xff]
    %v2144 = vld [vmem:[#allocation4 + $0x48] sm:$0xff]
    %v2145 = vld [vmem:[#allocation4 + $0x50] sm:$0xff]
    %v2146 = vld [vmem:[#allocation4 + $0x58] sm:$0xff]
    %v2147 = vld [vmem:[#allocation4 + $0x60] sm:$0xff]
    %v2148 = vld [vmem:[#allocation4 + $0x68] sm:$0xff]
    %v2149 = vld [vmem:[#allocation4 + $0x70] sm:$0xff]
    %v2150 = vld [vmem:[#allocation4 + $0x78] sm:$0xff]
    %v2151 = vld [vmem:[#allocation4 + $0x80] sm:$0xff]
    %v2152 = vld [vmem:[#allocation4 + $0x88] sm:$0xff]
    %v2153 = vld [vmem:[#allocation4 + $0x90] sm:$0xff]
    %v2154 = vld [vmem:[#allocation4 + $0x98] sm:$0xff]
    %v2155 = vld [vmem:[#allocation4 + $0xa0] sm:$0xff]
    %v2156 = vld [vmem:[#allocation4 + $0xa8] sm:$0xff]
    %v2157 = vld [vmem:[#allocation4 + $0xb0] sm:$0xff]
    %v2158 = vld [vmem:[#allocation4 + $0xb8] sm:$0xff]
    %v2159 = vld [vmem:[#allocation4 + $0xc0] sm:$0xff]
    %v2160 = vld [vmem:[#allocation4 + $0xc8] sm:$0xff]
    %v2161 = vld [vmem:[#allocation4 + $0xd0] sm:$0xff]
    %v2162 = vld [vmem:[#allocation4 + $0xd8] sm:$0xff]
    %v2163 = vld [vmem:[#allocation4 + $0xe0] sm:$0xff]
    %v2164 = vld [vmem:[#allocation4 + $0xe8] sm:$0xff]
    %v2165 = vld [vmem:[#allocation4 + $0xf0] sm:$0xff]
    %v2166 = vld [vmem:[#allocation4 + $0xf8] sm:$0xff]
    %v2167 = vld [vmem:[#allocation4 + $0x100] sm:$0xff]
    %v2168 = vld [vmem:[#allocation4 + $0x108] sm:$0xff]
    %v2169 = vld [vmem:[#allocation4 + $0x110] sm:$0xff]
    %v2170 = vld [vmem:[#allocation4 + $0x118] sm:$0xff]
    %v2171 = vld [vmem:[#allocation4 + $0x120] sm:$0xff]
    %v2172 = vld [vmem:[#allocation4 + $0x128] sm:$0xff]
    %v2173 = vld [vmem:[#allocation4 + $0x130] sm:$0xff]
    %v2174 = vld [vmem:[#allocation4 + $0x138] sm:$0xff]
    %v2175 = vld [vmem:[#allocation4 + $0x140] sm:$0xff]
    %v2176 = vld [vmem:[#allocation4 + $0x148] sm:$0xff]
    %v2177 = vld [vmem:[#allocation4 + $0x150] sm:$0xff]
    %v2178 = vld [vmem:[#allocation4 + $0x158] sm:$0xff]
    %v2179 = vld [vmem:[#allocation4 + $0x160] sm:$0xff]
    %v2180 = vld [vmem:[#allocation4 + $0x168] sm:$0xff]
    %v2181 = vld [vmem:[#allocation4 + $0x170] sm:$0xff]
    %v2182 = vld [vmem:[#allocation4 + $0x178] sm:$0xff]
    %v2183 = vld [vmem:[#allocation4 + $0x180] sm:$0xff]
    %v2184 = vld [vmem:[#allocation4 + $0x188] sm:$0xff]
    %v2185 = vld [vmem:[#allocation4 + $0x190] sm:$0xff]
    %v2186 = vld [vmem:[#allocation4 + $0x198] sm:$0xff]
    %v2187 = vld [vmem:[#allocation4 + $0x1a0] sm:$0xff]
    %v2188 = vld [vmem:[#allocation4 + $0x1a8] sm:$0xff]
    %v2189 = vld [vmem:[#allocation4 + $0x1b0] sm:$0xff]
    %v2190 = vld [vmem:[#allocation4 + $0x1b8] sm:$0xff]
    %v2191 = vld [vmem:[#allocation4 + $0x1c0] sm:$0xff]
    %v2192 = vld [vmem:[#allocation4 + $0x1c8] sm:$0xff]
    %v2193 = vld [vmem:[#allocation4 + $0x1d0] sm:$0xff]
    %v2194 = vld [vmem:[#allocation4 + $0x1d8] sm:$0xff]
    %v2195 = vld [vmem:[#allocation4 + $0x1e0] sm:$0xff]
    %v2196 = vld [vmem:[#allocation4 + $0x1e8] sm:$0xff]
    %v2197 = vld [vmem:[#allocation4 + $0x1f0] sm:$0xff]
    %v2198 = vld [vmem:[#allocation4 + $0x1f8] sm:$0xff]
    %2199 = vmatprep.subr.mxu0 %v2136
    %2200 = vmatpush1.msra.mxu0 %v2135
    %2201 = vmatprep.subr.mxu0 %v2140
    %2202 = vmatpush1.msra.mxu0 %v2139
    %2203 = vmatprep.subr.mxu0 %v2144
    %2204 = vmatpush1.msra.mxu0 %v2143
    %2205 = vmatprep.subr.mxu0 %v2148
    %2206 = vmatpush1.msra.mxu0 %v2147
    %2207 = vmatprep.subr.mxu0 %v2152
    %2208 = vmatpush1.msra.mxu0 %v2151
    %2209 = vmatprep.subr.mxu0 %v2156
    %2210 = vmatpush1.msra.mxu0 %v2155
    %2211 = vmatprep.subr.mxu0 %v2160
    %2212 = vmatpush1.msra.mxu0 %v2159
    %2213 = vmatprep.subr.mxu0 %v2164
    %2214 = vmatpush1.msra.mxu0 %v2163
    %2215 = vmatprep.subr.mxu0 %v2168
    %2216 = vmatpush1.msra.mxu0 %v2167
    %2217 = vmatprep.subr.mxu0 %v2172
    %2218 = vmatpush1.msra.mxu0 %v2171
    %2219 = vmatprep.subr.mxu0 %v2176
    %2220 = vmatpush1.msra.mxu0 %v2175
    %2221 = vmatprep.subr.mxu0 %v2180
    %2222 = vmatpush1.msra.mxu0 %v2179
    %2223 = vmatprep.subr.mxu0 %v2184
    %2224 = vmatpush1.msra.mxu0 %v2183
    %2225 = vmatprep.subr.mxu0 %v2188
    %2226 = vmatpush1.msra.mxu0 %v2187
    %2227 = vmatprep.subr.mxu0 %v2192
    %2228 = vmatpush1.msra.mxu0 %v2191
    %2229 = vmatprep.subr.mxu0 %v2196
    %2230 = vmatpush1.msra.mxu0 %v2195
    %2231 = vmatprep.subr.mxu0 0.0
    %2232 = vmatpush1.msra.mxu0 0.0
    %2233 = vmatprep.subr.mxu0 0.0
    %2234 = vmatpush1.msra.mxu0 0.0
    %2235 = vmatprep.subr.mxu0 0.0
    %2236 = vmatpush1.msra.mxu0 0.0
    %2237 = vmatprep.subr.mxu0 0.0
    %2238 = vmatpush1.msra.mxu0 0.0
    %2239 = vmatprep.subr.mxu0 0.0
    %2240 = vmatpush1.msra.mxu0 0.0
    %2241 = vmatprep.subr.mxu0 0.0
    %2242 = vmatpush1.msra.mxu0 0.0
    %2243 = vmatprep.subr.mxu0 0.0
    %2244 = vmatpush1.msra.mxu0 0.0
    %2245 = vmatprep.subr.mxu0 0.0
    %2246 = vmatpush1.msra.mxu0 0.0
    %2247 = vmatprep.subr.mxu0 0.0
    %2248 = vmatpush1.msra.mxu0 0.0
    %2249 = vmatprep.subr.mxu0 0.0
    %2250 = vmatpush1.msra.mxu0 0.0
    %2251 = vmatprep.subr.mxu0 0.0
    %2252 = vmatpush1.msra.mxu0 0.0
    %2253 = vmatprep.subr.mxu0 0.0
    %2254 = vmatpush1.msra.mxu0 0.0
    %2255 = vmatprep.subr.mxu0 0.0
    %2256 = vmatpush1.msra.mxu0 0.0
    %2257 = vmatprep.subr.mxu0 0.0
    %2258 = vmatpush1.msra.mxu0 0.0
    %2259 = vmatprep.subr.mxu0 0.0
    %2260 = vmatpush1.msra.mxu0 0.0
    %2261 = vmatprep.subr.mxu0 0.0
    %2262 = vmatpush1.msra.mxu0 0.0
    %2263 = vmatprep.mubr.f32.mxu0 0.0
    %2264 = vmatmul.mubr.f32.gmra.mrb[0].mxu0 %v2129
    %v2265 = vpop.f32.mrb[0].mxu0
    %v2266 = vadd.f32 0.0, %v2265
    %v2267 = vpop.f32.mrb[0].mxu0
    %v2268 = vadd.f32 0.0, %v2267
    %2269 = vdwg.mxu0
    %2270 = vmatprep.subr.mxu0 %v2138
    %2271 = vmatpush1.msra.mxu0 %v2137
    %2272 = vmatprep.subr.mxu0 %v2142
    %2273 = vmatpush1.msra.mxu0 %v2141
    %2274 = vmatprep.subr.mxu0 %v2146
    %2275 = vmatpush1.msra.mxu0 %v2145
    %2276 = vmatprep.subr.mxu0 %v2150
    %2277 = vmatpush1.msra.mxu0 %v2149
    %2278 = vmatprep.subr.mxu0 %v2154
    %2279 = vmatpush1.msra.mxu0 %v2153
    %2280 = vmatprep.subr.mxu0 %v2158
    %2281 = vmatpush1.msra.mxu0 %v2157
    %2282 = vmatprep.subr.mxu0 %v2162
    %2283 = vmatpush1.msra.mxu0 %v2161
    %2284 = vmatprep.subr.mxu0 %v2166
    %2285 = vmatpush1.msra.mxu0 %v2165
    %2286 = vmatprep.subr.mxu0 %v2170
    %2287 = vmatpush1.msra.mxu0 %v2169
    %2288 = vmatprep.subr.mxu0 %v2174
    %2289 = vmatpush1.msra.mxu0 %v2173
    %2290 = vmatprep.subr.mxu0 %v2178
    %2291 = vmatpush1.msra.mxu0 %v2177
    %2292 = vmatprep.subr.mxu0 %v2182
    %2293 = vmatpush1.msra.mxu0 %v2181
    %2294 = vmatprep.subr.mxu0 %v2186
    %2295 = vmatpush1.msra.mxu0 %v2185
    %2296 = vmatprep.subr.mxu0 %v2190
    %2297 = vmatpush1.msra.mxu0 %v2189
    %2298 = vmatprep.subr.mxu0 %v2194
    %2299 = vmatpush1.msra.mxu0 %v2193
    %2300 = vmatprep.subr.mxu0 %v2198
    %2301 = vmatpush1.msra.mxu0 %v2197
    %2302 = vmatprep.subr.mxu0 0.0
    %2303 = vmatpush1.msra.mxu0 0.0
    %2304 = vmatprep.subr.mxu0 0.0
    %2305 = vmatpush1.msra.mxu0 0.0
    %2306 = vmatprep.subr.mxu0 0.0
    %2307 = vmatpush1.msra.mxu0 0.0
    %2308 = vmatprep.subr.mxu0 0.0
    %2309 = vmatpush1.msra.mxu0 0.0
    %2310 = vmatprep.subr.mxu0 0.0
    %2311 = vmatpush1.msra.mxu0 0.0
    %2312 = vmatprep.subr.mxu0 0.0
    %2313 = vmatpush1.msra.mxu0 0.0
    %2314 = vmatprep.subr.mxu0 0.0
    %2315 = vmatpush1.msra.mxu0 0.0
    %2316 = vmatprep.subr.mxu0 0.0
    %2317 = vmatpush1.msra.mxu0 0.0
    %2318 = vmatprep.subr.mxu0 0.0
    %2319 = vmatpush1.msra.mxu0 0.0
    %2320 = vmatprep.subr.mxu0 0.0
    %2321 = vmatpush1.msra.mxu0 0.0
    %2322 = vmatprep.subr.mxu0 0.0
    %2323 = vmatpush1.msra.mxu0 0.0
    %2324 = vmatprep.subr.mxu0 0.0
    %2325 = vmatpush1.msra.mxu0 0.0
    %2326 = vmatprep.subr.mxu0 0.0
    %2327 = vmatpush1.msra.mxu0 0.0
    %2328 = vmatprep.subr.mxu0 0.0
    %2329 = vmatpush1.msra.mxu0 0.0
    %2330 = vmatprep.subr.mxu0 0.0
    %2331 = vmatpush1.msra.mxu0 0.0
    %2332 = vmatprep.subr.mxu0 0.0
    %2333 = vmatpush1.msra.mxu0 0.0
    %2334 = vmatprep.mubr.f32.mxu0 0.0
    %2335 = vmatmul.mubr.f32.gmra.mrb[0].mxu0 %v2129
    %v2336 = vpop.f32.mrb[0].mxu0
    %v2337 = vadd.f32 0.0, %v2336
    %v2338 = vpop.f32.mrb[0].mxu0
    %v2339 = vadd.f32 0.0, %v2338
    %2340 = vdwg.mxu0
    %v2341 = vadd.f32 %v2131, %v2266
    %v2342 = vadd.f32 %v2132, %v2268
    %v2343 = vadd.f32 %v2133, %v2337
    %v2344 = vadd.f32 %v2134, %v2339
    %v2345 = vxor.u32 %v2341, 2147483648
    %v2346 = vxor.u32 %v2342, 2147483648
    %v2347 = vxor.u32 %v2343, 2147483648
    %v2348 = vxor.u32 %v2344, 2147483648
    %v2349 = vmul.f32 %v2345, 1.442695
    %v2350 = vpow.pop %v2349
    %v2351 = vmul.f32 %v2346, 1.442695
    %v2352 = vpow.pop %v2351
    %v2353 = vmul.f32 %v2347, 1.442695
    %v2354 = vpow.pop %v2353
    %v2355 = vmul.f32 %v2348, 1.442695
    %v2356 = vpow.pop %v2355
    %v2357 = vadd.f32 %v2350, 1.0
    %v2358 = vadd.f32 %v2352, 1.0
    %v2359 = vadd.f32 %v2354, 1.0
    %v2360 = vadd.f32 %v2356, 1.0
    %v2361 = vrcp.pop %v2357
    %v2362 = vmul.f32 1.0, %v2361
    %v2363 = vrcp.pop %v2358
    %v2364 = vmul.f32 1.0, %v2363
    %v2365 = vrcp.pop %v2359
    %v2366 = vmul.f32 1.0, %v2365
    %v2367 = vrcp.pop %v2360
    %v2368 = vmul.f32 1.0, %v2367
    %v2369 = vmul.f32 %v2366, 2.0
    %v2370 = vsub.f32 %v2369, 1.0
    %v2371 = vmul.f32 %v2364, %v2127
    %v2372 = vmul.f32 %v2362, %v2370
    %v2373 = vadd.f32 %v2371, %v2372
    %v2374 = vtanh.pop %v2373
    %v2375 = vmul.f32 %v2368, %v2374
    %2376 = vst [vmem:[#allocation3 + $0x38] sm:$0xff] %v2375
    %v2377 = vld [vmem:[#allocation3] sm:$0xff]
    %v2378 = vld [vmem:[#allocation3 + $0x8] sm:$0xff]
    %v2379 = vld [vmem:[#allocation3 + $0x10] sm:$0xff]
    %v2380 = vld [vmem:[#allocation3 + $0x18] sm:$0xff]
    %v2381 = vld [vmem:[#allocation3 + $0x20] sm:$0xff]
    %v2382 = vld [vmem:[#allocation3 + $0x28] sm:$0xff]
    %v2383 = vld [vmem:[#allocation3 + $0x30] sm:$0xff]
    %v2384 = vld [vmem:[#allocation3 + $0x38] sm:$0xff]
    %v2385 = vld [vmem:[#allocation7] sm:$0xff]
    %v2386 = vld [vmem:[#allocation7 + $0x8] sm:$0xff]
    %v2387 = vld [vmem:[#allocation7 + $0x10] sm:$0xff]
    %v2388 = vld [vmem:[#allocation7 + $0x18] sm:$0xff]
    %v2389 = vld [vmem:[#allocation7 + $0x20] sm:$0xff]
    %v2390 = vld [vmem:[#allocation7 + $0x28] sm:$0xff]
    %v2391 = vld [vmem:[#allocation7 + $0x30] sm:$0xff]
    %v2392 = vld [vmem:[#allocation7 + $0x38] sm:$0xff]
    %v2393 = vld [vmem:[#allocation7 + $0x40] sm:$0xff]
    %v2394 = vld [vmem:[#allocation7 + $0x48] sm:$0xff]
    %v2395 = vld [vmem:[#allocation7 + $0x50] sm:$0xff]
    %v2396 = vld [vmem:[#allocation7 + $0x58] sm:$0xff]
    %v2397 = vld [vmem:[#allocation7 + $0x60] sm:$0xff]
    %v2398 = vld [vmem:[#allocation7 + $0x68] sm:$0xff]
    %v2399 = vld [vmem:[#allocation7 + $0x70] sm:$0xff]
    %v2400 = vld [vmem:[#allocation7 + $0x78] sm:$0xff]
    %v2401 = vld [vmem:[#allocation7 + $0x80] sm:$0xff]
    %v2402 = vld [vmem:[#allocation7 + $0x88] sm:$0xff]
    %v2403 = vld [vmem:[#allocation7 + $0x90] sm:$0xff]
    %v2404 = vld [vmem:[#allocation7 + $0x98] sm:$0xff]
    %v2405 = vld [vmem:[#allocation7 + $0xa0] sm:$0xff]
    %v2406 = vld [vmem:[#allocation7 + $0xa8] sm:$0xff]
    %v2407 = vld [vmem:[#allocation7 + $0xb0] sm:$0xff]
    %v2408 = vld [vmem:[#allocation7 + $0xb8] sm:$0xff]
    %v2409 = vld [vmem:[#allocation7 + $0xc0] sm:$0xff]
    %v2410 = vld [vmem:[#allocation7 + $0xc8] sm:$0xff]
    %v2411 = vld [vmem:[#allocation7 + $0xd0] sm:$0xff]
    %v2412 = vld [vmem:[#allocation7 + $0xd8] sm:$0xff]
    %v2413 = vld [vmem:[#allocation7 + $0xe0] sm:$0xff]
    %v2414 = vld [vmem:[#allocation7 + $0xe8] sm:$0xff]
    %v2415 = vld [vmem:[#allocation7 + $0xf0] sm:$0xff]
    %v2416 = vld [vmem:[#allocation7 + $0xf8] sm:$0xff]
    %v2417 = vld [vmem:[#allocation7 + $0x100] sm:$0xff]
    %v2418 = vld [vmem:[#allocation7 + $0x108] sm:$0xff]
    %v2419 = vld [vmem:[#allocation7 + $0x110] sm:$0xff]
    %v2420 = vld [vmem:[#allocation7 + $0x118] sm:$0xff]
    %v2421 = vld [vmem:[#allocation7 + $0x120] sm:$0xff]
    %v2422 = vld [vmem:[#allocation7 + $0x128] sm:$0xff]
    %v2423 = vld [vmem:[#allocation7 + $0x130] sm:$0xff]
    %v2424 = vld [vmem:[#allocation7 + $0x138] sm:$0xff]
    %v2425 = vld [vmem:[#allocation7 + $0x140] sm:$0xff]
    %v2426 = vld [vmem:[#allocation7 + $0x148] sm:$0xff]
    %v2427 = vld [vmem:[#allocation7 + $0x150] sm:$0xff]
    %v2428 = vld [vmem:[#allocation7 + $0x158] sm:$0xff]
    %v2429 = vld [vmem:[#allocation7 + $0x160] sm:$0xff]
    %v2430 = vld [vmem:[#allocation7 + $0x168] sm:$0xff]
    %v2431 = vld [vmem:[#allocation7 + $0x170] sm:$0xff]
    %v2432 = vld [vmem:[#allocation7 + $0x178] sm:$0xff]
    %v2433 = vld [vmem:[#allocation7 + $0x180] sm:$0xff]
    %v2434 = vld [vmem:[#allocation7 + $0x188] sm:$0xff]
    %v2435 = vld [vmem:[#allocation7 + $0x190] sm:$0xff]
    %v2436 = vld [vmem:[#allocation7 + $0x198] sm:$0xff]
    %v2437 = vld [vmem:[#allocation7 + $0x1a0] sm:$0xff]
    %v2438 = vld [vmem:[#allocation7 + $0x1a8] sm:$0xff]
    %v2439 = vld [vmem:[#allocation7 + $0x1b0] sm:$0xff]
    %v2440 = vld [vmem:[#allocation7 + $0x1b8] sm:$0xff]
    %v2441 = vld [vmem:[#allocation7 + $0x1c0] sm:$0xff]
    %v2442 = vld [vmem:[#allocation7 + $0x1c8] sm:$0xff]
    %v2443 = vld [vmem:[#allocation7 + $0x1d0] sm:$0xff]
    %v2444 = vld [vmem:[#allocation7 + $0x1d8] sm:$0xff]
    %v2445 = vld [vmem:[#allocation7 + $0x1e0] sm:$0xff]
    %v2446 = vld [vmem:[#allocation7 + $0x1e8] sm:$0xff]
    %v2447 = vld [vmem:[#allocation7 + $0x1f0] sm:$0xff]
    %v2448 = vld [vmem:[#allocation7 + $0x1f8] sm:$0xff]
    %v2449 = vld [vmem:[%s6] sm:$0xf]
    %v2451 = vlaneseq
    %v2452 = vshrl.u32 %v2451, 7
    %v2453 = vsub.s32 0, %v2452
    %v2454 = vrot.slane %v2449, %v2453
    %v2455 = vlaneseq
    %v2456 = vshrl.u32 %v2455, 7
    %v2457 = vsub.s32 1, %v2456
    %v2458 = vrot.slane %v2449, %v2457
    %v2459 = vlaneseq
    %v2460 = vshrl.u32 %v2459, 7
    %v2461 = vsub.s32 2, %v2460
    %v2462 = vrot.slane %v2449, %v2461
    %v2463 = vlaneseq
    %v2464 = vshrl.u32 %v2463, 7
    %v2465 = vsub.s32 3, %v2464
    %v2466 = vrot.slane %v2449, %v2465
    %2471 = vmatprep.subr.mxu0 %v2386
    %2472 = vmatpush1.msra.mxu0 %v2385
    %2473 = vmatprep.subr.mxu0 %v2390
    %2474 = vmatpush1.msra.mxu0 %v2389
    %2475 = vmatprep.subr.mxu0 %v2394
    %2476 = vmatpush1.msra.mxu0 %v2393
    %2477 = vmatprep.subr.mxu0 %v2398
    %2478 = vmatpush1.msra.mxu0 %v2397
    %2479 = vmatprep.subr.mxu0 %v2402
    %2480 = vmatpush1.msra.mxu0 %v2401
    %2481 = vmatprep.subr.mxu0 %v2406
    %2482 = vmatpush1.msra.mxu0 %v2405
    %2483 = vmatprep.subr.mxu0 %v2410
    %2484 = vmatpush1.msra.mxu0 %v2409
    %2485 = vmatprep.subr.mxu0 %v2414
    %2486 = vmatpush1.msra.mxu0 %v2413
    %2487 = vmatprep.subr.mxu0 %v2418
    %2488 = vmatpush1.msra.mxu0 %v2417
    %2489 = vmatprep.subr.mxu0 %v2422
    %2490 = vmatpush1.msra.mxu0 %v2421
    %2491 = vmatprep.subr.mxu0 %v2426
    %2492 = vmatpush1.msra.mxu0 %v2425
    %2493 = vmatprep.subr.mxu0 %v2430
    %2494 = vmatpush1.msra.mxu0 %v2429
    %2495 = vmatprep.subr.mxu0 %v2434
    %2496 = vmatpush1.msra.mxu0 %v2433
    %2497 = vmatprep.subr.mxu0 %v2438
    %2498 = vmatpush1.msra.mxu0 %v2437
    %2499 = vmatprep.subr.mxu0 %v2442
    %2500 = vmatpush1.msra.mxu0 %v2441
    %2501 = vmatprep.subr.mxu0 %v2446
    %2502 = vmatpush1.msra.mxu0 %v2445
    %2503 = vmatprep.subr.mxu0 0.0
    %2504 = vmatpush1.msra.mxu0 0.0
    %2505 = vmatprep.subr.mxu0 0.0
    %2506 = vmatpush1.msra.mxu0 0.0
    %2507 = vmatprep.subr.mxu0 0.0
    %2508 = vmatpush1.msra.mxu0 0.0
    %2509 = vmatprep.subr.mxu0 0.0
    %2510 = vmatpush1.msra.mxu0 0.0
    %2511 = vmatprep.subr.mxu0 0.0
    %2512 = vmatpush1.msra.mxu0 0.0
    %2513 = vmatprep.subr.mxu0 0.0
    %2514 = vmatpush1.msra.mxu0 0.0
    %2515 = vmatprep.subr.mxu0 0.0
    %2516 = vmatpush1.msra.mxu0 0.0
    %2517 = vmatprep.subr.mxu0 0.0
    %2518 = vmatpush1.msra.mxu0 0.0
    %2519 = vmatprep.subr.mxu0 0.0
    %2520 = vmatpush1.msra.mxu0 0.0
    %2521 = vmatprep.subr.mxu0 0.0
    %2522 = vmatpush1.msra.mxu0 0.0
    %2523 = vmatprep.subr.mxu0 0.0
    %2524 = vmatpush1.msra.mxu0 0.0
    %2525 = vmatprep.subr.mxu0 0.0
    %2526 = vmatpush1.msra.mxu0 0.0
    %2527 = vmatprep.subr.mxu0 0.0
    %2528 = vmatpush1.msra.mxu0 0.0
    %2529 = vmatprep.subr.mxu0 0.0
    %2530 = vmatpush1.msra.mxu0 0.0
    %2531 = vmatprep.subr.mxu0 0.0
    %2532 = vmatpush1.msra.mxu0 0.0
    %2533 = vmatprep.subr.mxu0 0.0
    %2534 = vmatpush1.msra.mxu0 0.0
    %2535 = vmatprep.mubr.f32.mxu0 0.0
    %2536 = vmatmul.mubr.f32.gmra.mrb[0].mxu0 %v2377
    %v2537 = vpop.f32.mrb[0].mxu0
    %v2538 = vadd.f32 %v2454, %v2537
    %v2539 = vpop.f32.mrb[0].mxu0
    %v2540 = vadd.f32 %v2458, %v2539
    %2541 = vmatprep.mubr.f32.mxu0 0.0
    %2542 = vmatmul.mubr.f32.gmra.mrb[0].mxu0 %v2378
    %v2543 = vpop.f32.mrb[0].mxu0
    %v2544 = vadd.f32 %v2454, %v2543
    %v2545 = vpop.f32.mrb[0].mxu0
    %v2546 = vadd.f32 %v2458, %v2545
    %2547 = vmatprep.mubr.f32.mxu0 0.0
    %2548 = vmatmul.mubr.f32.gmra.mrb[0].mxu0 %v2379
    %v2549 = vpop.f32.mrb[0].mxu0
    %v2550 = vadd.f32 %v2454, %v2549
    %v2551 = vpop.f32.mrb[0].mxu0
    %v2552 = vadd.f32 %v2458, %v2551
    %2553 = vmatprep.mubr.f32.mxu0 0.0
    %2554 = vmatmul.mubr.f32.gmra.mrb[0].mxu0 %v2380
    %v2555 = vpop.f32.mrb[0].mxu0
    %v2556 = vadd.f32 %v2454, %v2555
    %v2557 = vpop.f32.mrb[0].mxu0
    %v2558 = vadd.f32 %v2458, %v2557
    %2559 = vmatprep.mubr.f32.mxu0 0.0
    %2560 = vmatmul.mubr.f32.gmra.mrb[0].mxu0 %v2381
    %v2561 = vpop.f32.mrb[0].mxu0
    %v2562 = vadd.f32 %v2454, %v2561
    %v2563 = vpop.f32.mrb[0].mxu0
    %v2564 = vadd.f32 %v2458, %v2563
    %2565 = vmatprep.mubr.f32.mxu0 0.0
    %2566 = vmatmul.mubr.f32.gmra.mrb[0].mxu0 %v2382
    %v2567 = vpop.f32.mrb[0].mxu0
    %v2568 = vadd.f32 %v2454, %v2567
    %v2569 = vpop.f32.mrb[0].mxu0
    %v2570 = vadd.f32 %v2458, %v2569
    %2571 = vmatprep.mubr.f32.mxu0 0.0
    %2572 = vmatmul.mubr.f32.gmra.mrb[0].mxu0 %v2383
    %v2573 = vpop.f32.mrb[0].mxu0
    %v2574 = vadd.f32 %v2454, %v2573
    %v2575 = vpop.f32.mrb[0].mxu0
    %v2576 = vadd.f32 %v2458, %v2575
    %2577 = vmatprep.mubr.f32.mxu0 0.0
    %2578 = vmatmul.mubr.f32.gmra.mrb[0].mxu0 %v2384
    %v2579 = vpop.f32.mrb[0].mxu0
    %v2580 = vadd.f32 %v2454, %v2579
    %v2581 = vpop.f32.mrb[0].mxu0
    %v2582 = vadd.f32 %v2458, %v2581
    %2583 = vdwg.mxu0
    %2584 = vmatprep.subr.mxu0 %v2388
    %2585 = vmatpush1.msra.mxu0 %v2387
    %2586 = vmatprep.subr.mxu0 %v2392
    %2587 = vmatpush1.msra.mxu0 %v2391
    %2588 = vmatprep.subr.mxu0 %v2396
    %2589 = vmatpush1.msra.mxu0 %v2395
    %2590 = vmatprep.subr.mxu0 %v2400
    %2591 = vmatpush1.msra.mxu0 %v2399
    %2592 = vmatprep.subr.mxu0 %v2404
    %2593 = vmatpush1.msra.mxu0 %v2403
    %2594 = vmatprep.subr.mxu0 %v2408
    %2595 = vmatpush1.msra.mxu0 %v2407
    %2596 = vmatprep.subr.mxu0 %v2412
    %2597 = vmatpush1.msra.mxu0 %v2411
    %2598 = vmatprep.subr.mxu0 %v2416
    %2599 = vmatpush1.msra.mxu0 %v2415
    %2600 = vmatprep.subr.mxu0 %v2420
    %2601 = vmatpush1.msra.mxu0 %v2419
    %2602 = vmatprep.subr.mxu0 %v2424
    %2603 = vmatpush1.msra.mxu0 %v2423
    %2604 = vmatprep.subr.mxu0 %v2428
    %2605 = vmatpush1.msra.mxu0 %v2427
    %2606 = vmatprep.subr.mxu0 %v2432
    %2607 = vmatpush1.msra.mxu0 %v2431
    %2608 = vmatprep.subr.mxu0 %v2436
    %2609 = vmatpush1.msra.mxu0 %v2435
    %2610 = vmatprep.subr.mxu0 %v2440
    %2611 = vmatpush1.msra.mxu0 %v2439
    %2612 = vmatprep.subr.mxu0 %v2444
    %2613 = vmatpush1.msra.mxu0 %v2443
    %2614 = vmatprep.subr.mxu0 %v2448
    %2615 = vmatpush1.msra.mxu0 %v2447
    %2616 = vmatprep.subr.mxu0 0.0
    %2617 = vmatpush1.msra.mxu0 0.0
    %2618 = vmatprep.subr.mxu0 0.0
    %2619 = vmatpush1.msra.mxu0 0.0
    %2620 = vmatprep.subr.mxu0 0.0
    %2621 = vmatpush1.msra.mxu0 0.0
    %2622 = vmatprep.subr.mxu0 0.0
    %2623 = vmatpush1.msra.mxu0 0.0
    %2624 = vmatprep.subr.mxu0 0.0
    %2625 = vmatpush1.msra.mxu0 0.0
    %2626 = vmatprep.subr.mxu0 0.0
    %2627 = vmatpush1.msra.mxu0 0.0
    %2628 = vmatprep.subr.mxu0 0.0
    %2629 = vmatpush1.msra.mxu0 0.0
    %2630 = vmatprep.subr.mxu0 0.0
    %2631 = vmatpush1.msra.mxu0 0.0
    %2632 = vmatprep.subr.mxu0 0.0
    %2633 = vmatpush1.msra.mxu0 0.0
    %2634 = vmatprep.subr.mxu0 0.0
    %2635 = vmatpush1.msra.mxu0 0.0
    %2636 = vmatprep.subr.mxu0 0.0
    %2637 = vmatpush1.msra.mxu0 0.0
    %2638 = vmatprep.subr.mxu0 0.0
    %2639 = vmatpush1.msra.mxu0 0.0
    %2640 = vmatprep.subr.mxu0 0.0
    %2641 = vmatpush1.msra.mxu0 0.0
    %2642 = vmatprep.subr.mxu0 0.0
    %2643 = vmatpush1.msra.mxu0 0.0
    %2644 = vmatprep.subr.mxu0 0.0
    %2645 = vmatpush1.msra.mxu0 0.0
    %2646 = vmatprep.subr.mxu0 0.0
    %2647 = vmatpush1.msra.mxu0 0.0
    %2648 = vmatprep.mubr.f32.mxu0 0.0
    %2649 = vmatmul.mubr.f32.gmra.mrb[0].mxu0 %v2377
    %v2650 = vpop.f32.mrb[0].mxu0
    %v2651 = vadd.f32 %v2462, %v2650
    %v2652 = vpop.f32.mrb[0].mxu0
    %v2653 = vadd.f32 %v2466, %v2652
    %2654 = vmatprep.mubr.f32.mxu0 0.0
    %2655 = vmatmul.mubr.f32.gmra.mrb[0].mxu0 %v2378
    %v2656 = vpop.f32.mrb[0].mxu0
    %v2657 = vadd.f32 %v2462, %v2656
    %v2658 = vpop.f32.mrb[0].mxu0
    %v2659 = vadd.f32 %v2466, %v2658
    %2660 = vmatprep.mubr.f32.mxu0 0.0
    %2661 = vmatmul.mubr.f32.gmra.mrb[0].mxu0 %v2379
    %v2662 = vpop.f32.mrb[0].mxu0
    %v2663 = vadd.f32 %v2462, %v2662
    %v2664 = vpop.f32.mrb[0].mxu0
    %v2665 = vadd.f32 %v2466, %v2664
    %2666 = vmatprep.mubr.f32.mxu0 0.0
    %2667 = vmatmul.mubr.f32.gmra.mrb[0].mxu0 %v2380
    %v2668 = vpop.f32.mrb[0].mxu0
    %v2669 = vadd.f32 %v2462, %v2668
    %v2670 = vpop.f32.mrb[0].mxu0
    %v2671 = vadd.f32 %v2466, %v2670
    %2672 = vmatprep.mubr.f32.mxu0 0.0
    %2673 = vmatmul.mubr.f32.gmra.mrb[0].mxu0 %v2381
    %v2674 = vpop.f32.mrb[0].mxu0
    %v2675 = vadd.f32 %v2462, %v2674
    %v2676 = vpop.f32.mrb[0].mxu0
    %v2677 = vadd.f32 %v2466, %v2676
    %2678 = vmatprep.mubr.f32.mxu0 0.0
    %2679 = vmatmul.mubr.f32.gmra.mrb[0].mxu0 %v2382
    %v2680 = vpop.f32.mrb[0].mxu0
    %v2681 = vadd.f32 %v2462, %v2680
    %v2682 = vpop.f32.mrb[0].mxu0
    %v2683 = vadd.f32 %v2466, %v2682
    %2684 = vmatprep.mubr.f32.mxu0 0.0
    %2685 = vmatmul.mubr.f32.gmra.mrb[0].mxu0 %v2383
    %v2686 = vpop.f32.mrb[0].mxu0
    %v2687 = vadd.f32 %v2462, %v2686
    %v2688 = vpop.f32.mrb[0].mxu0
    %v2689 = vadd.f32 %v2466, %v2688
    %2690 = vmatprep.mubr.f32.mxu0 0.0
    %2691 = vmatmul.mubr.f32.gmra.mrb[0].mxu0 %v2384
    %v2692 = vpop.f32.mrb[0].mxu0
    %v2693 = vadd.f32 %v2462, %v2692
    %v2694 = vpop.f32.mrb[0].mxu0
    %v2695 = vadd.f32 %v2466, %v2694
    %2696 = vdwg.mxu0
    %2697 = vst [vmem:[#allocation2] sm:$0xff] %v2538
    %2698 = vst [vmem:[#allocation2 + $0x8] sm:$0xff] %v2540
    %2699 = vst [vmem:[#allocation2 + $0x10] sm:$0xff] %v2651
    %2700 = vst [vmem:[#allocation2 + $0x18] sm:$0xff] %v2653
    %2701 = vst [vmem:[#allocation2 + $0x20] sm:$0xff] %v2544
    %2702 = vst [vmem:[#allocation2 + $0x28] sm:$0xff] %v2546
    %2703 = vst [vmem:[#allocation2 + $0x30] sm:$0xff] %v2657
    %2704 = vst [vmem:[#allocation2 + $0x38] sm:$0xff] %v2659
    %2705 = vst [vmem:[#allocation2 + $0x40] sm:$0xff] %v2550
    %2706 = vst [vmem:[#allocation2 + $0x48] sm:$0xff] %v2552
    %2707 = vst [vmem:[#allocation2 + $0x50] sm:$0xff] %v2663
    %2708 = vst [vmem:[#allocation2 + $0x58] sm:$0xff] %v2665
    %2709 = vst [vmem:[#allocation2 + $0x60] sm:$0xff] %v2556
    %2710 = vst [vmem:[#allocation2 + $0x68] sm:$0xff] %v2558
    %2711 = vst [vmem:[#allocation2 + $0x70] sm:$0xff] %v2669
    %2712 = vst [vmem:[#allocation2 + $0x78] sm:$0xff] %v2671
    %2713 = vst [vmem:[#allocation2 + $0x80] sm:$0xff] %v2562
    %2714 = vst [vmem:[#allocation2 + $0x88] sm:$0xff] %v2564
    %2715 = vst [vmem:[#allocation2 + $0x90] sm:$0xff] %v2675
    %2716 = vst [vmem:[#allocation2 + $0x98] sm:$0xff] %v2677
    %2717 = vst [vmem:[#allocation2 + $0xa0] sm:$0xff] %v2568
    %2718 = vst [vmem:[#allocation2 + $0xa8] sm:$0xff] %v2570
    %2719 = vst [vmem:[#allocation2 + $0xb0] sm:$0xff] %v2681
    %2720 = vst [vmem:[#allocation2 + $0xb8] sm:$0xff] %v2683
    %2721 = vst [vmem:[#allocation2 + $0xc0] sm:$0xff] %v2574
    %2722 = vst [vmem:[#allocation2 + $0xc8] sm:$0xff] %v2576
    %2723 = vst [vmem:[#allocation2 + $0xd0] sm:$0xff] %v2687
    %2724 = vst [vmem:[#allocation2 + $0xd8] sm:$0xff] %v2689
    %2725 = vst [vmem:[#allocation2 + $0xe0] sm:$0xff] %v2580
    %2726 = vst [vmem:[#allocation2 + $0xe8] sm:$0xff] %v2582
    %2727 = vst [vmem:[#allocation2 + $0xf0] sm:$0xff] %v2693
    %2728 = vst [vmem:[#allocation2 + $0xf8] sm:$0xff] %v2695
    %v2729 = vld [vmem:[#allocation2] sm:$0xff]
    %v2730 = vld [vmem:[#allocation2 + $0x8] sm:$0xff]
    %v2731 = vld [vmem:[#allocation2 + $0x10] sm:$0xff]
    %v2732 = vld [vmem:[#allocation2 + $0x18] sm:$0xff]
    %v2733 = vld [vmem:[#allocation9] sm:$0xff]
    %v2734 = vld [vmem:[#allocation9 + $0x8] sm:$0xff]
    %v2735 = vld [vmem:[#allocation9 + $0x10] sm:$0xff]
    %v2736 = vld [vmem:[#allocation9 + $0x18] sm:$0xff]
    %v2737 = vld [vmem:[#allocation9 + $0x20] sm:$0xff]
    %v2738 = vld [vmem:[#allocation9 + $0x28] sm:$0xff]
    %v2739 = vld [vmem:[#allocation9 + $0x30] sm:$0xff]
    %v2740 = vld [vmem:[#allocation9 + $0x38] sm:$0xff]
    %v2741 = vld [vmem:[#allocation9 + $0x40] sm:$0xff]
    %v2742 = vld [vmem:[#allocation9 + $0x48] sm:$0xff]
    %v2743 = vld [vmem:[#allocation9 + $0x50] sm:$0xff]
    %v2744 = vld [vmem:[#allocation9 + $0x58] sm:$0xff]
    %v2745 = vld [vmem:[#allocation9 + $0x60] sm:$0xff]
    %v2746 = vld [vmem:[#allocation9 + $0x68] sm:$0xff]
    %v2747 = vld [vmem:[#allocation9 + $0x70] sm:$0xff]
    %v2748 = vld [vmem:[#allocation9 + $0x78] sm:$0xff]
    %v2749 = vld [vmem:[#allocation9 + $0x80] sm:$0xff]
    %v2750 = vld [vmem:[#allocation9 + $0x88] sm:$0xff]
    %v2751 = vld [vmem:[#allocation9 + $0x90] sm:$0xff]
    %v2752 = vld [vmem:[#allocation9 + $0x98] sm:$0xff]
    %v2753 = vld [vmem:[#allocation9 + $0xa0] sm:$0xff]
    %v2754 = vld [vmem:[#allocation9 + $0xa8] sm:$0xff]
    %v2755 = vld [vmem:[#allocation9 + $0xb0] sm:$0xff]
    %v2756 = vld [vmem:[#allocation9 + $0xb8] sm:$0xff]
    %v2757 = vld [vmem:[#allocation9 + $0xc0] sm:$0xff]
    %v2758 = vld [vmem:[#allocation9 + $0xc8] sm:$0xff]
    %v2759 = vld [vmem:[#allocation9 + $0xd0] sm:$0xff]
    %v2760 = vld [vmem:[#allocation9 + $0xd8] sm:$0xff]
    %v2761 = vld [vmem:[#allocation9 + $0xe0] sm:$0xff]
    %v2762 = vld [vmem:[#allocation9 + $0xe8] sm:$0xff]
    %v2763 = vld [vmem:[#allocation9 + $0xf0] sm:$0xff]
    %v2764 = vld [vmem:[#allocation9 + $0xf8] sm:$0xff]
    %v2765 = vld [vmem:[#allocation9 + $0x100] sm:$0xff]
    %v2766 = vld [vmem:[#allocation9 + $0x108] sm:$0xff]
    %v2767 = vld [vmem:[#allocation9 + $0x110] sm:$0xff]
    %v2768 = vld [vmem:[#allocation9 + $0x118] sm:$0xff]
    %v2769 = vld [vmem:[#allocation9 + $0x120] sm:$0xff]
    %v2770 = vld [vmem:[#allocation9 + $0x128] sm:$0xff]
    %v2771 = vld [vmem:[#allocation9 + $0x130] sm:$0xff]
    %v2772 = vld [vmem:[#allocation9 + $0x138] sm:$0xff]
    %v2773 = vld [vmem:[#allocation9 + $0x140] sm:$0xff]
    %v2774 = vld [vmem:[#allocation9 + $0x148] sm:$0xff]
    %v2775 = vld [vmem:[#allocation9 + $0x150] sm:$0xff]
    %v2776 = vld [vmem:[#allocation9 + $0x158] sm:$0xff]
    %v2777 = vld [vmem:[#allocation9 + $0x160] sm:$0xff]
    %v2778 = vld [vmem:[#allocation9 + $0x168] sm:$0xff]
    %v2779 = vld [vmem:[#allocation9 + $0x170] sm:$0xff]
    %v2780 = vld [vmem:[#allocation9 + $0x178] sm:$0xff]
    %v2781 = vld [vmem:[#allocation9 + $0x180] sm:$0xff]
    %v2782 = vld [vmem:[#allocation9 + $0x188] sm:$0xff]
    %v2783 = vld [vmem:[#allocation9 + $0x190] sm:$0xff]
    %v2784 = vld [vmem:[#allocation9 + $0x198] sm:$0xff]
    %v2785 = vld [vmem:[#allocation9 + $0x1a0] sm:$0xff]
    %v2786 = vld [vmem:[#allocation9 + $0x1a8] sm:$0xff]
    %v2787 = vld [vmem:[#allocation9 + $0x1b0] sm:$0xff]
    %v2788 = vld [vmem:[#allocation9 + $0x1b8] sm:$0xff]
    %v2789 = vld [vmem:[#allocation9 + $0x1c0] sm:$0xff]
    %v2790 = vld [vmem:[#allocation9 + $0x1c8] sm:$0xff]
    %v2791 = vld [vmem:[#allocation9 + $0x1d0] sm:$0xff]
    %v2792 = vld [vmem:[#allocation9 + $0x1d8] sm:$0xff]
    %v2793 = vld [vmem:[#allocation9 + $0x1e0] sm:$0xff]
    %v2794 = vld [vmem:[#allocation9 + $0x1e8] sm:$0xff]
    %v2795 = vld [vmem:[#allocation9 + $0x1f0] sm:$0xff]
    %v2796 = vld [vmem:[#allocation9 + $0x1f8] sm:$0xff]
    %2797 = vmatprep.subr.mxu0 %v2734
    %2798 = vmatpush1.msra.mxu0 %v2733
    %2799 = vmatprep.subr.mxu0 %v2738
    %2800 = vmatpush1.msra.mxu0 %v2737
    %2801 = vmatprep.subr.mxu0 %v2742
    %2802 = vmatpush1.msra.mxu0 %v2741
    %2803 = vmatprep.subr.mxu0 %v2746
    %2804 = vmatpush1.msra.mxu0 %v2745
    %2805 = vmatprep.subr.mxu0 %v2750
    %2806 = vmatpush1.msra.mxu0 %v2749
    %2807 = vmatprep.subr.mxu0 %v2754
    %2808 = vmatpush1.msra.mxu0 %v2753
    %2809 = vmatprep.subr.mxu0 %v2758
    %2810 = vmatpush1.msra.mxu0 %v2757
    %2811 = vmatprep.subr.mxu0 %v2762
    %2812 = vmatpush1.msra.mxu0 %v2761
    %2813 = vmatprep.subr.mxu0 %v2766
    %2814 = vmatpush1.msra.mxu0 %v2765
    %2815 = vmatprep.subr.mxu0 %v2770
    %2816 = vmatpush1.msra.mxu0 %v2769
    %2817 = vmatprep.subr.mxu0 %v2774
    %2818 = vmatpush1.msra.mxu0 %v2773
    %2819 = vmatprep.subr.mxu0 %v2778
    %2820 = vmatpush1.msra.mxu0 %v2777
    %2821 = vmatprep.subr.mxu0 %v2782
    %2822 = vmatpush1.msra.mxu0 %v2781
    %2823 = vmatprep.subr.mxu0 %v2786
    %2824 = vmatpush1.msra.mxu0 %v2785
    %2825 = vmatprep.subr.mxu0 %v2790
    %2826 = vmatpush1.msra.mxu0 %v2789
    %2827 = vmatprep.subr.mxu0 %v2794
    %2828 = vmatpush1.msra.mxu0 %v2793
    %2829 = vmatprep.subr.mxu0 0.0
    %2830 = vmatpush1.msra.mxu0 0.0
    %2831 = vmatprep.subr.mxu0 0.0
    %2832 = vmatpush1.msra.mxu0 0.0
    %2833 = vmatprep.subr.mxu0 0.0
    %2834 = vmatpush1.msra.mxu0 0.0
    %2835 = vmatprep.subr.mxu0 0.0
    %2836 = vmatpush1.msra.mxu0 0.0
    %2837 = vmatprep.subr.mxu0 0.0
    %2838 = vmatpush1.msra.mxu0 0.0
    %2839 = vmatprep.subr.mxu0 0.0
    %2840 = vmatpush1.msra.mxu0 0.0
    %2841 = vmatprep.subr.mxu0 0.0
    %2842 = vmatpush1.msra.mxu0 0.0
    %2843 = vmatprep.subr.mxu0 0.0
    %2844 = vmatpush1.msra.mxu0 0.0
    %2845 = vmatprep.subr.mxu0 0.0
    %2846 = vmatpush1.msra.mxu0 0.0
    %2847 = vmatprep.subr.mxu0 0.0
    %2848 = vmatpush1.msra.mxu0 0.0
    %2849 = vmatprep.subr.mxu0 0.0
    %2850 = vmatpush1.msra.mxu0 0.0
    %2851 = vmatprep.subr.mxu0 0.0
    %2852 = vmatpush1.msra.mxu0 0.0
    %2853 = vmatprep.subr.mxu0 0.0
    %2854 = vmatpush1.msra.mxu0 0.0
    %2855 = vmatprep.subr.mxu0 0.0
    %2856 = vmatpush1.msra.mxu0 0.0
    %2857 = vmatprep.subr.mxu0 0.0
    %2858 = vmatpush1.msra.mxu0 0.0
    %2859 = vmatprep.subr.mxu0 0.0
    %2860 = vmatpush1.msra.mxu0 0.0
    %2861 = vmatprep.mubr.f32.mxu0 0.0
    %2862 = vmatmul.mubr.f32.gmra.mrb[0].mxu0 0.0
    %v2863 = vpop.f32.mrb[0].mxu0
    %v2864 = vadd.f32 0.0, %v2863
    %v2865 = vpop.f32.mrb[0].mxu0
    %v2866 = vadd.f32 0.0, %v2865
    %2867 = vdwg.mxu0
    %2868 = vmatprep.subr.mxu0 %v2736
    %2869 = vmatpush1.msra.mxu0 %v2735
    %2870 = vmatprep.subr.mxu0 %v2740
    %2871 = vmatpush1.msra.mxu0 %v2739
    %2872 = vmatprep.subr.mxu0 %v2744
    %2873 = vmatpush1.msra.mxu0 %v2743
    %2874 = vmatprep.subr.mxu0 %v2748
    %2875 = vmatpush1.msra.mxu0 %v2747
    %2876 = vmatprep.subr.mxu0 %v2752
    %2877 = vmatpush1.msra.mxu0 %v2751
    %2878 = vmatprep.subr.mxu0 %v2756
    %2879 = vmatpush1.msra.mxu0 %v2755
    %2880 = vmatprep.subr.mxu0 %v2760
    %2881 = vmatpush1.msra.mxu0 %v2759
    %2882 = vmatprep.subr.mxu0 %v2764
    %2883 = vmatpush1.msra.mxu0 %v2763
    %2884 = vmatprep.subr.mxu0 %v2768
    %2885 = vmatpush1.msra.mxu0 %v2767
    %2886 = vmatprep.subr.mxu0 %v2772
    %2887 = vmatpush1.msra.mxu0 %v2771
    %2888 = vmatprep.subr.mxu0 %v2776
    %2889 = vmatpush1.msra.mxu0 %v2775
    %2890 = vmatprep.subr.mxu0 %v2780
    %2891 = vmatpush1.msra.mxu0 %v2779
    %2892 = vmatprep.subr.mxu0 %v2784
    %2893 = vmatpush1.msra.mxu0 %v2783
    %2894 = vmatprep.subr.mxu0 %v2788
    %2895 = vmatpush1.msra.mxu0 %v2787
    %2896 = vmatprep.subr.mxu0 %v2792
    %2897 = vmatpush1.msra.mxu0 %v2791
    %2898 = vmatprep.subr.mxu0 %v2796
    %2899 = vmatpush1.msra.mxu0 %v2795
    %2900 = vmatprep.subr.mxu0 0.0
    %2901 = vmatpush1.msra.mxu0 0.0
    %2902 = vmatprep.subr.mxu0 0.0
    %2903 = vmatpush1.msra.mxu0 0.0
    %2904 = vmatprep.subr.mxu0 0.0
    %2905 = vmatpush1.msra.mxu0 0.0
    %2906 = vmatprep.subr.mxu0 0.0
    %2907 = vmatpush1.msra.mxu0 0.0
    %2908 = vmatprep.subr.mxu0 0.0
    %2909 = vmatpush1.msra.mxu0 0.0
    %2910 = vmatprep.subr.mxu0 0.0
    %2911 = vmatpush1.msra.mxu0 0.0
    %2912 = vmatprep.subr.mxu0 0.0
    %2913 = vmatpush1.msra.mxu0 0.0
    %2914 = vmatprep.subr.mxu0 0.0
    %2915 = vmatpush1.msra.mxu0 0.0
    %2916 = vmatprep.subr.mxu0 0.0
    %2917 = vmatpush1.msra.mxu0 0.0
    %2918 = vmatprep.subr.mxu0 0.0
    %2919 = vmatpush1.msra.mxu0 0.0
    %2920 = vmatprep.subr.mxu0 0.0
    %2921 = vmatpush1.msra.mxu0 0.0
    %2922 = vmatprep.subr.mxu0 0.0
    %2923 = vmatpush1.msra.mxu0 0.0
    %2924 = vmatprep.subr.mxu0 0.0
    %2925 = vmatpush1.msra.mxu0 0.0
    %2926 = vmatprep.subr.mxu0 0.0
    %2927 = vmatpush1.msra.mxu0 0.0
    %2928 = vmatprep.subr.mxu0 0.0
    %2929 = vmatpush1.msra.mxu0 0.0
    %2930 = vmatprep.subr.mxu0 0.0
    %2931 = vmatpush1.msra.mxu0 0.0
    %2932 = vmatprep.mubr.f32.mxu0 0.0
    %2933 = vmatmul.mubr.f32.gmra.mrb[0].mxu0 0.0
    %v2934 = vpop.f32.mrb[0].mxu0
    %v2935 = vadd.f32 0.0, %v2934
    %v2936 = vpop.f32.mrb[0].mxu0
    %v2937 = vadd.f32 0.0, %v2936
    %2938 = vdwg.mxu0
    %v2939 = vadd.f32 %v2729, %v2864
    %v2940 = vadd.f32 %v2730, %v2866
    %v2941 = vadd.f32 %v2731, %v2935
    %v2942 = vadd.f32 %v2732, %v2937
    %v2943 = vxor.u32 %v2939, 2147483648
    %v2944 = vxor.u32 %v2940, 2147483648
    %v2945 = vxor.u32 %v2941, 2147483648
    %v2946 = vxor.u32 %v2942, 2147483648
    %v2947 = vmul.f32 %v2943, 1.442695
    %v2948 = vpow.pop %v2947
    %v2949 = vmul.f32 %v2944, 1.442695
    %v2950 = vpow.pop %v2949
    %v2951 = vmul.f32 %v2945, 1.442695
    %v2952 = vpow.pop %v2951
    %v2953 = vmul.f32 %v2946, 1.442695
    %v2954 = vpow.pop %v2953
    %v2955 = vadd.f32 %v2948, 1.0
    %v2956 = vadd.f32 %v2950, 1.0
    %v2957 = vadd.f32 %v2952, 1.0
    %v2958 = vadd.f32 %v2954, 1.0
    %v2959 = vrcp.pop %v2955
    %v2960 = vmul.f32 1.0, %v2959
    %v2961 = vrcp.pop %v2956
    %v2962 = vmul.f32 1.0, %v2961
    %v2963 = vrcp.pop %v2957
    %v2964 = vmul.f32 1.0, %v2963
    %v2965 = vrcp.pop %v2958
    %v2966 = vmul.f32 1.0, %v2965
    %v2967 = vmul.f32 %v2964, 2.0
    %v2968 = vsub.f32 %v2967, 1.0
    %v2969 = vmul.f32 %v2962, 0.0
    %v2970 = vmul.f32 %v2960, %v2968
    %v2971 = vadd.f32 %v2969, %v2970
    %v2972 = vtanh.pop %v2971
    %v2973 = vmul.f32 %v2966, %v2972
    %v2974 = vld [vmem:[#allocation2 + $0x20] sm:$0xff]
    %v2975 = vld [vmem:[#allocation2 + $0x28] sm:$0xff]
    %v2976 = vld [vmem:[#allocation2 + $0x30] sm:$0xff]
    %v2977 = vld [vmem:[#allocation2 + $0x38] sm:$0xff]
    %2978 = vmatprep.subr.mxu0 %v2734
    %2979 = vmatpush1.msra.mxu0 %v2733
    %2980 = vmatprep.subr.mxu0 %v2738
    %2981 = vmatpush1.msra.mxu0 %v2737
    %2982 = vmatprep.subr.mxu0 %v2742
    %2983 = vmatpush1.msra.mxu0 %v2741
    %2984 = vmatprep.subr.mxu0 %v2746
    %2985 = vmatpush1.msra.mxu0 %v2745
    %2986 = vmatprep.subr.mxu0 %v2750
    %2987 = vmatpush1.msra.mxu0 %v2749
    %2988 = vmatprep.subr.mxu0 %v2754
    %2989 = vmatpush1.msra.mxu0 %v2753
    %2990 = vmatprep.subr.mxu0 %v2758
    %2991 = vmatpush1.msra.mxu0 %v2757
    %2992 = vmatprep.subr.mxu0 %v2762
    %2993 = vmatpush1.msra.mxu0 %v2761
    %2994 = vmatprep.subr.mxu0 %v2766
    %2995 = vmatpush1.msra.mxu0 %v2765
    %2996 = vmatprep.subr.mxu0 %v2770
    %2997 = vmatpush1.msra.mxu0 %v2769
    %2998 = vmatprep.subr.mxu0 %v2774
    %2999 = vmatpush1.msra.mxu0 %v2773
    %3000 = vmatprep.subr.mxu0 %v2778
    %3001 = vmatpush1.msra.mxu0 %v2777
    %3002 = vmatprep.subr.mxu0 %v2782
    %3003 = vmatpush1.msra.mxu0 %v2781
    %3004 = vmatprep.subr.mxu0 %v2786
    %3005 = vmatpush1.msra.mxu0 %v2785
    %3006 = vmatprep.subr.mxu0 %v2790
    %3007 = vmatpush1.msra.mxu0 %v2789
    %3008 = vmatprep.subr.mxu0 %v2794
    %3009 = vmatpush1.msra.mxu0 %v2793
    %3010 = vmatprep.subr.mxu0 0.0
    %3011 = vmatpush1.msra.mxu0 0.0
    %3012 = vmatprep.subr.mxu0 0.0
    %3013 = vmatpush1.msra.mxu0 0.0
    %3014 = vmatprep.subr.mxu0 0.0
    %3015 = vmatpush1.msra.mxu0 0.0
    %3016 = vmatprep.subr.mxu0 0.0
    %3017 = vmatpush1.msra.mxu0 0.0
    %3018 = vmatprep.subr.mxu0 0.0
    %3019 = vmatpush1.msra.mxu0 0.0
    %3020 = vmatprep.subr.mxu0 0.0
    %3021 = vmatpush1.msra.mxu0 0.0
    %3022 = vmatprep.subr.mxu0 0.0
    %3023 = vmatpush1.msra.mxu0 0.0
    %3024 = vmatprep.subr.mxu0 0.0
    %3025 = vmatpush1.msra.mxu0 0.0
    %3026 = vmatprep.subr.mxu0 0.0
    %3027 = vmatpush1.msra.mxu0 0.0
    %3028 = vmatprep.subr.mxu0 0.0
    %3029 = vmatpush1.msra.mxu0 0.0
    %3030 = vmatprep.subr.mxu0 0.0
    %3031 = vmatpush1.msra.mxu0 0.0
    %3032 = vmatprep.subr.mxu0 0.0
    %3033 = vmatpush1.msra.mxu0 0.0
    %3034 = vmatprep.subr.mxu0 0.0
    %3035 = vmatpush1.msra.mxu0 0.0
    %3036 = vmatprep.subr.mxu0 0.0
    %3037 = vmatpush1.msra.mxu0 0.0
    %3038 = vmatprep.subr.mxu0 0.0
    %3039 = vmatpush1.msra.mxu0 0.0
    %3040 = vmatprep.subr.mxu0 0.0
    %3041 = vmatpush1.msra.mxu0 0.0
    %3042 = vmatprep.mubr.f32.mxu0 0.0
    %3043 = vmatmul.mubr.f32.gmra.mrb[0].mxu0 %v2973
    %v3044 = vpop.f32.mrb[0].mxu0
    %v3045 = vadd.f32 0.0, %v3044
    %v3046 = vpop.f32.mrb[0].mxu0
    %v3047 = vadd.f32 0.0, %v3046
    %3048 = vdwg.mxu0
    %3049 = vmatprep.subr.mxu0 %v2736
    %3050 = vmatpush1.msra.mxu0 %v2735
    %3051 = vmatprep.subr.mxu0 %v2740
    %3052 = vmatpush1.msra.mxu0 %v2739
    %3053 = vmatprep.subr.mxu0 %v2744
    %3054 = vmatpush1.msra.mxu0 %v2743
    %3055 = vmatprep.subr.mxu0 %v2748
    %3056 = vmatpush1.msra.mxu0 %v2747
    %3057 = vmatprep.subr.mxu0 %v2752
    %3058 = vmatpush1.msra.mxu0 %v2751
    %3059 = vmatprep.subr.mxu0 %v2756
    %3060 = vmatpush1.msra.mxu0 %v2755
    %3061 = vmatprep.subr.mxu0 %v2760
    %3062 = vmatpush1.msra.mxu0 %v2759
    %3063 = vmatprep.subr.mxu0 %v2764
    %3064 = vmatpush1.msra.mxu0 %v2763
    %3065 = vmatprep.subr.mxu0 %v2768
    %3066 = vmatpush1.msra.mxu0 %v2767
    %3067 = vmatprep.subr.mxu0 %v2772
    %3068 = vmatpush1.msra.mxu0 %v2771
    %3069 = vmatprep.subr.mxu0 %v2776
    %3070 = vmatpush1.msra.mxu0 %v2775
    %3071 = vmatprep.subr.mxu0 %v2780
    %3072 = vmatpush1.msra.mxu0 %v2779
    %3073 = vmatprep.subr.mxu0 %v2784
    %3074 = vmatpush1.msra.mxu0 %v2783
    %3075 = vmatprep.subr.mxu0 %v2788
    %3076 = vmatpush1.msra.mxu0 %v2787
    %3077 = vmatprep.subr.mxu0 %v2792
    %3078 = vmatpush1.msra.mxu0 %v2791
    %3079 = vmatprep.subr.mxu0 %v2796
    %3080 = vmatpush1.msra.mxu0 %v2795
    %3081 = vmatprep.subr.mxu0 0.0
    %3082 = vmatpush1.msra.mxu0 0.0
    %3083 = vmatprep.subr.mxu0 0.0
    %3084 = vmatpush1.msra.mxu0 0.0
    %3085 = vmatprep.subr.mxu0 0.0
    %3086 = vmatpush1.msra.mxu0 0.0
    %3087 = vmatprep.subr.mxu0 0.0
    %3088 = vmatpush1.msra.mxu0 0.0
    %3089 = vmatprep.subr.mxu0 0.0
    %3090 = vmatpush1.msra.mxu0 0.0
    %3091 = vmatprep.subr.mxu0 0.0
    %3092 = vmatpush1.msra.mxu0 0.0
    %3093 = vmatprep.subr.mxu0 0.0
    %3094 = vmatpush1.msra.mxu0 0.0
    %3095 = vmatprep.subr.mxu0 0.0
    %3096 = vmatpush1.msra.mxu0 0.0
    %3097 = vmatprep.subr.mxu0 0.0
    %3098 = vmatpush1.msra.mxu0 0.0
    %3099 = vmatprep.subr.mxu0 0.0
    %3100 = vmatpush1.msra.mxu0 0.0
    %3101 = vmatprep.subr.mxu0 0.0
    %3102 = vmatpush1.msra.mxu0 0.0
    %3103 = vmatprep.subr.mxu0 0.0
    %3104 = vmatpush1.msra.mxu0 0.0
    %3105 = vmatprep.subr.mxu0 0.0
    %3106 = vmatpush1.msra.mxu0 0.0
    %3107 = vmatprep.subr.mxu0 0.0
    %3108 = vmatpush1.msra.mxu0 0.0
    %3109 = vmatprep.subr.mxu0 0.0
    %3110 = vmatpush1.msra.mxu0 0.0
    %3111 = vmatprep.subr.mxu0 0.0
    %3112 = vmatpush1.msra.mxu0 0.0
    %3113 = vmatprep.mubr.f32.mxu0 0.0
    %3114 = vmatmul.mubr.f32.gmra.mrb[0].mxu0 %v2973
    %v3115 = vpop.f32.mrb[0].mxu0
    %v3116 = vadd.f32 0.0, %v3115
    %v3117 = vpop.f32.mrb[0].mxu0
    %v3118 = vadd.f32 0.0, %v3117
    %3119 = vdwg.mxu0
    %v3120 = vadd.f32 %v2974, %v3045
    %v3121 = vadd.f32 %v2975, %v3047
    %v3122 = vadd.f32 %v2976, %v3116
    %v3123 = vadd.f32 %v2977, %v3118
    %v3124 = vxor.u32 %v3120, 2147483648
    %v3125 = vxor.u32 %v3121, 2147483648
    %v3126 = vxor.u32 %v3122, 2147483648
    %v3127 = vxor.u32 %v3123, 2147483648
    %v3128 = vmul.f32 %v3124, 1.442695
    %v3129 = vpow.pop %v3128
    %v3130 = vmul.f32 %v3125, 1.442695
    %v3131 = vpow.pop %v3130
    %v3132 = vmul.f32 %v3126, 1.442695
    %v3133 = vpow.pop %v3132
    %v3134 = vmul.f32 %v3127, 1.442695
    %v3135 = vpow.pop %v3134
    %v3136 = vadd.f32 %v3129, 1.0
    %v3137 = vadd.f32 %v3131, 1.0
    %v3138 = vadd.f32 %v3133, 1.0
    %v3139 = vadd.f32 %v3135, 1.0
    %v3140 = vrcp.pop %v3136
    %v3141 = vmul.f32 1.0, %v3140
    %v3142 = vrcp.pop %v3137
    %v3143 = vmul.f32 1.0, %v3142
    %v3144 = vrcp.pop %v3138
    %v3145 = vmul.f32 1.0, %v3144
    %v3146 = vrcp.pop %v3139
    %v3147 = vmul.f32 1.0, %v3146
    %v3148 = vmul.f32 %v3145, 2.0
    %v3149 = vsub.f32 %v3148, 1.0
    %v3150 = vmul.f32 %v3143, %v2971
    %v3151 = vmul.f32 %v3141, %v3149
    %v3152 = vadd.f32 %v3150, %v3151
    %v3153 = vtanh.pop %v3152
    %v3154 = vmul.f32 %v3147, %v3153
    %v3155 = vld [vmem:[#allocation2 + $0x40] sm:$0xff]
    %v3156 = vld [vmem:[#allocation2 + $0x48] sm:$0xff]
    %v3157 = vld [vmem:[#allocation2 + $0x50] sm:$0xff]
    %v3158 = vld [vmem:[#allocation2 + $0x58] sm:$0xff]
    %3159 = vmatprep.subr.mxu0 %v2734
    %3160 = vmatpush1.msra.mxu0 %v2733
    %3161 = vmatprep.subr.mxu0 %v2738
    %3162 = vmatpush1.msra.mxu0 %v2737
    %3163 = vmatprep.subr.mxu0 %v2742
    %3164 = vmatpush1.msra.mxu0 %v2741
    %3165 = vmatprep.subr.mxu0 %v2746
    %3166 = vmatpush1.msra.mxu0 %v2745
    %3167 = vmatprep.subr.mxu0 %v2750
    %3168 = vmatpush1.msra.mxu0 %v2749
    %3169 = vmatprep.subr.mxu0 %v2754
    %3170 = vmatpush1.msra.mxu0 %v2753
    %3171 = vmatprep.subr.mxu0 %v2758
    %3172 = vmatpush1.msra.mxu0 %v2757
    %3173 = vmatprep.subr.mxu0 %v2762
    %3174 = vmatpush1.msra.mxu0 %v2761
    %3175 = vmatprep.subr.mxu0 %v2766
    %3176 = vmatpush1.msra.mxu0 %v2765
    %3177 = vmatprep.subr.mxu0 %v2770
    %3178 = vmatpush1.msra.mxu0 %v2769
    %3179 = vmatprep.subr.mxu0 %v2774
    %3180 = vmatpush1.msra.mxu0 %v2773
    %3181 = vmatprep.subr.mxu0 %v2778
    %3182 = vmatpush1.msra.mxu0 %v2777
    %3183 = vmatprep.subr.mxu0 %v2782
    %3184 = vmatpush1.msra.mxu0 %v2781
    %3185 = vmatprep.subr.mxu0 %v2786
    %3186 = vmatpush1.msra.mxu0 %v2785
    %3187 = vmatprep.subr.mxu0 %v2790
    %3188 = vmatpush1.msra.mxu0 %v2789
    %3189 = vmatprep.subr.mxu0 %v2794
    %3190 = vmatpush1.msra.mxu0 %v2793
    %3191 = vmatprep.subr.mxu0 0.0
    %3192 = vmatpush1.msra.mxu0 0.0
    %3193 = vmatprep.subr.mxu0 0.0
    %3194 = vmatpush1.msra.mxu0 0.0
    %3195 = vmatprep.subr.mxu0 0.0
    %3196 = vmatpush1.msra.mxu0 0.0
    %3197 = vmatprep.subr.mxu0 0.0
    %3198 = vmatpush1.msra.mxu0 0.0
    %3199 = vmatprep.subr.mxu0 0.0
    %3200 = vmatpush1.msra.mxu0 0.0
    %3201 = vmatprep.subr.mxu0 0.0
    %3202 = vmatpush1.msra.mxu0 0.0
    %3203 = vmatprep.subr.mxu0 0.0
    %3204 = vmatpush1.msra.mxu0 0.0
    %3205 = vmatprep.subr.mxu0 0.0
    %3206 = vmatpush1.msra.mxu0 0.0
    %3207 = vmatprep.subr.mxu0 0.0
    %3208 = vmatpush1.msra.mxu0 0.0
    %3209 = vmatprep.subr.mxu0 0.0
    %3210 = vmatpush1.msra.mxu0 0.0
    %3211 = vmatprep.subr.mxu0 0.0
    %3212 = vmatpush1.msra.mxu0 0.0
    %3213 = vmatprep.subr.mxu0 0.0
    %3214 = vmatpush1.msra.mxu0 0.0
    %3215 = vmatprep.subr.mxu0 0.0
    %3216 = vmatpush1.msra.mxu0 0.0
    %3217 = vmatprep.subr.mxu0 0.0
    %3218 = vmatpush1.msra.mxu0 0.0
    %3219 = vmatprep.subr.mxu0 0.0
    %3220 = vmatpush1.msra.mxu0 0.0
    %3221 = vmatprep.subr.mxu0 0.0
    %3222 = vmatpush1.msra.mxu0 0.0
    %3223 = vmatprep.mubr.f32.mxu0 0.0
    %3224 = vmatmul.mubr.f32.gmra.mrb[0].mxu0 %v3154
    %v3225 = vpop.f32.mrb[0].mxu0
    %v3226 = vadd.f32 0.0, %v3225
    %v3227 = vpop.f32.mrb[0].mxu0
    %v3228 = vadd.f32 0.0, %v3227
    %3229 = vdwg.mxu0
    %3230 = vmatprep.subr.mxu0 %v2736
    %3231 = vmatpush1.msra.mxu0 %v2735
    %3232 = vmatprep.subr.mxu0 %v2740
    %3233 = vmatpush1.msra.mxu0 %v2739
    %3234 = vmatprep.subr.mxu0 %v2744
    %3235 = vmatpush1.msra.mxu0 %v2743
    %3236 = vmatprep.subr.mxu0 %v2748
    %3237 = vmatpush1.msra.mxu0 %v2747
    %3238 = vmatprep.subr.mxu0 %v2752
    %3239 = vmatpush1.msra.mxu0 %v2751
    %3240 = vmatprep.subr.mxu0 %v2756
    %3241 = vmatpush1.msra.mxu0 %v2755
    %3242 = vmatprep.subr.mxu0 %v2760
    %3243 = vmatpush1.msra.mxu0 %v2759
    %3244 = vmatprep.subr.mxu0 %v2764
    %3245 = vmatpush1.msra.mxu0 %v2763
    %3246 = vmatprep.subr.mxu0 %v2768
    %3247 = vmatpush1.msra.mxu0 %v2767
    %3248 = vmatprep.subr.mxu0 %v2772
    %3249 = vmatpush1.msra.mxu0 %v2771
    %3250 = vmatprep.subr.mxu0 %v2776
    %3251 = vmatpush1.msra.mxu0 %v2775
    %3252 = vmatprep.subr.mxu0 %v2780
    %3253 = vmatpush1.msra.mxu0 %v2779
    %3254 = vmatprep.subr.mxu0 %v2784
    %3255 = vmatpush1.msra.mxu0 %v2783
    %3256 = vmatprep.subr.mxu0 %v2788
    %3257 = vmatpush1.msra.mxu0 %v2787
    %3258 = vmatprep.subr.mxu0 %v2792
    %3259 = vmatpush1.msra.mxu0 %v2791
    %3260 = vmatprep.subr.mxu0 %v2796
    %3261 = vmatpush1.msra.mxu0 %v2795
    %3262 = vmatprep.subr.mxu0 0.0
    %3263 = vmatpush1.msra.mxu0 0.0
    %3264 = vmatprep.subr.mxu0 0.0
    %3265 = vmatpush1.msra.mxu0 0.0
    %3266 = vmatprep.subr.mxu0 0.0
    %3267 = vmatpush1.msra.mxu0 0.0
    %3268 = vmatprep.subr.mxu0 0.0
    %3269 = vmatpush1.msra.mxu0 0.0
    %3270 = vmatprep.subr.mxu0 0.0
    %3271 = vmatpush1.msra.mxu0 0.0
    %3272 = vmatprep.subr.mxu0 0.0
    %3273 = vmatpush1.msra.mxu0 0.0
    %3274 = vmatprep.subr.mxu0 0.0
    %3275 = vmatpush1.msra.mxu0 0.0
    %3276 = vmatprep.subr.mxu0 0.0
    %3277 = vmatpush1.msra.mxu0 0.0
    %3278 = vmatprep.subr.mxu0 0.0
    %3279 = vmatpush1.msra.mxu0 0.0
    %3280 = vmatprep.subr.mxu0 0.0
    %3281 = vmatpush1.msra.mxu0 0.0
    %3282 = vmatprep.subr.mxu0 0.0
    %3283 = vmatpush1.msra.mxu0 0.0
    %3284 = vmatprep.subr.mxu0 0.0
    %3285 = vmatpush1.msra.mxu0 0.0
    %3286 = vmatprep.subr.mxu0 0.0
    %3287 = vmatpush1.msra.mxu0 0.0
    %3288 = vmatprep.subr.mxu0 0.0
    %3289 = vmatpush1.msra.mxu0 0.0
    %3290 = vmatprep.subr.mxu0 0.0
    %3291 = vmatpush1.msra.mxu0 0.0
    %3292 = vmatprep.subr.mxu0 0.0
    %3293 = vmatpush1.msra.mxu0 0.0
    %3294 = vmatprep.mubr.f32.mxu0 0.0
    %3295 = vmatmul.mubr.f32.gmra.mrb[0].mxu0 %v3154
    %v3296 = vpop.f32.mrb[0].mxu0
    %v3297 = vadd.f32 0.0, %v3296
    %v3298 = vpop.f32.mrb[0].mxu0
    %v3299 = vadd.f32 0.0, %v3298
    %3300 = vdwg.mxu0
    %v3301 = vadd.f32 %v3155, %v3226
    %v3302 = vadd.f32 %v3156, %v3228
    %v3303 = vadd.f32 %v3157, %v3297
    %v3304 = vadd.f32 %v3158, %v3299
    %v3305 = vxor.u32 %v3301, 2147483648
    %v3306 = vxor.u32 %v3302, 2147483648
    %v3307 = vxor.u32 %v3303, 2147483648
    %v3308 = vxor.u32 %v3304, 2147483648
    %v3309 = vmul.f32 %v3305, 1.442695
    %v3310 = vpow.pop %v3309
    %v3311 = vmul.f32 %v3306, 1.442695
    %v3312 = vpow.pop %v3311
    %v3313 = vmul.f32 %v3307, 1.442695
    %v3314 = vpow.pop %v3313
    %v3315 = vmul.f32 %v3308, 1.442695
    %v3316 = vpow.pop %v3315
    %v3317 = vadd.f32 %v3310, 1.0
    %v3318 = vadd.f32 %v3312, 1.0
    %v3319 = vadd.f32 %v3314, 1.0
    %v3320 = vadd.f32 %v3316, 1.0
    %v3321 = vrcp.pop %v3317
    %v3322 = vmul.f32 1.0, %v3321
    %v3323 = vrcp.pop %v3318
    %v3324 = vmul.f32 1.0, %v3323
    %v3325 = vrcp.pop %v3319
    %v3326 = vmul.f32 1.0, %v3325
    %v3327 = vrcp.pop %v3320
    %v3328 = vmul.f32 1.0, %v3327
    %v3329 = vmul.f32 %v3326, 2.0
    %v3330 = vsub.f32 %v3329, 1.0
    %v3331 = vmul.f32 %v3324, %v3152
    %v3332 = vmul.f32 %v3322, %v3330
    %v3333 = vadd.f32 %v3331, %v3332
    %v3334 = vtanh.pop %v3333
    %v3335 = vmul.f32 %v3328, %v3334
    %v3336 = vld [vmem:[#allocation2 + $0x60] sm:$0xff]
    %v3337 = vld [vmem:[#allocation2 + $0x68] sm:$0xff]
    %v3338 = vld [vmem:[#allocation2 + $0x70] sm:$0xff]
    %v3339 = vld [vmem:[#allocation2 + $0x78] sm:$0xff]
    %3340 = vmatprep.subr.mxu0 %v2734
    %3341 = vmatpush1.msra.mxu0 %v2733
    %3342 = vmatprep.subr.mxu0 %v2738
    %3343 = vmatpush1.msra.mxu0 %v2737
    %3344 = vmatprep.subr.mxu0 %v2742
    %3345 = vmatpush1.msra.mxu0 %v2741
    %3346 = vmatprep.subr.mxu0 %v2746
    %3347 = vmatpush1.msra.mxu0 %v2745
    %3348 = vmatprep.subr.mxu0 %v2750
    %3349 = vmatpush1.msra.mxu0 %v2749
    %3350 = vmatprep.subr.mxu0 %v2754
    %3351 = vmatpush1.msra.mxu0 %v2753
    %3352 = vmatprep.subr.mxu0 %v2758
    %3353 = vmatpush1.msra.mxu0 %v2757
    %3354 = vmatprep.subr.mxu0 %v2762
    %3355 = vmatpush1.msra.mxu0 %v2761
    %3356 = vmatprep.subr.mxu0 %v2766
    %3357 = vmatpush1.msra.mxu0 %v2765
    %3358 = vmatprep.subr.mxu0 %v2770
    %3359 = vmatpush1.msra.mxu0 %v2769
    %3360 = vmatprep.subr.mxu0 %v2774
    %3361 = vmatpush1.msra.mxu0 %v2773
    %3362 = vmatprep.subr.mxu0 %v2778
    %3363 = vmatpush1.msra.mxu0 %v2777
    %3364 = vmatprep.subr.mxu0 %v2782
    %3365 = vmatpush1.msra.mxu0 %v2781
    %3366 = vmatprep.subr.mxu0 %v2786
    %3367 = vmatpush1.msra.mxu0 %v2785
    %3368 = vmatprep.subr.mxu0 %v2790
    %3369 = vmatpush1.msra.mxu0 %v2789
    %3370 = vmatprep.subr.mxu0 %v2794
    %3371 = vmatpush1.msra.mxu0 %v2793
    %3372 = vmatprep.subr.mxu0 0.0
    %3373 = vmatpush1.msra.mxu0 0.0
    %3374 = vmatprep.subr.mxu0 0.0
    %3375 = vmatpush1.msra.mxu0 0.0
    %3376 = vmatprep.subr.mxu0 0.0
    %3377 = vmatpush1.msra.mxu0 0.0
    %3378 = vmatprep.subr.mxu0 0.0
    %3379 = vmatpush1.msra.mxu0 0.0
    %3380 = vmatprep.subr.mxu0 0.0
    %3381 = vmatpush1.msra.mxu0 0.0
    %3382 = vmatprep.subr.mxu0 0.0
    %3383 = vmatpush1.msra.mxu0 0.0
    %3384 = vmatprep.subr.mxu0 0.0
    %3385 = vmatpush1.msra.mxu0 0.0
    %3386 = vmatprep.subr.mxu0 0.0
    %3387 = vmatpush1.msra.mxu0 0.0
    %3388 = vmatprep.subr.mxu0 0.0
    %3389 = vmatpush1.msra.mxu0 0.0
    %3390 = vmatprep.subr.mxu0 0.0
    %3391 = vmatpush1.msra.mxu0 0.0
    %3392 = vmatprep.subr.mxu0 0.0
    %3393 = vmatpush1.msra.mxu0 0.0
    %3394 = vmatprep.subr.mxu0 0.0
    %3395 = vmatpush1.msra.mxu0 0.0
    %3396 = vmatprep.subr.mxu0 0.0
    %3397 = vmatpush1.msra.mxu0 0.0
    %3398 = vmatprep.subr.mxu0 0.0
    %3399 = vmatpush1.msra.mxu0 0.0
    %3400 = vmatprep.subr.mxu0 0.0
    %3401 = vmatpush1.msra.mxu0 0.0
    %3402 = vmatprep.subr.mxu0 0.0
    %3403 = vmatpush1.msra.mxu0 0.0
    %3404 = vmatprep.mubr.f32.mxu0 0.0
    %3405 = vmatmul.mubr.f32.gmra.mrb[0].mxu0 %v3335
    %v3406 = vpop.f32.mrb[0].mxu0
    %v3407 = vadd.f32 0.0, %v3406
    %v3408 = vpop.f32.mrb[0].mxu0
    %v3409 = vadd.f32 0.0, %v3408
    %3410 = vdwg.mxu0
    %3411 = vmatprep.subr.mxu0 %v2736
    %3412 = vmatpush1.msra.mxu0 %v2735
    %3413 = vmatprep.subr.mxu0 %v2740
    %3414 = vmatpush1.msra.mxu0 %v2739
    %3415 = vmatprep.subr.mxu0 %v2744
    %3416 = vmatpush1.msra.mxu0 %v2743
    %3417 = vmatprep.subr.mxu0 %v2748
    %3418 = vmatpush1.msra.mxu0 %v2747
    %3419 = vmatprep.subr.mxu0 %v2752
    %3420 = vmatpush1.msra.mxu0 %v2751
    %3421 = vmatprep.subr.mxu0 %v2756
    %3422 = vmatpush1.msra.mxu0 %v2755
    %3423 = vmatprep.subr.mxu0 %v2760
    %3424 = vmatpush1.msra.mxu0 %v2759
    %3425 = vmatprep.subr.mxu0 %v2764
    %3426 = vmatpush1.msra.mxu0 %v2763
    %3427 = vmatprep.subr.mxu0 %v2768
    %3428 = vmatpush1.msra.mxu0 %v2767
    %3429 = vmatprep.subr.mxu0 %v2772
    %3430 = vmatpush1.msra.mxu0 %v2771
    %3431 = vmatprep.subr.mxu0 %v2776
    %3432 = vmatpush1.msra.mxu0 %v2775
    %3433 = vmatprep.subr.mxu0 %v2780
    %3434 = vmatpush1.msra.mxu0 %v2779
    %3435 = vmatprep.subr.mxu0 %v2784
    %3436 = vmatpush1.msra.mxu0 %v2783
    %3437 = vmatprep.subr.mxu0 %v2788
    %3438 = vmatpush1.msra.mxu0 %v2787
    %3439 = vmatprep.subr.mxu0 %v2792
    %3440 = vmatpush1.msra.mxu0 %v2791
    %3441 = vmatprep.subr.mxu0 %v2796
    %3442 = vmatpush1.msra.mxu0 %v2795
    %3443 = vmatprep.subr.mxu0 0.0
    %3444 = vmatpush1.msra.mxu0 0.0
    %3445 = vmatprep.subr.mxu0 0.0
    %3446 = vmatpush1.msra.mxu0 0.0
    %3447 = vmatprep.subr.mxu0 0.0
    %3448 = vmatpush1.msra.mxu0 0.0
    %3449 = vmatprep.subr.mxu0 0.0
    %3450 = vmatpush1.msra.mxu0 0.0
    %3451 = vmatprep.subr.mxu0 0.0
    %3452 = vmatpush1.msra.mxu0 0.0
    %3453 = vmatprep.subr.mxu0 0.0
    %3454 = vmatpush1.msra.mxu0 0.0
    %3455 = vmatprep.subr.mxu0 0.0
    %3456 = vmatpush1.msra.mxu0 0.0
    %3457 = vmatprep.subr.mxu0 0.0
    %3458 = vmatpush1.msra.mxu0 0.0
    %3459 = vmatprep.subr.mxu0 0.0
    %3460 = vmatpush1.msra.mxu0 0.0
    %3461 = vmatprep.subr.mxu0 0.0
    %3462 = vmatpush1.msra.mxu0 0.0
    %3463 = vmatprep.subr.mxu0 0.0
    %3464 = vmatpush1.msra.mxu0 0.0
    %3465 = vmatprep.subr.mxu0 0.0
    %3466 = vmatpush1.msra.mxu0 0.0
    %3467 = vmatprep.subr.mxu0 0.0
    %3468 = vmatpush1.msra.mxu0 0.0
    %3469 = vmatprep.subr.mxu0 0.0
    %3470 = vmatpush1.msra.mxu0 0.0
    %3471 = vmatprep.subr.mxu0 0.0
    %3472 = vmatpush1.msra.mxu0 0.0
    %3473 = vmatprep.subr.mxu0 0.0
    %3474 = vmatpush1.msra.mxu0 0.0
    %3475 = vmatprep.mubr.f32.mxu0 0.0
    %3476 = vmatmul.mubr.f32.gmra.mrb[0].mxu0 %v3335
    %v3477 = vpop.f32.mrb[0].mxu0
    %v3478 = vadd.f32 0.0, %v3477
    %v3479 = vpop.f32.mrb[0].mxu0
    %v3480 = vadd.f32 0.0, %v3479
    %3481 = vdwg.mxu0
    %v3482 = vadd.f32 %v3336, %v3407
    %v3483 = vadd.f32 %v3337, %v3409
    %v3484 = vadd.f32 %v3338, %v3478
    %v3485 = vadd.f32 %v3339, %v3480
    %v3486 = vxor.u32 %v3482, 2147483648
    %v3487 = vxor.u32 %v3483, 2147483648
    %v3488 = vxor.u32 %v3484, 2147483648
    %v3489 = vxor.u32 %v3485, 2147483648
    %v3490 = vmul.f32 %v3486, 1.442695
    %v3491 = vpow.pop %v3490
    %v3492 = vmul.f32 %v3487, 1.442695
    %v3493 = vpow.pop %v3492
    %v3494 = vmul.f32 %v3488, 1.442695
    %v3495 = vpow.pop %v3494
    %v3496 = vmul.f32 %v3489, 1.442695
    %v3497 = vpow.pop %v3496
    %v3498 = vadd.f32 %v3491, 1.0
    %v3499 = vadd.f32 %v3493, 1.0
    %v3500 = vadd.f32 %v3495, 1.0
    %v3501 = vadd.f32 %v3497, 1.0
    %v3502 = vrcp.pop %v3498
    %v3503 = vmul.f32 1.0, %v3502
    %v3504 = vrcp.pop %v3499
    %v3505 = vmul.f32 1.0, %v3504
    %v3506 = vrcp.pop %v3500
    %v3507 = vmul.f32 1.0, %v3506
    %v3508 = vrcp.pop %v3501
    %v3509 = vmul.f32 1.0, %v3508
    %v3510 = vmul.f32 %v3507, 2.0
    %v3511 = vsub.f32 %v3510, 1.0
    %v3512 = vmul.f32 %v3505, %v3333
    %v3513 = vmul.f32 %v3503, %v3511
    %v3514 = vadd.f32 %v3512, %v3513
    %v3515 = vtanh.pop %v3514
    %v3516 = vmul.f32 %v3509, %v3515
    %v3517 = vld [vmem:[#allocation2 + $0x80] sm:$0xff]
    %v3518 = vld [vmem:[#allocation2 + $0x88] sm:$0xff]
    %v3519 = vld [vmem:[#allocation2 + $0x90] sm:$0xff]
    %v3520 = vld [vmem:[#allocation2 + $0x98] sm:$0xff]
    %3521 = vmatprep.subr.mxu0 %v2734
    %3522 = vmatpush1.msra.mxu0 %v2733
    %3523 = vmatprep.subr.mxu0 %v2738
    %3524 = vmatpush1.msra.mxu0 %v2737
    %3525 = vmatprep.subr.mxu0 %v2742
    %3526 = vmatpush1.msra.mxu0 %v2741
    %3527 = vmatprep.subr.mxu0 %v2746
    %3528 = vmatpush1.msra.mxu0 %v2745
    %3529 = vmatprep.subr.mxu0 %v2750
    %3530 = vmatpush1.msra.mxu0 %v2749
    %3531 = vmatprep.subr.mxu0 %v2754
    %3532 = vmatpush1.msra.mxu0 %v2753
    %3533 = vmatprep.subr.mxu0 %v2758
    %3534 = vmatpush1.msra.mxu0 %v2757
    %3535 = vmatprep.subr.mxu0 %v2762
    %3536 = vmatpush1.msra.mxu0 %v2761
    %3537 = vmatprep.subr.mxu0 %v2766
    %3538 = vmatpush1.msra.mxu0 %v2765
    %3539 = vmatprep.subr.mxu0 %v2770
    %3540 = vmatpush1.msra.mxu0 %v2769
    %3541 = vmatprep.subr.mxu0 %v2774
    %3542 = vmatpush1.msra.mxu0 %v2773
    %3543 = vmatprep.subr.mxu0 %v2778
    %3544 = vmatpush1.msra.mxu0 %v2777
    %3545 = vmatprep.subr.mxu0 %v2782
    %3546 = vmatpush1.msra.mxu0 %v2781
    %3547 = vmatprep.subr.mxu0 %v2786
    %3548 = vmatpush1.msra.mxu0 %v2785
    %3549 = vmatprep.subr.mxu0 %v2790
    %3550 = vmatpush1.msra.mxu0 %v2789
    %3551 = vmatprep.subr.mxu0 %v2794
    %3552 = vmatpush1.msra.mxu0 %v2793
    %3553 = vmatprep.subr.mxu0 0.0
    %3554 = vmatpush1.msra.mxu0 0.0
    %3555 = vmatprep.subr.mxu0 0.0
    %3556 = vmatpush1.msra.mxu0 0.0
    %3557 = vmatprep.subr.mxu0 0.0
    %3558 = vmatpush1.msra.mxu0 0.0
    %3559 = vmatprep.subr.mxu0 0.0
    %3560 = vmatpush1.msra.mxu0 0.0
    %3561 = vmatprep.subr.mxu0 0.0
    %3562 = vmatpush1.msra.mxu0 0.0
    %3563 = vmatprep.subr.mxu0 0.0
    %3564 = vmatpush1.msra.mxu0 0.0
    %3565 = vmatprep.subr.mxu0 0.0
    %3566 = vmatpush1.msra.mxu0 0.0
    %3567 = vmatprep.subr.mxu0 0.0
    %3568 = vmatpush1.msra.mxu0 0.0
    %3569 = vmatprep.subr.mxu0 0.0
    %3570 = vmatpush1.msra.mxu0 0.0
    %3571 = vmatprep.subr.mxu0 0.0
    %3572 = vmatpush1.msra.mxu0 0.0
    %3573 = vmatprep.subr.mxu0 0.0
    %3574 = vmatpush1.msra.mxu0 0.0
    %3575 = vmatprep.subr.mxu0 0.0
    %3576 = vmatpush1.msra.mxu0 0.0
    %3577 = vmatprep.subr.mxu0 0.0
    %3578 = vmatpush1.msra.mxu0 0.0
    %3579 = vmatprep.subr.mxu0 0.0
    %3580 = vmatpush1.msra.mxu0 0.0
    %3581 = vmatprep.subr.mxu0 0.0
    %3582 = vmatpush1.msra.mxu0 0.0
    %3583 = vmatprep.subr.mxu0 0.0
    %3584 = vmatpush1.msra.mxu0 0.0
    %3585 = vmatprep.mubr.f32.mxu0 0.0
    %3586 = vmatmul.mubr.f32.gmra.mrb[0].mxu0 %v3516
    %v3587 = vpop.f32.mrb[0].mxu0
    %v3588 = vadd.f32 0.0, %v3587
    %v3589 = vpop.f32.mrb[0].mxu0
    %v3590 = vadd.f32 0.0, %v3589
    %3591 = vdwg.mxu0
    %3592 = vmatprep.subr.mxu0 %v2736
    %3593 = vmatpush1.msra.mxu0 %v2735
    %3594 = vmatprep.subr.mxu0 %v2740
    %3595 = vmatpush1.msra.mxu0 %v2739
    %3596 = vmatprep.subr.mxu0 %v2744
    %3597 = vmatpush1.msra.mxu0 %v2743
    %3598 = vmatprep.subr.mxu0 %v2748
    %3599 = vmatpush1.msra.mxu0 %v2747
    %3600 = vmatprep.subr.mxu0 %v2752
    %3601 = vmatpush1.msra.mxu0 %v2751
    %3602 = vmatprep.subr.mxu0 %v2756
    %3603 = vmatpush1.msra.mxu0 %v2755
    %3604 = vmatprep.subr.mxu0 %v2760
    %3605 = vmatpush1.msra.mxu0 %v2759
    %3606 = vmatprep.subr.mxu0 %v2764
    %3607 = vmatpush1.msra.mxu0 %v2763
    %3608 = vmatprep.subr.mxu0 %v2768
    %3609 = vmatpush1.msra.mxu0 %v2767
    %3610 = vmatprep.subr.mxu0 %v2772
    %3611 = vmatpush1.msra.mxu0 %v2771
    %3612 = vmatprep.subr.mxu0 %v2776
    %3613 = vmatpush1.msra.mxu0 %v2775
    %3614 = vmatprep.subr.mxu0 %v2780
    %3615 = vmatpush1.msra.mxu0 %v2779
    %3616 = vmatprep.subr.mxu0 %v2784
    %3617 = vmatpush1.msra.mxu0 %v2783
    %3618 = vmatprep.subr.mxu0 %v2788
    %3619 = vmatpush1.msra.mxu0 %v2787
    %3620 = vmatprep.subr.mxu0 %v2792
    %3621 = vmatpush1.msra.mxu0 %v2791
    %3622 = vmatprep.subr.mxu0 %v2796
    %3623 = vmatpush1.msra.mxu0 %v2795
    %3624 = vmatprep.subr.mxu0 0.0
    %3625 = vmatpush1.msra.mxu0 0.0
    %3626 = vmatprep.subr.mxu0 0.0
    %3627 = vmatpush1.msra.mxu0 0.0
    %3628 = vmatprep.subr.mxu0 0.0
    %3629 = vmatpush1.msra.mxu0 0.0
    %3630 = vmatprep.subr.mxu0 0.0
    %3631 = vmatpush1.msra.mxu0 0.0
    %3632 = vmatprep.subr.mxu0 0.0
    %3633 = vmatpush1.msra.mxu0 0.0
    %3634 = vmatprep.subr.mxu0 0.0
    %3635 = vmatpush1.msra.mxu0 0.0
    %3636 = vmatprep.subr.mxu0 0.0
    %3637 = vmatpush1.msra.mxu0 0.0
    %3638 = vmatprep.subr.mxu0 0.0
    %3639 = vmatpush1.msra.mxu0 0.0
    %3640 = vmatprep.subr.mxu0 0.0
    %3641 = vmatpush1.msra.mxu0 0.0
    %3642 = vmatprep.subr.mxu0 0.0
    %3643 = vmatpush1.msra.mxu0 0.0
    %3644 = vmatprep.subr.mxu0 0.0
    %3645 = vmatpush1.msra.mxu0 0.0
    %3646 = vmatprep.subr.mxu0 0.0
    %3647 = vmatpush1.msra.mxu0 0.0
    %3648 = vmatprep.subr.mxu0 0.0
    %3649 = vmatpush1.msra.mxu0 0.0
    %3650 = vmatprep.subr.mxu0 0.0
    %3651 = vmatpush1.msra.mxu0 0.0
    %3652 = vmatprep.subr.mxu0 0.0
    %3653 = vmatpush1.msra.mxu0 0.0
    %3654 = vmatprep.subr.mxu0 0.0
    %3655 = vmatpush1.msra.mxu0 0.0
    %3656 = vmatprep.mubr.f32.mxu0 0.0
    %3657 = vmatmul.mubr.f32.gmra.mrb[0].mxu0 %v3516
    %v3658 = vpop.f32.mrb[0].mxu0
    %v3659 = vadd.f32 0.0, %v3658
    %v3660 = vpop.f32.mrb[0].mxu0
    %v3661 = vadd.f32 0.0, %v3660
    %3662 = vdwg.mxu0
    %v3663 = vadd.f32 %v3517, %v3588
    %v3664 = vadd.f32 %v3518, %v3590
    %v3665 = vadd.f32 %v3519, %v3659
    %v3666 = vadd.f32 %v3520, %v3661
    %v3667 = vxor.u32 %v3663, 2147483648
    %v3668 = vxor.u32 %v3664, 2147483648
    %v3669 = vxor.u32 %v3665, 2147483648
    %v3670 = vxor.u32 %v3666, 2147483648
    %v3671 = vmul.f32 %v3667, 1.442695
    %v3672 = vpow.pop %v3671
    %v3673 = vmul.f32 %v3668, 1.442695
    %v3674 = vpow.pop %v3673
    %v3675 = vmul.f32 %v3669, 1.442695
    %v3676 = vpow.pop %v3675
    %v3677 = vmul.f32 %v3670, 1.442695
    %v3678 = vpow.pop %v3677
    %v3679 = vadd.f32 %v3672, 1.0
    %v3680 = vadd.f32 %v3674, 1.0
    %v3681 = vadd.f32 %v3676, 1.0
    %v3682 = vadd.f32 %v3678, 1.0
    %v3683 = vrcp.pop %v3679
    %v3684 = vmul.f32 1.0, %v3683
    %v3685 = vrcp.pop %v3680
    %v3686 = vmul.f32 1.0, %v3685
    %v3687 = vrcp.pop %v3681
    %v3688 = vmul.f32 1.0, %v3687
    %v3689 = vrcp.pop %v3682
    %v3690 = vmul.f32 1.0, %v3689
    %v3691 = vmul.f32 %v3688, 2.0
    %v3692 = vsub.f32 %v3691, 1.0
    %v3693 = vmul.f32 %v3686, %v3514
    %v3694 = vmul.f32 %v3684, %v3692
    %v3695 = vadd.f32 %v3693, %v3694
    %v3696 = vtanh.pop %v3695
    %v3697 = vmul.f32 %v3690, %v3696
    %v3698 = vld [vmem:[#allocation2 + $0xa0] sm:$0xff]
    %v3699 = vld [vmem:[#allocation2 + $0xa8] sm:$0xff]
    %v3700 = vld [vmem:[#allocation2 + $0xb0] sm:$0xff]
    %v3701 = vld [vmem:[#allocation2 + $0xb8] sm:$0xff]
    %3702 = vmatprep.subr.mxu0 %v2734
    %3703 = vmatpush1.msra.mxu0 %v2733
    %3704 = vmatprep.subr.mxu0 %v2738
    %3705 = vmatpush1.msra.mxu0 %v2737
    %3706 = vmatprep.subr.mxu0 %v2742
    %3707 = vmatpush1.msra.mxu0 %v2741
    %3708 = vmatprep.subr.mxu0 %v2746
    %3709 = vmatpush1.msra.mxu0 %v2745
    %3710 = vmatprep.subr.mxu0 %v2750
    %3711 = vmatpush1.msra.mxu0 %v2749
    %3712 = vmatprep.subr.mxu0 %v2754
    %3713 = vmatpush1.msra.mxu0 %v2753
    %3714 = vmatprep.subr.mxu0 %v2758
    %3715 = vmatpush1.msra.mxu0 %v2757
    %3716 = vmatprep.subr.mxu0 %v2762
    %3717 = vmatpush1.msra.mxu0 %v2761
    %3718 = vmatprep.subr.mxu0 %v2766
    %3719 = vmatpush1.msra.mxu0 %v2765
    %3720 = vmatprep.subr.mxu0 %v2770
    %3721 = vmatpush1.msra.mxu0 %v2769
    %3722 = vmatprep.subr.mxu0 %v2774
    %3723 = vmatpush1.msra.mxu0 %v2773
    %3724 = vmatprep.subr.mxu0 %v2778
    %3725 = vmatpush1.msra.mxu0 %v2777
    %3726 = vmatprep.subr.mxu0 %v2782
    %3727 = vmatpush1.msra.mxu0 %v2781
    %3728 = vmatprep.subr.mxu0 %v2786
    %3729 = vmatpush1.msra.mxu0 %v2785
    %3730 = vmatprep.subr.mxu0 %v2790
    %3731 = vmatpush1.msra.mxu0 %v2789
    %3732 = vmatprep.subr.mxu0 %v2794
    %3733 = vmatpush1.msra.mxu0 %v2793
    %3734 = vmatprep.subr.mxu0 0.0
    %3735 = vmatpush1.msra.mxu0 0.0
    %3736 = vmatprep.subr.mxu0 0.0
    %3737 = vmatpush1.msra.mxu0 0.0
    %3738 = vmatprep.subr.mxu0 0.0
    %3739 = vmatpush1.msra.mxu0 0.0
    %3740 = vmatprep.subr.mxu0 0.0
    %3741 = vmatpush1.msra.mxu0 0.0
    %3742 = vmatprep.subr.mxu0 0.0
    %3743 = vmatpush1.msra.mxu0 0.0
    %3744 = vmatprep.subr.mxu0 0.0
    %3745 = vmatpush1.msra.mxu0 0.0
    %3746 = vmatprep.subr.mxu0 0.0
    %3747 = vmatpush1.msra.mxu0 0.0
    %3748 = vmatprep.subr.mxu0 0.0
    %3749 = vmatpush1.msra.mxu0 0.0
    %3750 = vmatprep.subr.mxu0 0.0
    %3751 = vmatpush1.msra.mxu0 0.0
    %3752 = vmatprep.subr.mxu0 0.0
    %3753 = vmatpush1.msra.mxu0 0.0
    %3754 = vmatprep.subr.mxu0 0.0
    %3755 = vmatpush1.msra.mxu0 0.0
    %3756 = vmatprep.subr.mxu0 0.0
    %3757 = vmatpush1.msra.mxu0 0.0
    %3758 = vmatprep.subr.mxu0 0.0
    %3759 = vmatpush1.msra.mxu0 0.0
    %3760 = vmatprep.subr.mxu0 0.0
    %3761 = vmatpush1.msra.mxu0 0.0
    %3762 = vmatprep.subr.mxu0 0.0
    %3763 = vmatpush1.msra.mxu0 0.0
    %3764 = vmatprep.subr.mxu0 0.0
    %3765 = vmatpush1.msra.mxu0 0.0
    %3766 = vmatprep.mubr.f32.mxu0 0.0
    %3767 = vmatmul.mubr.f32.gmra.mrb[0].mxu0 %v3697
    %v3768 = vpop.f32.mrb[0].mxu0
    %v3769 = vadd.f32 0.0, %v3768
    %v3770 = vpop.f32.mrb[0].mxu0
    %v3771 = vadd.f32 0.0, %v3770
    %3772 = vdwg.mxu0
    %3773 = vmatprep.subr.mxu0 %v2736
    %3774 = vmatpush1.msra.mxu0 %v2735
    %3775 = vmatprep.subr.mxu0 %v2740
    %3776 = vmatpush1.msra.mxu0 %v2739
    %3777 = vmatprep.subr.mxu0 %v2744
    %3778 = vmatpush1.msra.mxu0 %v2743
    %3779 = vmatprep.subr.mxu0 %v2748
    %3780 = vmatpush1.msra.mxu0 %v2747
    %3781 = vmatprep.subr.mxu0 %v2752
    %3782 = vmatpush1.msra.mxu0 %v2751
    %3783 = vmatprep.subr.mxu0 %v2756
    %3784 = vmatpush1.msra.mxu0 %v2755
    %3785 = vmatprep.subr.mxu0 %v2760
    %3786 = vmatpush1.msra.mxu0 %v2759
    %3787 = vmatprep.subr.mxu0 %v2764
    %3788 = vmatpush1.msra.mxu0 %v2763
    %3789 = vmatprep.subr.mxu0 %v2768
    %3790 = vmatpush1.msra.mxu0 %v2767
    %3791 = vmatprep.subr.mxu0 %v2772
    %3792 = vmatpush1.msra.mxu0 %v2771
    %3793 = vmatprep.subr.mxu0 %v2776
    %3794 = vmatpush1.msra.mxu0 %v2775
    %3795 = vmatprep.subr.mxu0 %v2780
    %3796 = vmatpush1.msra.mxu0 %v2779
    %3797 = vmatprep.subr.mxu0 %v2784
    %3798 = vmatpush1.msra.mxu0 %v2783
    %3799 = vmatprep.subr.mxu0 %v2788
    %3800 = vmatpush1.msra.mxu0 %v2787
    %3801 = vmatprep.subr.mxu0 %v2792
    %3802 = vmatpush1.msra.mxu0 %v2791
    %3803 = vmatprep.subr.mxu0 %v2796
    %3804 = vmatpush1.msra.mxu0 %v2795
    %3805 = vmatprep.subr.mxu0 0.0
    %3806 = vmatpush1.msra.mxu0 0.0
    %3807 = vmatprep.subr.mxu0 0.0
    %3808 = vmatpush1.msra.mxu0 0.0
    %3809 = vmatprep.subr.mxu0 0.0
    %3810 = vmatpush1.msra.mxu0 0.0
    %3811 = vmatprep.subr.mxu0 0.0
    %3812 = vmatpush1.msra.mxu0 0.0
    %3813 = vmatprep.subr.mxu0 0.0
    %3814 = vmatpush1.msra.mxu0 0.0
    %3815 = vmatprep.subr.mxu0 0.0
    %3816 = vmatpush1.msra.mxu0 0.0
    %3817 = vmatprep.subr.mxu0 0.0
    %3818 = vmatpush1.msra.mxu0 0.0
    %3819 = vmatprep.subr.mxu0 0.0
    %3820 = vmatpush1.msra.mxu0 0.0
    %3821 = vmatprep.subr.mxu0 0.0
    %3822 = vmatpush1.msra.mxu0 0.0
    %3823 = vmatprep.subr.mxu0 0.0
    %3824 = vmatpush1.msra.mxu0 0.0
    %3825 = vmatprep.subr.mxu0 0.0
    %3826 = vmatpush1.msra.mxu0 0.0
    %3827 = vmatprep.subr.mxu0 0.0
    %3828 = vmatpush1.msra.mxu0 0.0
    %3829 = vmatprep.subr.mxu0 0.0
    %3830 = vmatpush1.msra.mxu0 0.0
    %3831 = vmatprep.subr.mxu0 0.0
    %3832 = vmatpush1.msra.mxu0 0.0
    %3833 = vmatprep.subr.mxu0 0.0
    %3834 = vmatpush1.msra.mxu0 0.0
    %3835 = vmatprep.subr.mxu0 0.0
    %3836 = vmatpush1.msra.mxu0 0.0
    %3837 = vmatprep.mubr.f32.mxu0 0.0
    %3838 = vmatmul.mubr.f32.gmra.mrb[0].mxu0 %v3697
    %v3839 = vpop.f32.mrb[0].mxu0
    %v3840 = vadd.f32 0.0, %v3839
    %v3841 = vpop.f32.mrb[0].mxu0
    %v3842 = vadd.f32 0.0, %v3841
    %3843 = vdwg.mxu0
    %v3844 = vadd.f32 %v3698, %v3769
    %v3845 = vadd.f32 %v3699, %v3771
    %v3846 = vadd.f32 %v3700, %v3840
    %v3847 = vadd.f32 %v3701, %v3842
    %v3848 = vxor.u32 %v3844, 2147483648
    %v3849 = vxor.u32 %v3845, 2147483648
    %v3850 = vxor.u32 %v3846, 2147483648
    %v3851 = vxor.u32 %v3847, 2147483648
    %v3852 = vmul.f32 %v3848, 1.442695
    %v3853 = vpow.pop %v3852
    %v3854 = vmul.f32 %v3849, 1.442695
    %v3855 = vpow.pop %v3854
    %v3856 = vmul.f32 %v3850, 1.442695
    %v3857 = vpow.pop %v3856
    %v3858 = vmul.f32 %v3851, 1.442695
    %v3859 = vpow.pop %v3858
    %v3860 = vadd.f32 %v3853, 1.0
    %v3861 = vadd.f32 %v3855, 1.0
    %v3862 = vadd.f32 %v3857, 1.0
    %v3863 = vadd.f32 %v3859, 1.0
    %v3864 = vrcp.pop %v3860
    %v3865 = vmul.f32 1.0, %v3864
    %v3866 = vrcp.pop %v3861
    %v3867 = vmul.f32 1.0, %v3866
    %v3868 = vrcp.pop %v3862
    %v3869 = vmul.f32 1.0, %v3868
    %v3870 = vrcp.pop %v3863
    %v3871 = vmul.f32 1.0, %v3870
    %v3872 = vmul.f32 %v3869, 2.0
    %v3873 = vsub.f32 %v3872, 1.0
    %v3874 = vmul.f32 %v3867, %v3695
    %v3875 = vmul.f32 %v3865, %v3873
    %v3876 = vadd.f32 %v3874, %v3875
    %v3877 = vtanh.pop %v3876
    %v3878 = vmul.f32 %v3871, %v3877
    %v3879 = vld [vmem:[#allocation2 + $0xc0] sm:$0xff]
    %v3880 = vld [vmem:[#allocation2 + $0xc8] sm:$0xff]
    %v3881 = vld [vmem:[#allocation2 + $0xd0] sm:$0xff]
    %v3882 = vld [vmem:[#allocation2 + $0xd8] sm:$0xff]
    %3883 = vmatprep.subr.mxu0 %v2734
    %3884 = vmatpush1.msra.mxu0 %v2733
    %3885 = vmatprep.subr.mxu0 %v2738
    %3886 = vmatpush1.msra.mxu0 %v2737
    %3887 = vmatprep.subr.mxu0 %v2742
    %3888 = vmatpush1.msra.mxu0 %v2741
    %3889 = vmatprep.subr.mxu0 %v2746
    %3890 = vmatpush1.msra.mxu0 %v2745
    %3891 = vmatprep.subr.mxu0 %v2750
    %3892 = vmatpush1.msra.mxu0 %v2749
    %3893 = vmatprep.subr.mxu0 %v2754
    %3894 = vmatpush1.msra.mxu0 %v2753
    %3895 = vmatprep.subr.mxu0 %v2758
    %3896 = vmatpush1.msra.mxu0 %v2757
    %3897 = vmatprep.subr.mxu0 %v2762
    %3898 = vmatpush1.msra.mxu0 %v2761
    %3899 = vmatprep.subr.mxu0 %v2766
    %3900 = vmatpush1.msra.mxu0 %v2765
    %3901 = vmatprep.subr.mxu0 %v2770
    %3902 = vmatpush1.msra.mxu0 %v2769
    %3903 = vmatprep.subr.mxu0 %v2774
    %3904 = vmatpush1.msra.mxu0 %v2773
    %3905 = vmatprep.subr.mxu0 %v2778
    %3906 = vmatpush1.msra.mxu0 %v2777
    %3907 = vmatprep.subr.mxu0 %v2782
    %3908 = vmatpush1.msra.mxu0 %v2781
    %3909 = vmatprep.subr.mxu0 %v2786
    %3910 = vmatpush1.msra.mxu0 %v2785
    %3911 = vmatprep.subr.mxu0 %v2790
    %3912 = vmatpush1.msra.mxu0 %v2789
    %3913 = vmatprep.subr.mxu0 %v2794
    %3914 = vmatpush1.msra.mxu0 %v2793
    %3915 = vmatprep.subr.mxu0 0.0
    %3916 = vmatpush1.msra.mxu0 0.0
    %3917 = vmatprep.subr.mxu0 0.0
    %3918 = vmatpush1.msra.mxu0 0.0
    %3919 = vmatprep.subr.mxu0 0.0
    %3920 = vmatpush1.msra.mxu0 0.0
    %3921 = vmatprep.subr.mxu0 0.0
    %3922 = vmatpush1.msra.mxu0 0.0
    %3923 = vmatprep.subr.mxu0 0.0
    %3924 = vmatpush1.msra.mxu0 0.0
    %3925 = vmatprep.subr.mxu0 0.0
    %3926 = vmatpush1.msra.mxu0 0.0
    %3927 = vmatprep.subr.mxu0 0.0
    %3928 = vmatpush1.msra.mxu0 0.0
    %3929 = vmatprep.subr.mxu0 0.0
    %3930 = vmatpush1.msra.mxu0 0.0
    %3931 = vmatprep.subr.mxu0 0.0
    %3932 = vmatpush1.msra.mxu0 0.0
    %3933 = vmatprep.subr.mxu0 0.0
    %3934 = vmatpush1.msra.mxu0 0.0
    %3935 = vmatprep.subr.mxu0 0.0
    %3936 = vmatpush1.msra.mxu0 0.0
    %3937 = vmatprep.subr.mxu0 0.0
    %3938 = vmatpush1.msra.mxu0 0.0
    %3939 = vmatprep.subr.mxu0 0.0
    %3940 = vmatpush1.msra.mxu0 0.0
    %3941 = vmatprep.subr.mxu0 0.0
    %3942 = vmatpush1.msra.mxu0 0.0
    %3943 = vmatprep.subr.mxu0 0.0
    %3944 = vmatpush1.msra.mxu0 0.0
    %3945 = vmatprep.subr.mxu0 0.0
    %3946 = vmatpush1.msra.mxu0 0.0
    %3947 = vmatprep.mubr.f32.mxu0 0.0
    %3948 = vmatmul.mubr.f32.gmra.mrb[0].mxu0 %v3878
    %v3949 = vpop.f32.mrb[0].mxu0
    %v3950 = vadd.f32 0.0, %v3949
    %v3951 = vpop.f32.mrb[0].mxu0
    %v3952 = vadd.f32 0.0, %v3951
    %3953 = vdwg.mxu0
    %3954 = vmatprep.subr.mxu0 %v2736
    %3955 = vmatpush1.msra.mxu0 %v2735
    %3956 = vmatprep.subr.mxu0 %v2740
    %3957 = vmatpush1.msra.mxu0 %v2739
    %3958 = vmatprep.subr.mxu0 %v2744
    %3959 = vmatpush1.msra.mxu0 %v2743
    %3960 = vmatprep.subr.mxu0 %v2748
    %3961 = vmatpush1.msra.mxu0 %v2747
    %3962 = vmatprep.subr.mxu0 %v2752
    %3963 = vmatpush1.msra.mxu0 %v2751
    %3964 = vmatprep.subr.mxu0 %v2756
    %3965 = vmatpush1.msra.mxu0 %v2755
    %3966 = vmatprep.subr.mxu0 %v2760
    %3967 = vmatpush1.msra.mxu0 %v2759
    %3968 = vmatprep.subr.mxu0 %v2764
    %3969 = vmatpush1.msra.mxu0 %v2763
    %3970 = vmatprep.subr.mxu0 %v2768
    %3971 = vmatpush1.msra.mxu0 %v2767
    %3972 = vmatprep.subr.mxu0 %v2772
    %3973 = vmatpush1.msra.mxu0 %v2771
    %3974 = vmatprep.subr.mxu0 %v2776
    %3975 = vmatpush1.msra.mxu0 %v2775
    %3976 = vmatprep.subr.mxu0 %v2780
    %3977 = vmatpush1.msra.mxu0 %v2779
    %3978 = vmatprep.subr.mxu0 %v2784
    %3979 = vmatpush1.msra.mxu0 %v2783
    %3980 = vmatprep.subr.mxu0 %v2788
    %3981 = vmatpush1.msra.mxu0 %v2787
    %3982 = vmatprep.subr.mxu0 %v2792
    %3983 = vmatpush1.msra.mxu0 %v2791
    %3984 = vmatprep.subr.mxu0 %v2796
    %3985 = vmatpush1.msra.mxu0 %v2795
    %3986 = vmatprep.subr.mxu0 0.0
    %3987 = vmatpush1.msra.mxu0 0.0
    %3988 = vmatprep.subr.mxu0 0.0
    %3989 = vmatpush1.msra.mxu0 0.0
    %3990 = vmatprep.subr.mxu0 0.0
    %3991 = vmatpush1.msra.mxu0 0.0
    %3992 = vmatprep.subr.mxu0 0.0
    %3993 = vmatpush1.msra.mxu0 0.0
    %3994 = vmatprep.subr.mxu0 0.0
    %3995 = vmatpush1.msra.mxu0 0.0
    %3996 = vmatprep.subr.mxu0 0.0
    %3997 = vmatpush1.msra.mxu0 0.0
    %3998 = vmatprep.subr.mxu0 0.0
    %3999 = vmatpush1.msra.mxu0 0.0
    %4000 = vmatprep.subr.mxu0 0.0
    %4001 = vmatpush1.msra.mxu0 0.0
    %4002 = vmatprep.subr.mxu0 0.0
    %4003 = vmatpush1.msra.mxu0 0.0
    %4004 = vmatprep.subr.mxu0 0.0
    %4005 = vmatpush1.msra.mxu0 0.0
    %4006 = vmatprep.subr.mxu0 0.0
    %4007 = vmatpush1.msra.mxu0 0.0
    %4008 = vmatprep.subr.mxu0 0.0
    %4009 = vmatpush1.msra.mxu0 0.0
    %4010 = vmatprep.subr.mxu0 0.0
    %4011 = vmatpush1.msra.mxu0 0.0
    %4012 = vmatprep.subr.mxu0 0.0
    %4013 = vmatpush1.msra.mxu0 0.0
    %4014 = vmatprep.subr.mxu0 0.0
    %4015 = vmatpush1.msra.mxu0 0.0
    %4016 = vmatprep.subr.mxu0 0.0
    %4017 = vmatpush1.msra.mxu0 0.0
    %4018 = vmatprep.mubr.f32.mxu0 0.0
    %4019 = vmatmul.mubr.f32.gmra.mrb[0].mxu0 %v3878
    %v4020 = vpop.f32.mrb[0].mxu0
    %v4021 = vadd.f32 0.0, %v4020
    %v4022 = vpop.f32.mrb[0].mxu0
    %v4023 = vadd.f32 0.0, %v4022
    %4024 = vdwg.mxu0
    %v4025 = vadd.f32 %v3879, %v3950
    %v4026 = vadd.f32 %v3880, %v3952
    %v4027 = vadd.f32 %v3881, %v4021
    %v4028 = vadd.f32 %v3882, %v4023
    %v4029 = vxor.u32 %v4025, 2147483648
    %v4030 = vxor.u32 %v4026, 2147483648
    %v4031 = vxor.u32 %v4027, 2147483648
    %v4032 = vxor.u32 %v4028, 2147483648
    %v4033 = vmul.f32 %v4029, 1.442695
    %v4034 = vpow.pop %v4033
    %v4035 = vmul.f32 %v4030, 1.442695
    %v4036 = vpow.pop %v4035
    %v4037 = vmul.f32 %v4031, 1.442695
    %v4038 = vpow.pop %v4037
    %v4039 = vmul.f32 %v4032, 1.442695
    %v4040 = vpow.pop %v4039
    %v4041 = vadd.f32 %v4034, 1.0
    %v4042 = vadd.f32 %v4036, 1.0
    %v4043 = vadd.f32 %v4038, 1.0
    %v4044 = vadd.f32 %v4040, 1.0
    %v4045 = vrcp.pop %v4041
    %v4046 = vmul.f32 1.0, %v4045
    %v4047 = vrcp.pop %v4042
    %v4048 = vmul.f32 1.0, %v4047
    %v4049 = vrcp.pop %v4043
    %v4050 = vmul.f32 1.0, %v4049
    %v4051 = vrcp.pop %v4044
    %v4052 = vmul.f32 1.0, %v4051
    %v4053 = vmul.f32 %v4050, 2.0
    %v4054 = vsub.f32 %v4053, 1.0
    %v4055 = vmul.f32 %v4048, %v3876
    %v4056 = vmul.f32 %v4046, %v4054
    %v4057 = vadd.f32 %v4055, %v4056
    %v4058 = vtanh.pop %v4057
    %v4059 = vmul.f32 %v4052, %v4058
    %v4060 = vld [vmem:[#allocation2 + $0xe0] sm:$0xff]
    %v4061 = vld [vmem:[#allocation2 + $0xe8] sm:$0xff]
    %v4062 = vld [vmem:[#allocation2 + $0xf0] sm:$0xff]
    %v4063 = vld [vmem:[#allocation2 + $0xf8] sm:$0xff]
    %4064 = vmatprep.subr.mxu0 %v2734
    %4065 = vmatpush1.msra.mxu0 %v2733
    %4066 = vmatprep.subr.mxu0 %v2738
    %4067 = vmatpush1.msra.mxu0 %v2737
    %4068 = vmatprep.subr.mxu0 %v2742
    %4069 = vmatpush1.msra.mxu0 %v2741
    %4070 = vmatprep.subr.mxu0 %v2746
    %4071 = vmatpush1.msra.mxu0 %v2745
    %4072 = vmatprep.subr.mxu0 %v2750
    %4073 = vmatpush1.msra.mxu0 %v2749
    %4074 = vmatprep.subr.mxu0 %v2754
    %4075 = vmatpush1.msra.mxu0 %v2753
    %4076 = vmatprep.subr.mxu0 %v2758
    %4077 = vmatpush1.msra.mxu0 %v2757
    %4078 = vmatprep.subr.mxu0 %v2762
    %4079 = vmatpush1.msra.mxu0 %v2761
    %4080 = vmatprep.subr.mxu0 %v2766
    %4081 = vmatpush1.msra.mxu0 %v2765
    %4082 = vmatprep.subr.mxu0 %v2770
    %4083 = vmatpush1.msra.mxu0 %v2769
    %4084 = vmatprep.subr.mxu0 %v2774
    %4085 = vmatpush1.msra.mxu0 %v2773
    %4086 = vmatprep.subr.mxu0 %v2778
    %4087 = vmatpush1.msra.mxu0 %v2777
    %4088 = vmatprep.subr.mxu0 %v2782
    %4089 = vmatpush1.msra.mxu0 %v2781
    %4090 = vmatprep.subr.mxu0 %v2786
    %4091 = vmatpush1.msra.mxu0 %v2785
    %4092 = vmatprep.subr.mxu0 %v2790
    %4093 = vmatpush1.msra.mxu0 %v2789
    %4094 = vmatprep.subr.mxu0 %v2794
    %4095 = vmatpush1.msra.mxu0 %v2793
    %4096 = vmatprep.subr.mxu0 0.0
    %4097 = vmatpush1.msra.mxu0 0.0
    %4098 = vmatprep.subr.mxu0 0.0
    %4099 = vmatpush1.msra.mxu0 0.0
    %4100 = vmatprep.subr.mxu0 0.0
    %4101 = vmatpush1.msra.mxu0 0.0
    %4102 = vmatprep.subr.mxu0 0.0
    %4103 = vmatpush1.msra.mxu0 0.0
    %4104 = vmatprep.subr.mxu0 0.0
    %4105 = vmatpush1.msra.mxu0 0.0
    %4106 = vmatprep.subr.mxu0 0.0
    %4107 = vmatpush1.msra.mxu0 0.0
    %4108 = vmatprep.subr.mxu0 0.0
    %4109 = vmatpush1.msra.mxu0 0.0
    %4110 = vmatprep.subr.mxu0 0.0
    %4111 = vmatpush1.msra.mxu0 0.0
    %4112 = vmatprep.subr.mxu0 0.0
    %4113 = vmatpush1.msra.mxu0 0.0
    %4114 = vmatprep.subr.mxu0 0.0
    %4115 = vmatpush1.msra.mxu0 0.0
    %4116 = vmatprep.subr.mxu0 0.0
    %4117 = vmatpush1.msra.mxu0 0.0
    %4118 = vmatprep.subr.mxu0 0.0
    %4119 = vmatpush1.msra.mxu0 0.0
    %4120 = vmatprep.subr.mxu0 0.0
    %4121 = vmatpush1.msra.mxu0 0.0
    %4122 = vmatprep.subr.mxu0 0.0
    %4123 = vmatpush1.msra.mxu0 0.0
    %4124 = vmatprep.subr.mxu0 0.0
    %4125 = vmatpush1.msra.mxu0 0.0
    %4126 = vmatprep.subr.mxu0 0.0
    %4127 = vmatpush1.msra.mxu0 0.0
    %4128 = vmatprep.mubr.f32.mxu0 0.0
    %4129 = vmatmul.mubr.f32.gmra.mrb[0].mxu0 %v4059
    %v4130 = vpop.f32.mrb[0].mxu0
    %v4131 = vadd.f32 0.0, %v4130
    %v4132 = vpop.f32.mrb[0].mxu0
    %v4133 = vadd.f32 0.0, %v4132
    %4134 = vdwg.mxu0
    %4135 = vmatprep.subr.mxu0 %v2736
    %4136 = vmatpush1.msra.mxu0 %v2735
    %4137 = vmatprep.subr.mxu0 %v2740
    %4138 = vmatpush1.msra.mxu0 %v2739
    %4139 = vmatprep.subr.mxu0 %v2744
    %4140 = vmatpush1.msra.mxu0 %v2743
    %4141 = vmatprep.subr.mxu0 %v2748
    %4142 = vmatpush1.msra.mxu0 %v2747
    %4143 = vmatprep.subr.mxu0 %v2752
    %4144 = vmatpush1.msra.mxu0 %v2751
    %4145 = vmatprep.subr.mxu0 %v2756
    %4146 = vmatpush1.msra.mxu0 %v2755
    %4147 = vmatprep.subr.mxu0 %v2760
    %4148 = vmatpush1.msra.mxu0 %v2759
    %4149 = vmatprep.subr.mxu0 %v2764
    %4150 = vmatpush1.msra.mxu0 %v2763
    %4151 = vmatprep.subr.mxu0 %v2768
    %4152 = vmatpush1.msra.mxu0 %v2767
    %4153 = vmatprep.subr.mxu0 %v2772
    %4154 = vmatpush1.msra.mxu0 %v2771
    %4155 = vmatprep.subr.mxu0 %v2776
    %4156 = vmatpush1.msra.mxu0 %v2775
    %4157 = vmatprep.subr.mxu0 %v2780
    %4158 = vmatpush1.msra.mxu0 %v2779
    %4159 = vmatprep.subr.mxu0 %v2784
    %4160 = vmatpush1.msra.mxu0 %v2783
    %4161 = vmatprep.subr.mxu0 %v2788
    %4162 = vmatpush1.msra.mxu0 %v2787
    %4163 = vmatprep.subr.mxu0 %v2792
    %4164 = vmatpush1.msra.mxu0 %v2791
    %4165 = vmatprep.subr.mxu0 %v2796
    %4166 = vmatpush1.msra.mxu0 %v2795
    %4167 = vmatprep.subr.mxu0 0.0
    %4168 = vmatpush1.msra.mxu0 0.0
    %4169 = vmatprep.subr.mxu0 0.0
    %4170 = vmatpush1.msra.mxu0 0.0
    %4171 = vmatprep.subr.mxu0 0.0
    %4172 = vmatpush1.msra.mxu0 0.0
    %4173 = vmatprep.subr.mxu0 0.0
    %4174 = vmatpush1.msra.mxu0 0.0
    %4175 = vmatprep.subr.mxu0 0.0
    %4176 = vmatpush1.msra.mxu0 0.0
    %4177 = vmatprep.subr.mxu0 0.0
    %4178 = vmatpush1.msra.mxu0 0.0
    %4179 = vmatprep.subr.mxu0 0.0
    %4180 = vmatpush1.msra.mxu0 0.0
    %4181 = vmatprep.subr.mxu0 0.0
    %4182 = vmatpush1.msra.mxu0 0.0
    %4183 = vmatprep.subr.mxu0 0.0
    %4184 = vmatpush1.msra.mxu0 0.0
    %4185 = vmatprep.subr.mxu0 0.0
    %4186 = vmatpush1.msra.mxu0 0.0
    %4187 = vmatprep.subr.mxu0 0.0
    %4188 = vmatpush1.msra.mxu0 0.0
    %4189 = vmatprep.subr.mxu0 0.0
    %4190 = vmatpush1.msra.mxu0 0.0
    %4191 = vmatprep.subr.mxu0 0.0
    %4192 = vmatpush1.msra.mxu0 0.0
    %4193 = vmatprep.subr.mxu0 0.0
    %4194 = vmatpush1.msra.mxu0 0.0
    %4195 = vmatprep.subr.mxu0 0.0
    %4196 = vmatpush1.msra.mxu0 0.0
    %4197 = vmatprep.subr.mxu0 0.0
    %4198 = vmatpush1.msra.mxu0 0.0
    %4199 = vmatprep.mubr.f32.mxu0 0.0
    %4200 = vmatmul.mubr.f32.gmra.mrb[0].mxu0 %v4059
    %v4201 = vpop.f32.mrb[0].mxu0
    %v4202 = vadd.f32 0.0, %v4201
    %v4203 = vpop.f32.mrb[0].mxu0
    %v4204 = vadd.f32 0.0, %v4203
    %4205 = vdwg.mxu0
    %v4206 = vadd.f32 %v4060, %v4131
    %v4207 = vadd.f32 %v4061, %v4133
    %v4208 = vadd.f32 %v4062, %v4202
    %v4209 = vadd.f32 %v4063, %v4204
    %v4210 = vxor.u32 %v4206, 2147483648
    %v4211 = vxor.u32 %v4207, 2147483648
    %v4212 = vxor.u32 %v4208, 2147483648
    %v4213 = vxor.u32 %v4209, 2147483648
    %v4214 = vmul.f32 %v4210, 1.442695
    %v4215 = vpow.pop %v4214
    %v4216 = vmul.f32 %v4211, 1.442695
    %v4217 = vpow.pop %v4216
    %v4218 = vmul.f32 %v4212, 1.442695
    %v4219 = vpow.pop %v4218
    %v4220 = vmul.f32 %v4213, 1.442695
    %v4221 = vpow.pop %v4220
    %v4222 = vadd.f32 %v4215, 1.0
    %v4223 = vadd.f32 %v4217, 1.0
    %v4224 = vadd.f32 %v4219, 1.0
    %v4225 = vadd.f32 %v4221, 1.0
    %v4226 = vrcp.pop %v4222
    %v4227 = vmul.f32 1.0, %v4226
    %v4228 = vrcp.pop %v4223
    %v4229 = vmul.f32 1.0, %v4228
    %v4230 = vrcp.pop %v4224
    %v4231 = vmul.f32 1.0, %v4230
    %v4232 = vrcp.pop %v4225
    %v4233 = vmul.f32 1.0, %v4232
    %v4234 = vmul.f32 %v4231, 2.0
    %v4235 = vsub.f32 %v4234, 1.0
    %v4236 = vmul.f32 %v4229, %v4057
    %v4237 = vmul.f32 %v4227, %v4235
    %v4238 = vadd.f32 %v4236, %v4237
    %v4239 = vtanh.pop %v4238
    %v4240 = vmul.f32 %v4233, %v4239
    %v4241 = vld [vmem:[#allocation10] sm:$0xff]
    %v4242 = vld [vmem:[#allocation10 + $0x8] sm:$0xff]
    %v4243 = vld [vmem:[#allocation10 + $0x10] sm:$0xff]
    %v4244 = vld [vmem:[#allocation10 + $0x18] sm:$0xff]
    %v4245 = vld [vmem:[#allocation10 + $0x20] sm:$0xff]
    %v4246 = vld [vmem:[#allocation10 + $0x28] sm:$0xff]
    %v4247 = vld [vmem:[#allocation10 + $0x30] sm:$0xff]
    %v4248 = vld [vmem:[#allocation10 + $0x38] sm:$0xff]
    %v4249 = vld [vmem:[#allocation10 + $0x40] sm:$0xff]
    %v4250 = vld [vmem:[#allocation10 + $0x48] sm:$0xff]
    %v4251 = vld [vmem:[#allocation10 + $0x50] sm:$0xff]
    %v4252 = vld [vmem:[#allocation10 + $0x58] sm:$0xff]
    %v4253 = vld [vmem:[#allocation10 + $0x60] sm:$0xff]
    %v4254 = vld [vmem:[#allocation10 + $0x68] sm:$0xff]
    %v4255 = vld [vmem:[#allocation10 + $0x70] sm:$0xff]
    %v4256 = vld [vmem:[#allocation10 + $0x78] sm:$0xff]
    %v4257 = vld [vmem:[%s8] sm:$0x1]
    %v4259 = vlaneseq
    %v4260 = vshrl.u32 %v4259, 7
    %v4261 = vsub.s32 0, %v4260
    %v4262 = vrot.slane %v4257, %v4261
    %4264 = vmatprep.subr.mxu0 0.0
    %4265 = vmatpush1.msra.mxu0 %v4241
    %4266 = vmatprep.subr.mxu0 0.0
    %4267 = vmatpush1.msra.mxu0 %v4242
    %4268 = vmatprep.subr.mxu0 0.0
    %4269 = vmatpush1.msra.mxu0 %v4243
    %4270 = vmatprep.subr.mxu0 0.0
    %4271 = vmatpush1.msra.mxu0 %v4244
    %4272 = vmatprep.subr.mxu0 0.0
    %4273 = vmatpush1.msra.mxu0 %v4245
    %4274 = vmatprep.subr.mxu0 0.0
    %4275 = vmatpush1.msra.mxu0 %v4246
    %4276 = vmatprep.subr.mxu0 0.0
    %4277 = vmatpush1.msra.mxu0 %v4247
    %4278 = vmatprep.subr.mxu0 0.0
    %4279 = vmatpush1.msra.mxu0 %v4248
    %4280 = vmatprep.subr.mxu0 0.0
    %4281 = vmatpush1.msra.mxu0 %v4249
    %4282 = vmatprep.subr.mxu0 0.0
    %4283 = vmatpush1.msra.mxu0 %v4250
    %4284 = vmatprep.subr.mxu0 0.0
    %4285 = vmatpush1.msra.mxu0 %v4251
    %4286 = vmatprep.subr.mxu0 0.0
    %4287 = vmatpush1.msra.mxu0 %v4252
    %4288 = vmatprep.subr.mxu0 0.0
    %4289 = vmatpush1.msra.mxu0 %v4253
    %4290 = vmatprep.subr.mxu0 0.0
    %4291 = vmatpush1.msra.mxu0 %v4254
    %4292 = vmatprep.subr.mxu0 0.0
    %4293 = vmatpush1.msra.mxu0 %v4255
    %4294 = vmatprep.subr.mxu0 0.0
    %4295 = vmatpush1.msra.mxu0 %v4256
    %4296 = vmatprep.subr.mxu0 0.0
    %4297 = vmatpush1.msra.mxu0 0.0
    %4298 = vmatprep.subr.mxu0 0.0
    %4299 = vmatpush1.msra.mxu0 0.0
    %4300 = vmatprep.subr.mxu0 0.0
    %4301 = vmatpush1.msra.mxu0 0.0
    %4302 = vmatprep.subr.mxu0 0.0
    %4303 = vmatpush1.msra.mxu0 0.0
    %4304 = vmatprep.subr.mxu0 0.0
    %4305 = vmatpush1.msra.mxu0 0.0
    %4306 = vmatprep.subr.mxu0 0.0
    %4307 = vmatpush1.msra.mxu0 0.0
    %4308 = vmatprep.subr.mxu0 0.0
    %4309 = vmatpush1.msra.mxu0 0.0
    %4310 = vmatprep.subr.mxu0 0.0
    %4311 = vmatpush1.msra.mxu0 0.0
    %4312 = vmatprep.subr.mxu0 0.0
    %4313 = vmatpush1.msra.mxu0 0.0
    %4314 = vmatprep.subr.mxu0 0.0
    %4315 = vmatpush1.msra.mxu0 0.0
    %4316 = vmatprep.subr.mxu0 0.0
    %4317 = vmatpush1.msra.mxu0 0.0
    %4318 = vmatprep.subr.mxu0 0.0
    %4319 = vmatpush1.msra.mxu0 0.0
    %4320 = vmatprep.subr.mxu0 0.0
    %4321 = vmatpush1.msra.mxu0 0.0
    %4322 = vmatprep.subr.mxu0 0.0
    %4323 = vmatpush1.msra.mxu0 0.0
    %4324 = vmatprep.subr.mxu0 0.0
    %4325 = vmatpush1.msra.mxu0 0.0
    %4326 = vmatprep.subr.mxu0 0.0
    %4327 = vmatpush1.msra.mxu0 0.0
    %4328 = vmatprep.mubr.f32.mxu0 0.0
    %4329 = vmatmul.mubr.f32.gmra.mrb[0].mxu0 %v4240
    %v4330 = vpop.f32.mrb[0].mxu0
    %v4331 = vadd.f32 %v4262, %v4330
    %v4332 = vpop.f32.mrb[0].mxu0
    %4333 = vdwg.mxu0
    %4334 = vst [vmem:[#allocation12] sm:$0xff] %v4331
    // Predicated region
    $region54: #{tpu_custom_call.1} parent=1 // pred_check
      _
    $region55: #{tpu_custom_call.1} parent=1 // pred_check_branch
      %4336 = sbr.rel (0) target = $region57
    $region56: #{tpu_custom_call.1} parent=1 // pred_region
      %s4338 = ssub.s32 128, 128
      %4339 = vsyncadd [#allocation6], %s4338
      %s4341 = sshll.u32 [#allocation12], 4
      %s4342 = int_to_ptr.vmem [resolvable:$true] %s4341
      %4344 = dma.vmem_to_hbm [thread:$0]  %s4342, 128, %s9, [#allocation6]
    $region57: #{tpu_custom_call.1} parent=1 // pred_fallthru
      _
    // Predicated region
    $region58: #{tpu_custom_call.1} parent=1 // pred_check
      _
    $region59: #{tpu_custom_call.1} parent=1 // pred_check_branch
      %4346 = sbr.rel (0) target = $region61
    $region60: #{tpu_custom_call.1} parent=1 // pred_region
      %4347 = dma.done [#allocation6], 128
    $region61: #{tpu_custom_call.1} parent=1 // pred_fallthru
      _
    %4348 = vsyncpa [#allocation5], 1
    %4349 = vsyncpa [#allocation8], 1
    %4350 = vsyncpa [#allocation11], 1
    %4351 = vsyncpa [#allocation6], 1

</llo_original>
